<compile_context>
chip_gen: v7x
topology: tpu7x:2x2x1
jax: 0.10.0
libtpu: 0.0.40
codegen_flags: <defaults>
</compile_context>

<pallas_src>
import functools

import jax
import jax.numpy as jnp
from jax.experimental import pallas as pl
from jax.experimental.pallas import tpu as pltpu

FEAT_DIM = 2048   # encoder output dim (ResNet-50 style)
HID_DIM = 512     # projection head hidden dim
PROJ_DIM = 128    # projection_dim


def _simclr_kernel(x_ref, wenc_ref, benc_ref, w1_ref, b1_ref, w2_ref, b2_ref,
                   h_ref, z_ref, acc_ref):
    k = pl.program_id(1)

    @pl.when(k == 0)
    def _init():
        acc_ref[...] = jnp.zeros_like(acc_ref)

    # Partial spatial sum of this (TB, C, TS) tile, cast to f32 *inside* the kernel.
    # The per-tile reduce is a short VPU-add chain (+ small XLU tail) that overlaps
    # with the DMA of the next x tile -- the kernel is HBM-bound on x -- so routing
    # the reduce through the MXU would not change wall-clock.
    x = x_ref[...].astype(jnp.float32)                    # (TB, C, TS)
    acc_ref[...] += jnp.sum(x, axis=-1)                   # (TB, C)

    @pl.when(k == pl.num_programs(1) - 1)
    def _finalize():
        # 1/(H*W) is pre-folded into wenc, so the accumulated spatial *sum* feeds
        # the MXU matmul chain directly (no extra VPU scale pass per grid step).
        pooled = acc_ref[...]                                             # (TB, C)
        h = jnp.dot(pooled, wenc_ref[...],
                    preferred_element_type=jnp.float32) + benc_ref[...]   # (TB, 2048)
        h_ref[...] = h.astype(h_ref.dtype)

        a = jnp.dot(h, w1_ref[...],
                    preferred_element_type=jnp.float32) + b1_ref[...]     # (TB, 512)
        a = jnp.maximum(a, 0.0)                                           # ReLU
        z = jnp.dot(a, w2_ref[...],
                    preferred_element_type=jnp.float32) + b2_ref[...]     # (TB, 128)
        z_ref[...] = z.astype(z_ref.dtype)


def _round_up(n, m):
    return -(-n // m) * m


def _pick_batch_tile(B, max_tb=128):
    # 128 keeps the MXU M tile aligned on every generation (v5e 128-wide MXU;
    # v6e/v7x would also accept 256, but 128 keeps VMEM residency smaller).
    if B <= max_tb:
        return B                        # full-dim block is always layout-legal
    for cand in range(max_tb, 7, -8):   # largest multiple-of-8 divisor of B
        if B % cand == 0:
            return cand
    return max_tb                       # no clean divisor -> pad batch up


def _pick_spatial_tile(S, max_ts=2048):
    if S <= max_ts:
        return S                        # full-axis block is always layout-legal
    for cand in range(max_ts, 127, -128):
        if S % cand == 0:               # largest lane-aligned divisor -> no padding
            return cand
    return max_ts                       # no clean divisor -> pad spatial up


@functools.partial(jax.jit, static_argnames=("tb", "ts"))
def _forward_impl(x, wenc, benc, w1, b1, w2, b2, *, tb, ts):
    B, C, H, W = x.shape
    S = H * W
    Bp = _round_up(B, tb)
    Sp = _round_up(S, ts)

    # Reshape only -- NO dtype cast here (the cast to f32 happens in-kernel, so we
    # never materialise a full-size f32 copy of x in HBM).
    x_flat = x.reshape(B, C, S)
    if (Bp, Sp) != (B, S):
        # Zero spatial padding contributes 0 to the spatial sum; padded batch rows
        # are sliced off below.
        x_flat = jnp.pad(x_flat, ((0, Bp - B), (0, 0), (0, Sp - S)))

    # Fold the 1/(H*W) global-average-pool scale into the encoder weight.
    wenc_scaled = (wenc * (1.0 / S)).astype(jnp.float32)

    grid = (Bp // tb, Sp // ts)

    in_specs = [
        pl.BlockSpec((tb, C, ts), lambda i, k: (i, 0, k)),     # x: streamed tiles
        pl.BlockSpec((C, FEAT_DIM), lambda i, k: (0, 0)),      # weights: VMEM-resident
        pl.BlockSpec((1, FEAT_DIM), lambda i, k: (0, 0)),
        pl.BlockSpec((FEAT_DIM, HID_DIM), lambda i, k: (0, 0)),
        pl.BlockSpec((1, HID_DIM), lambda i, k: (0, 0)),
        pl.BlockSpec((HID_DIM, PROJ_DIM), lambda i, k: (0, 0)),
        pl.BlockSpec((1, PROJ_DIM), lambda i, k: (0, 0)),
    ]
    out_specs = (
        pl.BlockSpec((tb, FEAT_DIM), lambda i, k: (i, 0)),     # h: lane-dense 2048
        pl.BlockSpec((tb, PROJ_DIM), lambda i, k: (i, 0)),     # z: lane-dense 128
    )

    itemsize = x.dtype.itemsize
    weight_bytes = 4 * (wenc.size + benc.size + w1.size + b1.size + w2.size + b2.size)
    flops = (2 * Bp * (C * FEAT_DIM + FEAT_DIM * HID_DIM + HID_DIM * PROJ_DIM)
             + Bp * C * Sp)                                    # matmuls + spatial sum
    bytes_accessed = (Bp * C * Sp * itemsize + weight_bytes
                      + Bp * FEAT_DIM * 4 + Bp * PROJ_DIM * 4)

    h, z = pl.pallas_call(
        _simclr_kernel,
        out_shape=(
            jax.ShapeDtypeStruct((Bp, FEAT_DIM), jnp.float32),
            jax.ShapeDtypeStruct((Bp, PROJ_DIM), jnp.float32),
        ),
        grid_spec=pltpu.PrefetchScalarGridSpec(
            num_scalar_prefetch=0,
            grid=grid,
            in_specs=in_specs,
            out_specs=out_specs,
            scratch_shapes=[pltpu.VMEM((tb, C), jnp.float32)],
        ),
        compiler_params=pltpu.CompilerParams(
            # Batch tiles are independent -> shard across v7x's 2 TensorCores;
            # spatial axis is a reduction into the scratch accumulator.
            dimension_semantics=("parallel", "arbitrary"),
            # Residents: weights ~4.3 MiB + 2x double-buffered x tile + h/z blocks,
            # well under 40 MiB; 40 MiB leaves headroom on v7x's 64 MiB VMEM.
            vmem_limit_bytes=40 << 20,
        ),
        cost_estimate=pl.CostEstimate(
            flops=flops, transcendentals=0, bytes_accessed=bytes_accessed),
    )(x_flat, wenc_scaled, benc, w1, b1, w2, b2)

    return h[:B], z[:B]


def simclr_forward(x, params, *, tb=None, ts=None):
    """x: (B, C, H, W) NCHW. Returns (h, z) like the PyTorch module."""
    B, C, H, W = x.shape
    if tb is None:
        tb = _pick_batch_tile(B)
    if ts is None:
        ts = _pick_spatial_tile(H * W)
    wenc, benc, w1, b1, w2, b2 = params
    return _forward_impl(x, wenc, benc, w1, b1, w2, b2, tb=tb, ts=ts)


def init_params(key, in_channels):
    k = jax.random.split(key, 6)
    scale_enc = 1.0 / jnp.sqrt(in_channels)
    scale1 = 1.0 / jnp.sqrt(FEAT_DIM)
    scale2 = 1.0 / jnp.sqrt(HID_DIM)
    wenc = jax.random.uniform(k[0], (in_channels, FEAT_DIM), jnp.float32,
                              -scale_enc, scale_enc)
    benc = jax.random.uniform(k[1], (1, FEAT_DIM), jnp.float32,
                              -scale_enc, scale_enc)
    w1 = jax.random.uniform(k[2], (FEAT_DIM, HID_DIM), jnp.float32,
                            -scale1, scale1)
    b1 = jax.random.uniform(k[3], (1, HID_DIM), jnp.float32, -scale1, scale1)
    w2 = jax.random.uniform(k[4], (HID_DIM, PROJ_DIM), jnp.float32,
                            -scale2, scale2)
    b2 = jax.random.uniform(k[5], (1, PROJ_DIM), jnp.float32, -scale2, scale2)
    return (wenc, benc, w1, b1, w2, b2)


def _reference(x, params):
    wenc, benc, w1, b1, w2, b2 = params
    B, C, H, W = x.shape
    pooled = jnp.mean(x.reshape(B, C, H * W).astype(jnp.float32), axis=-1)
    h = pooled @ wenc + benc
    a = jnp.maximum(h @ w1 + b1, 0.0)
    z = a @ w2 + b2
    return h, z


if __name__ == "__main__":
    key = jax.random.PRNGKey(0)
    kx1, kp1, kx2, kp2 = jax.random.split(key, 4)

    # Case 1: small shape consistent with the module (single-tile path).
    B, C, H, W = 2, 4, 16, 16
    x = jax.random.normal(kx1, (B, C, H, W), jnp.float32)
    params = init_params(kp1, C)
    h, z = simclr_forward(x, params)
    jax.block_until_ready((h, z))
    h_ref, z_ref = _reference(x, params)
    assert h.shape == (B, FEAT_DIM) and z.shape == (B, PROJ_DIM)
    assert jnp.allclose(h, h_ref, atol=1e-4, rtol=1e-4)
    assert jnp.allclose(z, z_ref, atol=1e-4, rtol=1e-4)

    # Case 2: exercise the batch grid + multi-step spatial accumulator pipeline.
    B2, C2, H2, W2 = 16, 3, 32, 32
    x2 = jax.random.normal(kx2, (B2, C2, H2, W2), jnp.float32)
    params2 = init_params(kp2, C2)
    h2, z2 = simclr_forward(x2, params2, tb=8, ts=128)   # grid = (2, 8)
    jax.block_until_ready((h2, z2))
    h2_ref, z2_ref = _reference(x2, params2)
    assert jnp.allclose(h2, h2_ref, atol=1e-4, rtol=1e-4)
    assert jnp.allclose(z2, z2_ref, atol=1e-4, rtol=1e-4)

    print("KERNEL_OK")
</pallas_src>

<mosaic_0001>
module attributes {stable_mosaic.version = 11 : i64} {
  func.func @_simclr_kernel(%arg0: i32, %arg1: i32, %arg2: memref<2x4x256xf32, #tpu.memory_space<vmem>>, %arg3: memref<4x2048xf32, #tpu.memory_space<vmem>>, %arg4: memref<1x2048xf32, #tpu.memory_space<vmem>>, %arg5: memref<2048x512xf32, #tpu.memory_space<vmem>>, %arg6: memref<1x512xf32, #tpu.memory_space<vmem>>, %arg7: memref<512x128xf32, #tpu.memory_space<vmem>>, %arg8: memref<1x128xf32, #tpu.memory_space<vmem>>, %arg9: memref<2x2048xf32, #tpu.memory_space<vmem>>, %arg10: memref<2x128xf32, #tpu.memory_space<vmem>>, %arg11: memref<2x4xf32, #tpu.memory_space<vmem>>) attributes {dimension_semantics = [#tpu.dimension_semantics<parallel>, #tpu.dimension_semantics<arbitrary>], iteration_bounds = array<i64: 1, 1>, scalar_prefetch = 0 : i64, scratch_operands = 1 : i64, tpu.core_type = #tpu.core_type<tc>, window_params = [{transform_indices = @transform_0, window_bounds = array<i64: 2, 4, 256>}, {pipeline_mode = #tpu.pipeline_mode<synchronous>, transform_indices = @transform_1, window_bounds = array<i64: 4, 2048>}, {pipeline_mode = #tpu.pipeline_mode<synchronous>, transform_indices = @transform_2, window_bounds = array<i64: 1, 2048>}, {pipeline_mode = #tpu.pipeline_mode<synchronous>, transform_indices = @transform_3, window_bounds = array<i64: 2048, 512>}, {pipeline_mode = #tpu.pipeline_mode<synchronous>, transform_indices = @transform_4, window_bounds = array<i64: 1, 512>}, {pipeline_mode = #tpu.pipeline_mode<synchronous>, transform_indices = @transform_5, window_bounds = array<i64: 512, 128>}, {pipeline_mode = #tpu.pipeline_mode<synchronous>, transform_indices = @transform_6, window_bounds = array<i64: 1, 128>}, {transform_indices = @transform_7, window_bounds = array<i64: 2, 2048>}, {transform_indices = @transform_8, window_bounds = array<i64: 2, 128>}]} {
    %c0_i32 = arith.constant 0 : i32
    %0 = arith.cmpi eq, %arg1, %c0_i32 : i32
    %1 = arith.extui %0 : i1 to i32
    %c0_i32_0 = arith.constant 0 : i32
    %2 = arith.cmpi ne, %1, %c0_i32_0 : i32
    scf.if %2 {
      %cst_9 = arith.constant 0.000000e+00 : f32
      %11 = vector.broadcast %cst_9 : f32 to vector<2x4xf32>
      %c0_10 = arith.constant 0 : index
      %c0_11 = arith.constant 0 : index
      %12 = vector.load %arg11[%c0_10, %c0_11] : memref<2x4xf32, #tpu.memory_space<vmem>>, vector<2x4xf32>
      tpu.vector_store %arg11[%c0_10, %c0_11], %11 {strides = array<i32>} : memref<2x4xf32, #tpu.memory_space<vmem>>, vector<2x4xf32>,
    } else {
    }
    %c0 = arith.constant 0 : index
    %c0_1 = arith.constant 0 : index
    %c0_2 = arith.constant 0 : index
    %3 = vector.load %arg2[%c0, %c0_1, %c0_2] : memref<2x4x256xf32, #tpu.memory_space<vmem>>, vector<2x4x256xf32>
    %c0_3 = arith.constant 0 : index
    %c0_4 = arith.constant 0 : index
    %4 = vector.load %arg11[%c0_3, %c0_4] : memref<2x4xf32, #tpu.memory_space<vmem>>, vector<2x4xf32>
    %cst = arith.constant dense<0.000000e+00> : vector<2x4xf32>
    %5 = vector.multi_reduction <add>, %3, %cst [2] : vector<2x4x256xf32> to vector<2x4xf32>
    %6 = arith.addf %4, %5 : vector<2x4xf32>
    %c0_5 = arith.constant 0 : index
    %c0_6 = arith.constant 0 : index
    %7 = vector.load %arg11[%c0_5, %c0_6] : memref<2x4xf32, #tpu.memory_space<vmem>>, vector<2x4xf32>
    tpu.vector_store %arg11[%c0_5, %c0_6], %6 {strides = array<i32>} : memref<2x4xf32, #tpu.memory_space<vmem>>, vector<2x4xf32>,
    %c0_i32_7 = arith.constant 0 : i32
    %8 = arith.cmpi eq, %arg1, %c0_i32_7 : i32
    %9 = arith.extui %8 : i1 to i32
    %c0_i32_8 = arith.constant 0 : i32
    %10 = arith.cmpi ne, %9, %c0_i32_8 : i32
    scf.if %10 {
      %c0_9 = arith.constant 0 : index
      %c0_10 = arith.constant 0 : index
      %11 = vector.load %arg11[%c0_9, %c0_10] : memref<2x4xf32, #tpu.memory_space<vmem>>, vector<2x4xf32>
      %c0_11 = arith.constant 0 : index
      %c0_12 = arith.constant 0 : index
      %12 = vector.load %arg3[%c0_11, %c0_12] : memref<4x2048xf32, #tpu.memory_space<vmem>>, vector<4x2048xf32>
      %cst_13 = arith.constant dense<0.000000e+00> : vector<2x2048xf32>
      %13 = tpu.matmul %11, %12, %cst_13 {dimension_numbers = #tpu.dot_dimension_numbers<[1], [0], [0], [1], [0, 0, 1, 1], [], []>} : vector<2x4xf32>, vector<4x2048xf32>, vector<2x2048xf32> -> vector<2x2048xf32>
      %c0_14 = arith.constant 0 : index
      %c0_15 = arith.constant 0 : index
      %14 = vector.load %arg4[%c0_14, %c0_15] : memref<1x2048xf32, #tpu.memory_space<vmem>>, vector<1x2048xf32>
      %15 = vector.broadcast %14 : vector<1x2048xf32> to vector<2x2048xf32>
      %16 = arith.addf %13, %15 : vector<2x2048xf32>
      %c0_16 = arith.constant 0 : index
      %c0_17 = arith.constant 0 : index
      %17 = vector.load %arg9[%c0_16, %c0_17] : memref<2x2048xf32, #tpu.memory_space<vmem>>, vector<2x2048xf32>
      tpu.vector_store %arg9[%c0_16, %c0_17], %16 {strides = array<i32>} : memref<2x2048xf32, #tpu.memory_space<vmem>>, vector<2x2048xf32>,
      %c0_18 = arith.constant 0 : index
      %c0_19 = arith.constant 0 : index
      %18 = vector.load %arg5[%c0_18, %c0_19] : memref<2048x512xf32, #tpu.memory_space<vmem>>, vector<2048x512xf32>
      %cst_20 = arith.constant dense<0.000000e+00> : vector<2x512xf32>
      %19 = tpu.matmul %16, %18, %cst_20 {dimension_numbers = #tpu.dot_dimension_numbers<[1], [0], [0], [1], [0, 0, 1, 1], [], []>} : vector<2x2048xf32>, vector<2048x512xf32>, vector<2x512xf32> -> vector<2x512xf32>
      %c0_21 = arith.constant 0 : index
      %c0_22 = arith.constant 0 : index
      %20 = vector.load %arg6[%c0_21, %c0_22] : memref<1x512xf32, #tpu.memory_space<vmem>>, vector<1x512xf32>
      %21 = vector.broadcast %20 : vector<1x512xf32> to vector<2x512xf32>
      %22 = arith.addf %19, %21 : vector<2x512xf32>
      %cst_23 = arith.constant 0.000000e+00 : f32
      %23 = vector.broadcast %cst_23 : f32 to vector<2x512xf32>
      %24 = arith.maximumf %22, %23 : vector<2x512xf32>
      %c0_24 = arith.constant 0 : index
      %c0_25 = arith.constant 0 : index
      %25 = vector.load %arg7[%c0_24, %c0_25] : memref<512x128xf32, #tpu.memory_space<vmem>>, vector<512x128xf32>
      %cst_26 = arith.constant dense<0.000000e+00> : vector<2x128xf32>
      %26 = tpu.matmul %24, %25, %cst_26 {dimension_numbers = #tpu.dot_dimension_numbers<[1], [0], [0], [1], [0, 0, 1, 1], [], []>} : vector<2x512xf32>, vector<512x128xf32>, vector<2x128xf32> -> vector<2x128xf32>
      %c0_27 = arith.constant 0 : index
      %c0_28 = arith.constant 0 : index
      %27 = vector.load %arg8[%c0_27, %c0_28] : memref<1x128xf32, #tpu.memory_space<vmem>>, vector<1x128xf32>
      %28 = vector.broadcast %27 : vector<1x128xf32> to vector<2x128xf32>
      %29 = arith.addf %26, %28 : vector<2x128xf32>
      %c0_29 = arith.constant 0 : index
      %c0_30 = arith.constant 0 : index
      %30 = vector.load %arg10[%c0_29, %c0_30] : memref<2x128xf32, #tpu.memory_space<vmem>>, vector<2x128xf32>
      tpu.vector_store %arg10[%c0_29, %c0_30], %29 {strides = array<i32>} : memref<2x128xf32, #tpu.memory_space<vmem>>, vector<2x128xf32>,
    } else {
    }
    return
  }
  func.func @transform_0(%arg0: i32, %arg1: i32) -> (i32, i32, i32) {
    %c0_i32 = arith.constant 0 : i32
    %c0_i32_0 = arith.constant 0 : i32
    return %arg0, %c0_i32, %arg1 : i32, i32, i32
  }
  func.func @transform_1(%arg0: i32, %arg1: i32) -> (i32, i32) {
    %c0_i32 = arith.constant 0 : i32
    %c0_i32_0 = arith.constant 0 : i32
    %c0_i32_1 = arith.constant 0 : i32
    return %c0_i32, %c0_i32_0 : i32, i32
  }
  func.func @transform_2(%arg0: i32, %arg1: i32) -> (i32, i32) {
    %c0_i32 = arith.constant 0 : i32
    %c0_i32_0 = arith.constant 0 : i32
    %c0_i32_1 = arith.constant 0 : i32
    return %c0_i32, %c0_i32_0 : i32, i32
  }
  func.func @transform_3(%arg0: i32, %arg1: i32) -> (i32, i32) {
    %c0_i32 = arith.constant 0 : i32
    %c0_i32_0 = arith.constant 0 : i32
    %c0_i32_1 = arith.constant 0 : i32
    return %c0_i32, %c0_i32_0 : i32, i32
  }
  func.func @transform_4(%arg0: i32, %arg1: i32) -> (i32, i32) {
    %c0_i32 = arith.constant 0 : i32
    %c0_i32_0 = arith.constant 0 : i32
    %c0_i32_1 = arith.constant 0 : i32
    return %c0_i32, %c0_i32_0 : i32, i32
  }
  func.func @transform_5(%arg0: i32, %arg1: i32) -> (i32, i32) {
    %c0_i32 = arith.constant 0 : i32
    %c0_i32_0 = arith.constant 0 : i32
    %c0_i32_1 = arith.constant 0 : i32
    return %c0_i32, %c0_i32_0 : i32, i32
  }
  func.func @transform_6(%arg0: i32, %arg1: i32) -> (i32, i32) {
    %c0_i32 = arith.constant 0 : i32
    %c0_i32_0 = arith.constant 0 : i32
    %c0_i32_1 = arith.constant 0 : i32
    return %c0_i32, %c0_i32_0 : i32, i32
  }
  func.func @transform_7(%arg0: i32, %arg1: i32) -> (i32, i32) {
    %c0_i32 = arith.constant 0 : i32
    %c0_i32_0 = arith.constant 0 : i32
    return %arg0, %c0_i32 : i32, i32
  }
  func.func @transform_8(%arg0: i32, %arg1: i32) -> (i32, i32) {
    %c0_i32 = arith.constant 0 : i32
    %c0_i32_0 = arith.constant 0 : i32
    return %arg0, %c0_i32 : i32, i32
  }
}

</mosaic_0001>

<llo_original>
// kernel: _forward_impl.1
$region0: #{_forward_impl.1}
  #allocation0 [shape = 'u32[]', space=smem, size = 0x4, offset = 0x4, fixed_abs, tag = 'smem constant byte address 0x4 - core index']
  #allocation1 [shape = 'u32[144,128]{1,0:T(1,128)}', space=vmem, size = 0x12000, scoped, tag = 'internal scratch']
  #allocation2 [shape = 'f32[2,4]{1,0:T(2,128)}', space=vmem, size = 0x400, scoped, tag = 'scratch operand']
  %s0 = inlined_call_operand.vmem [shape: f32[2,4,256], index: 0, kind: input, shape index: {}]
  %s1 = inlined_call_operand.vmem [shape: f32[4,2048], index: 1, kind: input, shape index: {}]
  %s2 = inlined_call_operand.hbm [shape: f32[1,2048], index: 2, kind: input, shape index: {}]
  %s3 = inlined_call_operand.hbm [shape: f32[2048,512], index: 3, kind: input, shape index: {}]
  %s4 = inlined_call_operand.hbm [shape: f32[1,512], index: 4, kind: input, shape index: {}]
  %s5 = inlined_call_operand.hbm [shape: f32[512,128], index: 5, kind: input, shape index: {}]
  %s6 = inlined_call_operand.hbm [shape: f32[1,128], index: 6, kind: input, shape index: {}]
  %s7 = inlined_call_operand.hbm [shape: f32[2,2048], index: 7, kind: output, shape index: {0}]
  %s8 = inlined_call_operand.hbm [shape: f32[2,128], index: 8, kind: output, shape index: {1}]
  %9 = xla_tuple %s7, %s8
  %s10 = sld [smem:[#allocation0]]
  $region74: #{_forward_impl.1} parent=0
    _
  %s12 = ssub.s32 1, %s10
  %s13 = scalar_select 0, %s12, %s10
  $region1: #{_forward_impl.1} parent=0
    #allocation3 [shape = 'u8[8192]{0}', space=vmem, size = 0x2000, scoped, tag = 'input window, operand 2, single buffered']
    #allocation4 [shape = 's32[1]{0}', space=sflag, size = 0x4, scoped, tag = 'scoped memory for _forward_impl.1']
    #allocation5 [shape = 's32[1]{0}', space=sflag, size = 0x4, scoped, tag = 'scoped memory for _forward_impl.1']
    #allocation6 [shape = 'u8[4194304]{0}', space=vmem, size = 0x400000, scoped, tag = 'input window, operand 3, single buffered']
    #allocation7 [shape = 's32[1]{0}', space=sflag, size = 0x4, scoped, tag = 'scoped memory for _forward_impl.1']
    #allocation8 [shape = 'u8[2048]{0}', space=vmem, size = 0x800, scoped, tag = 'input window, operand 4, single buffered']
    #allocation9 [shape = 'u8[262144]{0}', space=vmem, size = 0x40000, scoped, tag = 'input window, operand 5, single buffered']
    #allocation10 [shape = 's32[1]{0}', space=sflag, size = 0x4, scoped, tag = 'scoped memory for _forward_impl.1']
    #allocation11 [shape = 'u8[512]{0}', space=vmem, size = 0x400, scoped, tag = 'input window, operand 6, single buffered']
    #allocation12 [shape = 'u8[16384]{0}', space=vmem, size = 0x4000, scoped, tag = 'output window, operand 0, single buffered']
    #allocation13 [shape = 'u8[1024]{0}', space=vmem, size = 0x400, scoped, tag = 'output window, operand 1, single buffered']
    #allocation14 [shape = 's32[1]{0}', space=sflag, size = 0x4, scoped, tag = 'scoped memory for _forward_impl.1']
    %14 = vsyncpa [#allocation4], 0
    %15 = vsyncpa [#allocation7], 0
    %16 = vsyncpa [#allocation10], 0
    %17 = vsyncpa [#allocation5], 0
    %18 = vsyncpa [#allocation14], 0
    // Predicated region
    $region2: #{_forward_impl.1} parent=1 // pred_check
      _
    $region3: #{_forward_impl.1} parent=1 // pred_check_branch
      %20 = sbr.rel (0) target = $region5
    $region4: #{_forward_impl.1} parent=1 // pred_region
      _
    $region5: #{_forward_impl.1} parent=1 // pred_fallthru
      _
    // Predicated region
    $region6: #{_forward_impl.1} parent=1 // pred_check
      _
    $region7: #{_forward_impl.1} parent=1 // pred_check_branch
      %22 = sbr.rel (0) target = $region9
    $region8: #{_forward_impl.1} parent=1 // pred_region
      _
    $region9: #{_forward_impl.1} parent=1 // pred_fallthru
      _
    // Predicated region
    $region10: #{_forward_impl.1} parent=1 // pred_check
      _
    $region11: #{_forward_impl.1} parent=1 // pred_check_branch
      %24 = sbr.rel (0) target = $region13
    $region12: #{_forward_impl.1} parent=1 // pred_region
      %s26 = ssub.s32 256, 256
      %27 = vsyncadd [#allocation4], %s26
      %s29 = sshll.u32 [#allocation3], 4
      %s30 = int_to_ptr.vmem [resolvable:$true] %s29
      %32 = dma.hbm_to_vmem [thread:$0]  %s2, 256, %s30, [#allocation4]
    $region13: #{_forward_impl.1} parent=1 // pred_fallthru
      _
    // Predicated region
    $region14: #{_forward_impl.1} parent=1 // pred_check
      _
    $region15: #{_forward_impl.1} parent=1 // pred_check_branch
      %34 = sbr.rel (0) target = $region17
    $region16: #{_forward_impl.1} parent=1 // pred_region
      %s36 = ssub.s32 131072, 131072
      %37 = vsyncadd [#allocation7], %s36
      %s38 = sshll.u32 [#allocation6], 4
      %s39 = int_to_ptr.vmem [resolvable:$true] %s38
      %44 = dma.hbm_to_vmem [thread:$0]  %s3, 131072, %s39, [#allocation7], 512, 512, 32
    $region17: #{_forward_impl.1} parent=1 // pred_fallthru
      _
    // Predicated region
    $region18: #{_forward_impl.1} parent=1 // pred_check
      _
    $region19: #{_forward_impl.1} parent=1 // pred_check_branch
      %46 = sbr.rel (0) target = $region21
    $region20: #{_forward_impl.1} parent=1 // pred_region
      %s48 = ssub.s32 64, 64
      %49 = vsyncadd [#allocation7], %s48
      %s51 = sshll.u32 [#allocation8], 4
      %s52 = int_to_ptr.vmem [resolvable:$true] %s51
      %54 = dma.hbm_to_vmem [thread:$0]  %s4, 64, %s52, [#allocation7]
    $region21: #{_forward_impl.1} parent=1 // pred_fallthru
      _
    // Predicated region
    $region22: #{_forward_impl.1} parent=1 // pred_check
      _
    $region23: #{_forward_impl.1} parent=1 // pred_check_branch
      %56 = sbr.rel (0) target = $region25
    $region24: #{_forward_impl.1} parent=1 // pred_region
      %s58 = ssub.s32 8192, 8192
      %59 = vsyncadd [#allocation10], %s58
      %s60 = sshll.u32 [#allocation9], 4
      %s61 = int_to_ptr.vmem [resolvable:$true] %s60
      %66 = dma.hbm_to_vmem [thread:$0]  %s5, 8192, %s61, [#allocation10], 128, 128, 8
    $region25: #{_forward_impl.1} parent=1 // pred_fallthru
      _
    // Predicated region
    $region26: #{_forward_impl.1} parent=1 // pred_check
      _
    $region27: #{_forward_impl.1} parent=1 // pred_check_branch
      %68 = sbr.rel (0) target = $region29
    $region28: #{_forward_impl.1} parent=1 // pred_region
      %s70 = ssub.s32 16, 16
      %71 = vsyncadd [#allocation10], %s70
      %s73 = sshll.u32 [#allocation11], 4
      %s74 = int_to_ptr.vmem [resolvable:$true] %s73
      %76 = dma.hbm_to_vmem [thread:$0]  %s6, 16, %s74, [#allocation10]
    $region29: #{_forward_impl.1} parent=1 // pred_fallthru
      _
    // Predicated region
    $region30: #{_forward_impl.1} parent=1 // pred_check
      _
    $region31: #{_forward_impl.1} parent=1 // pred_check_branch
      %78 = sbr.rel (0) target = $region33
    $region32: #{_forward_impl.1} parent=1 // pred_region
      %79 = dma.done [#allocation4], 256
    $region33: #{_forward_impl.1} parent=1 // pred_fallthru
      _
    // Predicated region
    $region34: #{_forward_impl.1} parent=1 // pred_check
      _
    $region35: #{_forward_impl.1} parent=1 // pred_check_branch
      %81 = sbr.rel (0) target = $region37
    $region36: #{_forward_impl.1} parent=1 // pred_region
      %82 = dma.done [#allocation7], 131072
    $region37: #{_forward_impl.1} parent=1 // pred_fallthru
      _
    // Predicated region
    $region38: #{_forward_impl.1} parent=1 // pred_check
      _
    $region39: #{_forward_impl.1} parent=1 // pred_check_branch
      %84 = sbr.rel (0) target = $region41
    $region40: #{_forward_impl.1} parent=1 // pred_region
      %85 = dma.done [#allocation7], 64
    $region41: #{_forward_impl.1} parent=1 // pred_fallthru
      _
    // Predicated region
    $region42: #{_forward_impl.1} parent=1 // pred_check
      _
    $region43: #{_forward_impl.1} parent=1 // pred_check_branch
      %87 = sbr.rel (0) target = $region45
    $region44: #{_forward_impl.1} parent=1 // pred_region
      %88 = dma.done [#allocation10], 8192
    $region45: #{_forward_impl.1} parent=1 // pred_fallthru
      _
    // Predicated region
    $region46: #{_forward_impl.1} parent=1 // pred_check
      _
    $region47: #{_forward_impl.1} parent=1 // pred_check_branch
      %90 = sbr.rel (0) target = $region49
    $region48: #{_forward_impl.1} parent=1 // pred_region
      %91 = dma.done [#allocation10], 16
    $region49: #{_forward_impl.1} parent=1 // pred_fallthru
      _
    %p92 = scmp.eq.s32.totalorder 0, 0
    // Predicated region
    $region50: #{_forward_impl.1} parent=1 // pred_check
      %p93 = pneg %p92
    $region51: #{_forward_impl.1} parent=1 // pred_check_branch
      %95 = sbr.rel (%p93) target = $region53
    $region52: #{_forward_impl.1} parent=1 // pred_region
      %vm96 = vcmask 25600
      %97 = vst.msk [vmem:[#allocation2] sm:$0x3] %vm96, 0.0
    $region53: #{_forward_impl.1} parent=1 // pred_fallthru
      _
    %v98 = vld [vmem:[%s0] sm:$0xff]
    %v99 = vld [vmem:[%s0 + $0x8] sm:$0xff]
    %v100 = vld [vmem:[#allocation2] sm:$0x3]
    %v103 = vcombine.high %v98, %v98
    %v104 = vcombine.high %v99, %v99
    %vm107 = vcmask 1043456
    %v108 = vsel %vm107, %v98, 0.0
    %v109 = vsel %vm107, %v103, 0.0
    %v110 = vadd.f32 %v108, %v109
    %111 = vadd.xlane.f32.xlu0 %v110
    %v112 = vpop.xlane.xlu0 %111
    %v113 = vsel %vm107, %v99, 0.0
    %v114 = vsel %vm107, %v104, 0.0
    %v115 = vadd.f32 %v113, %v114
    %116 = vadd.xlane.f32.xlu0 %v115
    %v117 = vpop.xlane.xlu0 %116
    %v120 = vlaneseq
    %v121 = vand.u32 %v120, 127
    %v122 = vlaneseq
    %v123 = vshrl.u32 %v122, 7
    %v124 = vsub.s32 %v121, %v123
    %v125 = vrot.slane %v112, %v124
    %v126 = vlaneseq
    %v127 = vshrl.u32 %v126, 7
    %v128 = vsub.s32 %v121, %v127
    %v129 = vrot.slane %v117, %v128
    %vm130 = vcmask 1041409
    %v131 = vsel %vm130, %v129, %v125
    %v133 = vadd.f32 %v100, %v131
    %vm134 = vcmask 25600
    %135 = vst.msk [vmem:[#allocation2] sm:$0x3] %vm134, %v133
    // Predicated region
    $region54: #{_forward_impl.1} parent=1 // pred_check
      %p136 = pneg %p92
    $region55: #{_forward_impl.1} parent=1 // pred_check_branch
      %138 = sbr.rel (%p136) target = $region57
    $region56: #{_forward_impl.1} parent=1 // pred_region
      %v139 = vld [vmem:[#allocation2] sm:$0x3]
      %v140 = vld [vmem:[%s1] sm:$0xff]
      %v141 = vld [vmem:[%s1 + $0x8] sm:$0xff]
      %v142 = vld [vmem:[%s1 + $0x10] sm:$0xff]
      %v143 = vld [vmem:[%s1 + $0x18] sm:$0xff]
      %v144 = vld [vmem:[%s1 + $0x20] sm:$0xff]
      %v145 = vld [vmem:[%s1 + $0x28] sm:$0xff]
      %v146 = vld [vmem:[%s1 + $0x30] sm:$0xff]
      %v147 = vld [vmem:[%s1 + $0x38] sm:$0xff]
      %v148 = vld [vmem:[#allocation3] sm:$0xff]
      %v149 = vld [vmem:[#allocation3 + $0x8] sm:$0xff]
      %v152 = vlaneseq
      %v153 = vshrl.u32 %v152, 7
      %v154 = vsub.s32 0, %v153
      %v155 = vrot.slane %v148, %v154
      %v156 = vlaneseq
      %v157 = vshrl.u32 %v156, 7
      %v158 = vsub.s32 1, %v157
      %v159 = vrot.slane %v148, %v158
      %v160 = vlaneseq
      %v161 = vshrl.u32 %v160, 7
      %v162 = vsub.s32 2, %v161
      %v163 = vrot.slane %v148, %v162
      %v164 = vlaneseq
      %v165 = vshrl.u32 %v164, 7
      %v166 = vsub.s32 3, %v165
      %v167 = vrot.slane %v148, %v166
      %v168 = vlaneseq
      %v169 = vshrl.u32 %v168, 7
      %v170 = vsub.s32 4, %v169
      %v171 = vrot.slane %v148, %v170
      %v172 = vlaneseq
      %v173 = vshrl.u32 %v172, 7
      %v174 = vsub.s32 5, %v173
      %v175 = vrot.slane %v148, %v174
      %v176 = vlaneseq
      %v177 = vshrl.u32 %v176, 7
      %v178 = vsub.s32 6, %v177
      %v179 = vrot.slane %v148, %v178
      %v180 = vlaneseq
      %v181 = vshrl.u32 %v180, 7
      %v182 = vsub.s32 7, %v181
      %v183 = vrot.slane %v148, %v182
      %v184 = vlaneseq
      %v185 = vshrl.u32 %v184, 7
      %v186 = vsub.s32 0, %v185
      %v187 = vrot.slane %v149, %v186
      %v188 = vlaneseq
      %v189 = vshrl.u32 %v188, 7
      %v190 = vsub.s32 1, %v189
      %v191 = vrot.slane %v149, %v190
      %v192 = vlaneseq
      %v193 = vshrl.u32 %v192, 7
      %v194 = vsub.s32 2, %v193
      %v195 = vrot.slane %v149, %v194
      %v196 = vlaneseq
      %v197 = vshrl.u32 %v196, 7
      %v198 = vsub.s32 3, %v197
      %v199 = vrot.slane %v149, %v198
      %v200 = vlaneseq
      %v201 = vshrl.u32 %v200, 7
      %v202 = vsub.s32 4, %v201
      %v203 = vrot.slane %v149, %v202
      %v204 = vlaneseq
      %v205 = vshrl.u32 %v204, 7
      %v206 = vsub.s32 5, %v205
      %v207 = vrot.slane %v149, %v206
      %v208 = vlaneseq
      %v209 = vshrl.u32 %v208, 7
      %v210 = vsub.s32 6, %v209
      %v211 = vrot.slane %v149, %v210
      %v212 = vlaneseq
      %v213 = vshrl.u32 %v212, 7
      %v214 = vsub.s32 7, %v213
      %v215 = vrot.slane %v149, %v214
      %v240 = vcombine.high %v140, %v140
      %v241 = vcombine.high %v141, %v141
      %v242 = vcombine.high %v142, %v142
      %v243 = vcombine.high %v143, %v143
      %v244 = vcombine.high %v144, %v144
      %v245 = vcombine.high %v145, %v145
      %v246 = vcombine.high %v146, %v146
      %v247 = vcombine.high %v147, %v147
      %vm248 = vcmask 31744
      %v250 = vsel %vm248, %v139, 0
      %v252 = vsel %vm107, %v140, 0
      %v254 = vsel %vm107, %v240, 0
      %v256 = vsel %vm107, %v141, 0
      %v258 = vsel %vm107, %v241, 0
      %v260 = vsel %vm107, %v142, 0
      %v262 = vsel %vm107, %v242, 0
      %v264 = vsel %vm107, %v143, 0
      %v266 = vsel %vm107, %v243, 0
      %v268 = vsel %vm107, %v144, 0
      %v270 = vsel %vm107, %v244, 0
      %v272 = vsel %vm107, %v145, 0
      %v274 = vsel %vm107, %v245, 0
      %v276 = vsel %vm107, %v146, 0
      %v278 = vsel %vm107, %v246, 0
      %v280 = vsel %vm107, %v147, 0
      %v282 = vsel %vm107, %v247, 0
      %284 = vmatprep.subr.mxu0 %v254
      %285 = vmatpush1.msra.mxu0 %v252
      %286 = vmatprep.subr.mxu0 0.0
      %287 = vmatpush1.msra.mxu0 0.0
      %288 = vmatprep.subr.mxu0 0.0
      %289 = vmatpush1.msra.mxu0 0.0
      %290 = vmatprep.subr.mxu0 0.0
      %291 = vmatpush1.msra.mxu0 0.0
      %292 = vmatprep.subr.mxu0 0.0
      %293 = vmatpush1.msra.mxu0 0.0
      %294 = vmatprep.subr.mxu0 0.0
      %295 = vmatpush1.msra.mxu0 0.0
      %296 = vmatprep.subr.mxu0 0.0
      %297 = vmatpush1.msra.mxu0 0.0
      %298 = vmatprep.subr.mxu0 0.0
      %299 = vmatpush1.msra.mxu0 0.0
      %300 = vmatprep.subr.mxu0 0.0
      %301 = vmatpush1.msra.mxu0 0.0
      %302 = vmatprep.subr.mxu0 0.0
      %303 = vmatpush1.msra.mxu0 0.0
      %304 = vmatprep.subr.mxu0 0.0
      %305 = vmatpush1.msra.mxu0 0.0
      %306 = vmatprep.subr.mxu0 0.0
      %307 = vmatpush1.msra.mxu0 0.0
      %308 = vmatprep.subr.mxu0 0.0
      %309 = vmatpush1.msra.mxu0 0.0
      %310 = vmatprep.subr.mxu0 0.0
      %311 = vmatpush1.msra.mxu0 0.0
      %312 = vmatprep.subr.mxu0 0.0
      %313 = vmatpush1.msra.mxu0 0.0
      %314 = vmatprep.subr.mxu0 0.0
      %315 = vmatpush1.msra.mxu0 0.0
      %316 = vmatprep.subr.mxu0 0.0
      %317 = vmatpush1.msra.mxu0 0.0
      %318 = vmatprep.subr.mxu0 0.0
      %319 = vmatpush1.msra.mxu0 0.0
      %320 = vmatprep.subr.mxu0 0.0
      %321 = vmatpush1.msra.mxu0 0.0
      %322 = vmatprep.subr.mxu0 0.0
      %323 = vmatpush1.msra.mxu0 0.0
      %324 = vmatprep.subr.mxu0 0.0
      %325 = vmatpush1.msra.mxu0 0.0
      %326 = vmatprep.subr.mxu0 0.0
      %327 = vmatpush1.msra.mxu0 0.0
      %328 = vmatprep.subr.mxu0 0.0
      %329 = vmatpush1.msra.mxu0 0.0
      %330 = vmatprep.subr.mxu0 0.0
      %331 = vmatpush1.msra.mxu0 0.0
      %332 = vmatprep.subr.mxu0 0.0
      %333 = vmatpush1.msra.mxu0 0.0
      %334 = vmatprep.subr.mxu0 0.0
      %335 = vmatpush1.msra.mxu0 0.0
      %336 = vmatprep.subr.mxu0 0.0
      %337 = vmatpush1.msra.mxu0 0.0
      %338 = vmatprep.subr.mxu0 0.0
      %339 = vmatpush1.msra.mxu0 0.0
      %340 = vmatprep.subr.mxu0 0.0
      %341 = vmatpush1.msra.mxu0 0.0
      %342 = vmatprep.subr.mxu0 0.0
      %343 = vmatpush1.msra.mxu0 0.0
      %344 = vmatprep.subr.mxu0 0.0
      %345 = vmatpush1.msra.mxu0 0.0
      %346 = vmatprep.subr.mxu0 0.0
      %347 = vmatpush1.msra.mxu0 0.0
      %348 = vmatprep.mubr.f32.mxu0 0.0
      %349 = vmatmul.mubr.f32.gmra.mrb[0].mxu0 %v250
      %v350 = vpop.f32.mrb[0].mxu0
      %v351 = vadd.f32 %v155, %v350
      %v352 = vpop.f32.mrb[0].mxu0
      %v353 = vadd.f32 %v159, %v352
      %354 = vdwg.mxu0
      %355 = vmatprep.subr.mxu0 %v258
      %356 = vmatpush1.msra.mxu0 %v256
      %357 = vmatprep.subr.mxu0 0.0
      %358 = vmatpush1.msra.mxu0 0.0
      %359 = vmatprep.subr.mxu0 0.0
      %360 = vmatpush1.msra.mxu0 0.0
      %361 = vmatprep.subr.mxu0 0.0
      %362 = vmatpush1.msra.mxu0 0.0
      %363 = vmatprep.subr.mxu0 0.0
      %364 = vmatpush1.msra.mxu0 0.0
      %365 = vmatprep.subr.mxu0 0.0
      %366 = vmatpush1.msra.mxu0 0.0
      %367 = vmatprep.subr.mxu0 0.0
      %368 = vmatpush1.msra.mxu0 0.0
      %369 = vmatprep.subr.mxu0 0.0
      %370 = vmatpush1.msra.mxu0 0.0
      %371 = vmatprep.subr.mxu0 0.0
      %372 = vmatpush1.msra.mxu0 0.0
      %373 = vmatprep.subr.mxu0 0.0
      %374 = vmatpush1.msra.mxu0 0.0
      %375 = vmatprep.subr.mxu0 0.0
      %376 = vmatpush1.msra.mxu0 0.0
      %377 = vmatprep.subr.mxu0 0.0
      %378 = vmatpush1.msra.mxu0 0.0
      %379 = vmatprep.subr.mxu0 0.0
      %380 = vmatpush1.msra.mxu0 0.0
      %381 = vmatprep.subr.mxu0 0.0
      %382 = vmatpush1.msra.mxu0 0.0
      %383 = vmatprep.subr.mxu0 0.0
      %384 = vmatpush1.msra.mxu0 0.0
      %385 = vmatprep.subr.mxu0 0.0
      %386 = vmatpush1.msra.mxu0 0.0
      %387 = vmatprep.subr.mxu0 0.0
      %388 = vmatpush1.msra.mxu0 0.0
      %389 = vmatprep.subr.mxu0 0.0
      %390 = vmatpush1.msra.mxu0 0.0
      %391 = vmatprep.subr.mxu0 0.0
      %392 = vmatpush1.msra.mxu0 0.0
      %393 = vmatprep.subr.mxu0 0.0
      %394 = vmatpush1.msra.mxu0 0.0
      %395 = vmatprep.subr.mxu0 0.0
      %396 = vmatpush1.msra.mxu0 0.0
      %397 = vmatprep.subr.mxu0 0.0
      %398 = vmatpush1.msra.mxu0 0.0
      %399 = vmatprep.subr.mxu0 0.0
      %400 = vmatpush1.msra.mxu0 0.0
      %401 = vmatprep.subr.mxu0 0.0
      %402 = vmatpush1.msra.mxu0 0.0
      %403 = vmatprep.subr.mxu0 0.0
      %404 = vmatpush1.msra.mxu0 0.0
      %405 = vmatprep.subr.mxu0 0.0
      %406 = vmatpush1.msra.mxu0 0.0
      %407 = vmatprep.subr.mxu0 0.0
      %408 = vmatpush1.msra.mxu0 0.0
      %409 = vmatprep.subr.mxu0 0.0
      %410 = vmatpush1.msra.mxu0 0.0
      %411 = vmatprep.subr.mxu0 0.0
      %412 = vmatpush1.msra.mxu0 0.0
      %413 = vmatprep.subr.mxu0 0.0
      %414 = vmatpush1.msra.mxu0 0.0
      %415 = vmatprep.subr.mxu0 0.0
      %416 = vmatpush1.msra.mxu0 0.0
      %417 = vmatprep.subr.mxu0 0.0
      %418 = vmatpush1.msra.mxu0 0.0
      %419 = vmatprep.mubr.f32.mxu0 0.0
      %420 = vmatmul.mubr.f32.gmra.mrb[0].mxu0 %v250
      %v421 = vpop.f32.mrb[0].mxu0
      %v422 = vadd.f32 %v163, %v421
      %v423 = vpop.f32.mrb[0].mxu0
      %v424 = vadd.f32 %v167, %v423
      %425 = vdwg.mxu0
      %426 = vmatprep.subr.mxu0 %v262
      %427 = vmatpush1.msra.mxu0 %v260
      %428 = vmatprep.subr.mxu0 0.0
      %429 = vmatpush1.msra.mxu0 0.0
      %430 = vmatprep.subr.mxu0 0.0
      %431 = vmatpush1.msra.mxu0 0.0
      %432 = vmatprep.subr.mxu0 0.0
      %433 = vmatpush1.msra.mxu0 0.0
      %434 = vmatprep.subr.mxu0 0.0
      %435 = vmatpush1.msra.mxu0 0.0
      %436 = vmatprep.subr.mxu0 0.0
      %437 = vmatpush1.msra.mxu0 0.0
      %438 = vmatprep.subr.mxu0 0.0
      %439 = vmatpush1.msra.mxu0 0.0
      %440 = vmatprep.subr.mxu0 0.0
      %441 = vmatpush1.msra.mxu0 0.0
      %442 = vmatprep.subr.mxu0 0.0
      %443 = vmatpush1.msra.mxu0 0.0
      %444 = vmatprep.subr.mxu0 0.0
      %445 = vmatpush1.msra.mxu0 0.0
      %446 = vmatprep.subr.mxu0 0.0
      %447 = vmatpush1.msra.mxu0 0.0
      %448 = vmatprep.subr.mxu0 0.0
      %449 = vmatpush1.msra.mxu0 0.0
      %450 = vmatprep.subr.mxu0 0.0
      %451 = vmatpush1.msra.mxu0 0.0
      %452 = vmatprep.subr.mxu0 0.0
      %453 = vmatpush1.msra.mxu0 0.0
      %454 = vmatprep.subr.mxu0 0.0
      %455 = vmatpush1.msra.mxu0 0.0
      %456 = vmatprep.subr.mxu0 0.0
      %457 = vmatpush1.msra.mxu0 0.0
      %458 = vmatprep.subr.mxu0 0.0
      %459 = vmatpush1.msra.mxu0 0.0
      %460 = vmatprep.subr.mxu0 0.0
      %461 = vmatpush1.msra.mxu0 0.0
      %462 = vmatprep.subr.mxu0 0.0
      %463 = vmatpush1.msra.mxu0 0.0
      %464 = vmatprep.subr.mxu0 0.0
      %465 = vmatpush1.msra.mxu0 0.0
      %466 = vmatprep.subr.mxu0 0.0
      %467 = vmatpush1.msra.mxu0 0.0
      %468 = vmatprep.subr.mxu0 0.0
      %469 = vmatpush1.msra.mxu0 0.0
      %470 = vmatprep.subr.mxu0 0.0
      %471 = vmatpush1.msra.mxu0 0.0
      %472 = vmatprep.subr.mxu0 0.0
      %473 = vmatpush1.msra.mxu0 0.0
      %474 = vmatprep.subr.mxu0 0.0
      %475 = vmatpush1.msra.mxu0 0.0
      %476 = vmatprep.subr.mxu0 0.0
      %477 = vmatpush1.msra.mxu0 0.0
      %478 = vmatprep.subr.mxu0 0.0
      %479 = vmatpush1.msra.mxu0 0.0
      %480 = vmatprep.subr.mxu0 0.0
      %481 = vmatpush1.msra.mxu0 0.0
      %482 = vmatprep.subr.mxu0 0.0
      %483 = vmatpush1.msra.mxu0 0.0
      %484 = vmatprep.subr.mxu0 0.0
      %485 = vmatpush1.msra.mxu0 0.0
      %486 = vmatprep.subr.mxu0 0.0
      %487 = vmatpush1.msra.mxu0 0.0
      %488 = vmatprep.subr.mxu0 0.0
      %489 = vmatpush1.msra.mxu0 0.0
      %490 = vmatprep.mubr.f32.mxu0 0.0
      %491 = vmatmul.mubr.f32.gmra.mrb[0].mxu0 %v250
      %v492 = vpop.f32.mrb[0].mxu0
      %v493 = vadd.f32 %v171, %v492
      %v494 = vpop.f32.mrb[0].mxu0
      %v495 = vadd.f32 %v175, %v494
      %496 = vdwg.mxu0
      %497 = vmatprep.subr.mxu0 %v266
      %498 = vmatpush1.msra.mxu0 %v264
      %499 = vmatprep.subr.mxu0 0.0
      %500 = vmatpush1.msra.mxu0 0.0
      %501 = vmatprep.subr.mxu0 0.0
      %502 = vmatpush1.msra.mxu0 0.0
      %503 = vmatprep.subr.mxu0 0.0
      %504 = vmatpush1.msra.mxu0 0.0
      %505 = vmatprep.subr.mxu0 0.0
      %506 = vmatpush1.msra.mxu0 0.0
      %507 = vmatprep.subr.mxu0 0.0
      %508 = vmatpush1.msra.mxu0 0.0
      %509 = vmatprep.subr.mxu0 0.0
      %510 = vmatpush1.msra.mxu0 0.0
      %511 = vmatprep.subr.mxu0 0.0
      %512 = vmatpush1.msra.mxu0 0.0
      %513 = vmatprep.subr.mxu0 0.0
      %514 = vmatpush1.msra.mxu0 0.0
      %515 = vmatprep.subr.mxu0 0.0
      %516 = vmatpush1.msra.mxu0 0.0
      %517 = vmatprep.subr.mxu0 0.0
      %518 = vmatpush1.msra.mxu0 0.0
      %519 = vmatprep.subr.mxu0 0.0
      %520 = vmatpush1.msra.mxu0 0.0
      %521 = vmatprep.subr.mxu0 0.0
      %522 = vmatpush1.msra.mxu0 0.0
      %523 = vmatprep.subr.mxu0 0.0
      %524 = vmatpush1.msra.mxu0 0.0
      %525 = vmatprep.subr.mxu0 0.0
      %526 = vmatpush1.msra.mxu0 0.0
      %527 = vmatprep.subr.mxu0 0.0
      %528 = vmatpush1.msra.mxu0 0.0
      %529 = vmatprep.subr.mxu0 0.0
      %530 = vmatpush1.msra.mxu0 0.0
      %531 = vmatprep.subr.mxu0 0.0
      %532 = vmatpush1.msra.mxu0 0.0
      %533 = vmatprep.subr.mxu0 0.0
      %534 = vmatpush1.msra.mxu0 0.0
      %535 = vmatprep.subr.mxu0 0.0
      %536 = vmatpush1.msra.mxu0 0.0
      %537 = vmatprep.subr.mxu0 0.0
      %538 = vmatpush1.msra.mxu0 0.0
      %539 = vmatprep.subr.mxu0 0.0
      %540 = vmatpush1.msra.mxu0 0.0
      %541 = vmatprep.subr.mxu0 0.0
      %542 = vmatpush1.msra.mxu0 0.0
      %543 = vmatprep.subr.mxu0 0.0
      %544 = vmatpush1.msra.mxu0 0.0
      %545 = vmatprep.subr.mxu0 0.0
      %546 = vmatpush1.msra.mxu0 0.0
      %547 = vmatprep.subr.mxu0 0.0
      %548 = vmatpush1.msra.mxu0 0.0
      %549 = vmatprep.subr.mxu0 0.0
      %550 = vmatpush1.msra.mxu0 0.0
      %551 = vmatprep.subr.mxu0 0.0
      %552 = vmatpush1.msra.mxu0 0.0
      %553 = vmatprep.subr.mxu0 0.0
      %554 = vmatpush1.msra.mxu0 0.0
      %555 = vmatprep.subr.mxu0 0.0
      %556 = vmatpush1.msra.mxu0 0.0
      %557 = vmatprep.subr.mxu0 0.0
      %558 = vmatpush1.msra.mxu0 0.0
      %559 = vmatprep.subr.mxu0 0.0
      %560 = vmatpush1.msra.mxu0 0.0
      %561 = vmatprep.mubr.f32.mxu0 0.0
      %562 = vmatmul.mubr.f32.gmra.mrb[0].mxu0 %v250
      %v563 = vpop.f32.mrb[0].mxu0
      %v564 = vadd.f32 %v179, %v563
      %v565 = vpop.f32.mrb[0].mxu0
      %v566 = vadd.f32 %v183, %v565
      %567 = vdwg.mxu0
      %568 = vmatprep.subr.mxu0 %v270
      %569 = vmatpush1.msra.mxu0 %v268
      %570 = vmatprep.subr.mxu0 0.0
      %571 = vmatpush1.msra.mxu0 0.0
      %572 = vmatprep.subr.mxu0 0.0
      %573 = vmatpush1.msra.mxu0 0.0
      %574 = vmatprep.subr.mxu0 0.0
      %575 = vmatpush1.msra.mxu0 0.0
      %576 = vmatprep.subr.mxu0 0.0
      %577 = vmatpush1.msra.mxu0 0.0
      %578 = vmatprep.subr.mxu0 0.0
      %579 = vmatpush1.msra.mxu0 0.0
      %580 = vmatprep.subr.mxu0 0.0
      %581 = vmatpush1.msra.mxu0 0.0
      %582 = vmatprep.subr.mxu0 0.0
      %583 = vmatpush1.msra.mxu0 0.0
      %584 = vmatprep.subr.mxu0 0.0
      %585 = vmatpush1.msra.mxu0 0.0
      %586 = vmatprep.subr.mxu0 0.0
      %587 = vmatpush1.msra.mxu0 0.0
      %588 = vmatprep.subr.mxu0 0.0
      %589 = vmatpush1.msra.mxu0 0.0
      %590 = vmatprep.subr.mxu0 0.0
      %591 = vmatpush1.msra.mxu0 0.0
      %592 = vmatprep.subr.mxu0 0.0
      %593 = vmatpush1.msra.mxu0 0.0
      %594 = vmatprep.subr.mxu0 0.0
      %595 = vmatpush1.msra.mxu0 0.0
      %596 = vmatprep.subr.mxu0 0.0
      %597 = vmatpush1.msra.mxu0 0.0
      %598 = vmatprep.subr.mxu0 0.0
      %599 = vmatpush1.msra.mxu0 0.0
      %600 = vmatprep.subr.mxu0 0.0
      %601 = vmatpush1.msra.mxu0 0.0
      %602 = vmatprep.subr.mxu0 0.0
      %603 = vmatpush1.msra.mxu0 0.0
      %604 = vmatprep.subr.mxu0 0.0
      %605 = vmatpush1.msra.mxu0 0.0
      %606 = vmatprep.subr.mxu0 0.0
      %607 = vmatpush1.msra.mxu0 0.0
      %608 = vmatprep.subr.mxu0 0.0
      %609 = vmatpush1.msra.mxu0 0.0
      %610 = vmatprep.subr.mxu0 0.0
      %611 = vmatpush1.msra.mxu0 0.0
      %612 = vmatprep.subr.mxu0 0.0
      %613 = vmatpush1.msra.mxu0 0.0
      %614 = vmatprep.subr.mxu0 0.0
      %615 = vmatpush1.msra.mxu0 0.0
      %616 = vmatprep.subr.mxu0 0.0
      %617 = vmatpush1.msra.mxu0 0.0
      %618 = vmatprep.subr.mxu0 0.0
      %619 = vmatpush1.msra.mxu0 0.0
      %620 = vmatprep.subr.mxu0 0.0
      %621 = vmatpush1.msra.mxu0 0.0
      %622 = vmatprep.subr.mxu0 0.0
      %623 = vmatpush1.msra.mxu0 0.0
      %624 = vmatprep.subr.mxu0 0.0
      %625 = vmatpush1.msra.mxu0 0.0
      %626 = vmatprep.subr.mxu0 0.0
      %627 = vmatpush1.msra.mxu0 0.0
      %628 = vmatprep.subr.mxu0 0.0
      %629 = vmatpush1.msra.mxu0 0.0
      %630 = vmatprep.subr.mxu0 0.0
      %631 = vmatpush1.msra.mxu0 0.0
      %632 = vmatprep.mubr.f32.mxu0 0.0
      %633 = vmatmul.mubr.f32.gmra.mrb[0].mxu0 %v250
      %v634 = vpop.f32.mrb[0].mxu0
      %v635 = vadd.f32 %v187, %v634
      %v636 = vpop.f32.mrb[0].mxu0
      %v637 = vadd.f32 %v191, %v636
      %638 = vdwg.mxu0
      %639 = vmatprep.subr.mxu0 %v274
      %640 = vmatpush1.msra.mxu0 %v272
      %641 = vmatprep.subr.mxu0 0.0
      %642 = vmatpush1.msra.mxu0 0.0
      %643 = vmatprep.subr.mxu0 0.0
      %644 = vmatpush1.msra.mxu0 0.0
      %645 = vmatprep.subr.mxu0 0.0
      %646 = vmatpush1.msra.mxu0 0.0
      %647 = vmatprep.subr.mxu0 0.0
      %648 = vmatpush1.msra.mxu0 0.0
      %649 = vmatprep.subr.mxu0 0.0
      %650 = vmatpush1.msra.mxu0 0.0
      %651 = vmatprep.subr.mxu0 0.0
      %652 = vmatpush1.msra.mxu0 0.0
      %653 = vmatprep.subr.mxu0 0.0
      %654 = vmatpush1.msra.mxu0 0.0
      %655 = vmatprep.subr.mxu0 0.0
      %656 = vmatpush1.msra.mxu0 0.0
      %657 = vmatprep.subr.mxu0 0.0
      %658 = vmatpush1.msra.mxu0 0.0
      %659 = vmatprep.subr.mxu0 0.0
      %660 = vmatpush1.msra.mxu0 0.0
      %661 = vmatprep.subr.mxu0 0.0
      %662 = vmatpush1.msra.mxu0 0.0
      %663 = vmatprep.subr.mxu0 0.0
      %664 = vmatpush1.msra.mxu0 0.0
      %665 = vmatprep.subr.mxu0 0.0
      %666 = vmatpush1.msra.mxu0 0.0
      %667 = vmatprep.subr.mxu0 0.0
      %668 = vmatpush1.msra.mxu0 0.0
      %669 = vmatprep.subr.mxu0 0.0
      %670 = vmatpush1.msra.mxu0 0.0
      %671 = vmatprep.subr.mxu0 0.0
      %672 = vmatpush1.msra.mxu0 0.0
      %673 = vmatprep.subr.mxu0 0.0
      %674 = vmatpush1.msra.mxu0 0.0
      %675 = vmatprep.subr.mxu0 0.0
      %676 = vmatpush1.msra.mxu0 0.0
      %677 = vmatprep.subr.mxu0 0.0
      %678 = vmatpush1.msra.mxu0 0.0
      %679 = vmatprep.subr.mxu0 0.0
      %680 = vmatpush1.msra.mxu0 0.0
      %681 = vmatprep.subr.mxu0 0.0
      %682 = vmatpush1.msra.mxu0 0.0
      %683 = vmatprep.subr.mxu0 0.0
      %684 = vmatpush1.msra.mxu0 0.0
      %685 = vmatprep.subr.mxu0 0.0
      %686 = vmatpush1.msra.mxu0 0.0
      %687 = vmatprep.subr.mxu0 0.0
      %688 = vmatpush1.msra.mxu0 0.0
      %689 = vmatprep.subr.mxu0 0.0
      %690 = vmatpush1.msra.mxu0 0.0
      %691 = vmatprep.subr.mxu0 0.0
      %692 = vmatpush1.msra.mxu0 0.0
      %693 = vmatprep.subr.mxu0 0.0
      %694 = vmatpush1.msra.mxu0 0.0
      %695 = vmatprep.subr.mxu0 0.0
      %696 = vmatpush1.msra.mxu0 0.0
      %697 = vmatprep.subr.mxu0 0.0
      %698 = vmatpush1.msra.mxu0 0.0
      %699 = vmatprep.subr.mxu0 0.0
      %700 = vmatpush1.msra.mxu0 0.0
      %701 = vmatprep.subr.mxu0 0.0
      %702 = vmatpush1.msra.mxu0 0.0
      %703 = vmatprep.mubr.f32.mxu0 0.0
      %704 = vmatmul.mubr.f32.gmra.mrb[0].mxu0 %v250
      %v705 = vpop.f32.mrb[0].mxu0
      %v706 = vadd.f32 %v195, %v705
      %v707 = vpop.f32.mrb[0].mxu0
      %v708 = vadd.f32 %v199, %v707
      %709 = vdwg.mxu0
      %710 = vmatprep.subr.mxu0 %v278
      %711 = vmatpush1.msra.mxu0 %v276
      %712 = vmatprep.subr.mxu0 0.0
      %713 = vmatpush1.msra.mxu0 0.0
      %714 = vmatprep.subr.mxu0 0.0
      %715 = vmatpush1.msra.mxu0 0.0
      %716 = vmatprep.subr.mxu0 0.0
      %717 = vmatpush1.msra.mxu0 0.0
      %718 = vmatprep.subr.mxu0 0.0
      %719 = vmatpush1.msra.mxu0 0.0
      %720 = vmatprep.subr.mxu0 0.0
      %721 = vmatpush1.msra.mxu0 0.0
      %722 = vmatprep.subr.mxu0 0.0
      %723 = vmatpush1.msra.mxu0 0.0
      %724 = vmatprep.subr.mxu0 0.0
      %725 = vmatpush1.msra.mxu0 0.0
      %726 = vmatprep.subr.mxu0 0.0
      %727 = vmatpush1.msra.mxu0 0.0
      %728 = vmatprep.subr.mxu0 0.0
      %729 = vmatpush1.msra.mxu0 0.0
      %730 = vmatprep.subr.mxu0 0.0
      %731 = vmatpush1.msra.mxu0 0.0
      %732 = vmatprep.subr.mxu0 0.0
      %733 = vmatpush1.msra.mxu0 0.0
      %734 = vmatprep.subr.mxu0 0.0
      %735 = vmatpush1.msra.mxu0 0.0
      %736 = vmatprep.subr.mxu0 0.0
      %737 = vmatpush1.msra.mxu0 0.0
      %738 = vmatprep.subr.mxu0 0.0
      %739 = vmatpush1.msra.mxu0 0.0
      %740 = vmatprep.subr.mxu0 0.0
      %741 = vmatpush1.msra.mxu0 0.0
      %742 = vmatprep.subr.mxu0 0.0
      %743 = vmatpush1.msra.mxu0 0.0
      %744 = vmatprep.subr.mxu0 0.0
      %745 = vmatpush1.msra.mxu0 0.0
      %746 = vmatprep.subr.mxu0 0.0
      %747 = vmatpush1.msra.mxu0 0.0
      %748 = vmatprep.subr.mxu0 0.0
      %749 = vmatpush1.msra.mxu0 0.0
      %750 = vmatprep.subr.mxu0 0.0
      %751 = vmatpush1.msra.mxu0 0.0
      %752 = vmatprep.subr.mxu0 0.0
      %753 = vmatpush1.msra.mxu0 0.0
      %754 = vmatprep.subr.mxu0 0.0
      %755 = vmatpush1.msra.mxu0 0.0
      %756 = vmatprep.subr.mxu0 0.0
      %757 = vmatpush1.msra.mxu0 0.0
      %758 = vmatprep.subr.mxu0 0.0
      %759 = vmatpush1.msra.mxu0 0.0
      %760 = vmatprep.subr.mxu0 0.0
      %761 = vmatpush1.msra.mxu0 0.0
      %762 = vmatprep.subr.mxu0 0.0
      %763 = vmatpush1.msra.mxu0 0.0
      %764 = vmatprep.subr.mxu0 0.0
      %765 = vmatpush1.msra.mxu0 0.0
      %766 = vmatprep.subr.mxu0 0.0
      %767 = vmatpush1.msra.mxu0 0.0
      %768 = vmatprep.subr.mxu0 0.0
      %769 = vmatpush1.msra.mxu0 0.0
      %770 = vmatprep.subr.mxu0 0.0
      %771 = vmatpush1.msra.mxu0 0.0
      %772 = vmatprep.subr.mxu0 0.0
      %773 = vmatpush1.msra.mxu0 0.0
      %774 = vmatprep.mubr.f32.mxu0 0.0
      %775 = vmatmul.mubr.f32.gmra.mrb[0].mxu0 %v250
      %v776 = vpop.f32.mrb[0].mxu0
      %v777 = vadd.f32 %v203, %v776
      %v778 = vpop.f32.mrb[0].mxu0
      %v779 = vadd.f32 %v207, %v778
      %780 = vdwg.mxu0
      %781 = vmatprep.subr.mxu0 %v282
      %782 = vmatpush1.msra.mxu0 %v280
      %783 = vmatprep.subr.mxu0 0.0
      %784 = vmatpush1.msra.mxu0 0.0
      %785 = vmatprep.subr.mxu0 0.0
      %786 = vmatpush1.msra.mxu0 0.0
      %787 = vmatprep.subr.mxu0 0.0
      %788 = vmatpush1.msra.mxu0 0.0
      %789 = vmatprep.subr.mxu0 0.0
      %790 = vmatpush1.msra.mxu0 0.0
      %791 = vmatprep.subr.mxu0 0.0
      %792 = vmatpush1.msra.mxu0 0.0
      %793 = vmatprep.subr.mxu0 0.0
      %794 = vmatpush1.msra.mxu0 0.0
      %795 = vmatprep.subr.mxu0 0.0
      %796 = vmatpush1.msra.mxu0 0.0
      %797 = vmatprep.subr.mxu0 0.0
      %798 = vmatpush1.msra.mxu0 0.0
      %799 = vmatprep.subr.mxu0 0.0
      %800 = vmatpush1.msra.mxu0 0.0
      %801 = vmatprep.subr.mxu0 0.0
      %802 = vmatpush1.msra.mxu0 0.0
      %803 = vmatprep.subr.mxu0 0.0
      %804 = vmatpush1.msra.mxu0 0.0
      %805 = vmatprep.subr.mxu0 0.0
      %806 = vmatpush1.msra.mxu0 0.0
      %807 = vmatprep.subr.mxu0 0.0
      %808 = vmatpush1.msra.mxu0 0.0
      %809 = vmatprep.subr.mxu0 0.0
      %810 = vmatpush1.msra.mxu0 0.0
      %811 = vmatprep.subr.mxu0 0.0
      %812 = vmatpush1.msra.mxu0 0.0
      %813 = vmatprep.subr.mxu0 0.0
      %814 = vmatpush1.msra.mxu0 0.0
      %815 = vmatprep.subr.mxu0 0.0
      %816 = vmatpush1.msra.mxu0 0.0
      %817 = vmatprep.subr.mxu0 0.0
      %818 = vmatpush1.msra.mxu0 0.0
      %819 = vmatprep.subr.mxu0 0.0
      %820 = vmatpush1.msra.mxu0 0.0
      %821 = vmatprep.subr.mxu0 0.0
      %822 = vmatpush1.msra.mxu0 0.0
      %823 = vmatprep.subr.mxu0 0.0
      %824 = vmatpush1.msra.mxu0 0.0
      %825 = vmatprep.subr.mxu0 0.0
      %826 = vmatpush1.msra.mxu0 0.0
      %827 = vmatprep.subr.mxu0 0.0
      %828 = vmatpush1.msra.mxu0 0.0
      %829 = vmatprep.subr.mxu0 0.0
      %830 = vmatpush1.msra.mxu0 0.0
      %831 = vmatprep.subr.mxu0 0.0
      %832 = vmatpush1.msra.mxu0 0.0
      %833 = vmatprep.subr.mxu0 0.0
      %834 = vmatpush1.msra.mxu0 0.0
      %835 = vmatprep.subr.mxu0 0.0
      %836 = vmatpush1.msra.mxu0 0.0
      %837 = vmatprep.subr.mxu0 0.0
      %838 = vmatpush1.msra.mxu0 0.0
      %839 = vmatprep.subr.mxu0 0.0
      %840 = vmatpush1.msra.mxu0 0.0
      %841 = vmatprep.subr.mxu0 0.0
      %842 = vmatpush1.msra.mxu0 0.0
      %843 = vmatprep.subr.mxu0 0.0
      %844 = vmatpush1.msra.mxu0 0.0
      %845 = vmatprep.mubr.f32.mxu0 0.0
      %846 = vmatmul.mubr.f32.gmra.mrb[0].mxu0 %v250
      %v847 = vpop.f32.mrb[0].mxu0
      %v848 = vadd.f32 %v211, %v847
      %v849 = vpop.f32.mrb[0].mxu0
      %v850 = vadd.f32 %v215, %v849
      %851 = vdwg.mxu0
      %v868 = vcombine.low %v351, %v353
      %v869 = vcombine.low %v422, %v424
      %v871 = vunpack.c.l.s4 1983009808
      %v872 = vunpack.c.0.s8 %v871
      %v873 = vlaneseq
      %v874 = vshrl.u32 %v873, 7
      %v875 = vsub.s32 %v872, %v874
      %v876 = vrot.slane %v868, %v875
      %v878 = vunpack.c.l.s4 1983009808
      %v879 = vunpack.c.0.s8 %v878
      %v880 = vlaneseq
      %v881 = vshrl.u32 %v880, 7
      %v882 = vsub.s32 %v879, %v881
      %v883 = vrot.slane %v869, %v882
      %v884 = vcombine.low %v876, %v883
      %v885 = vcombine.low %v493, %v495
      %v886 = vcombine.low %v564, %v566
      %v888 = vunpack.c.l.s4 1983009808
      %v889 = vunpack.c.0.s8 %v888
      %v890 = vlaneseq
      %v891 = vshrl.u32 %v890, 7
      %v892 = vsub.s32 %v889, %v891
      %v893 = vrot.slane %v885, %v892
      %v895 = vunpack.c.l.s4 1983009808
      %v896 = vunpack.c.0.s8 %v895
      %v897 = vlaneseq
      %v898 = vshrl.u32 %v897, 7
      %v899 = vsub.s32 %v896, %v898
      %v900 = vrot.slane %v886, %v899
      %v901 = vcombine.low %v893, %v900
      %v902 = vcombine.low %v635, %v637
      %v903 = vcombine.low %v706, %v708
      %v905 = vunpack.c.l.s4 1983009808
      %v906 = vunpack.c.0.s8 %v905
      %v907 = vlaneseq
      %v908 = vshrl.u32 %v907, 7
      %v909 = vsub.s32 %v906, %v908
      %v910 = vrot.slane %v902, %v909
      %v912 = vunpack.c.l.s4 1983009808
      %v913 = vunpack.c.0.s8 %v912
      %v914 = vlaneseq
      %v915 = vshrl.u32 %v914, 7
      %v916 = vsub.s32 %v913, %v915
      %v917 = vrot.slane %v903, %v916
      %v918 = vcombine.low %v910, %v917
      %v919 = vcombine.low %v777, %v779
      %v920 = vcombine.low %v848, %v850
      %v922 = vunpack.c.l.s4 1983009808
      %v923 = vunpack.c.0.s8 %v922
      %v924 = vlaneseq
      %v925 = vshrl.u32 %v924, 7
      %v926 = vsub.s32 %v923, %v925
      %v927 = vrot.slane %v919, %v926
      %v929 = vunpack.c.l.s4 1983009808
      %v930 = vunpack.c.0.s8 %v929
      %v931 = vlaneseq
      %v932 = vshrl.u32 %v931, 7
      %v933 = vsub.s32 %v930, %v932
      %v934 = vrot.slane %v920, %v933
      %v935 = vcombine.low %v927, %v934
      %940 = vst [vmem:[#allocation12] sm:$0xff] %v884
      %941 = vst [vmem:[#allocation12 + $0x8] sm:$0xff] %v901
      %942 = vst [vmem:[#allocation12 + $0x10] sm:$0xff] %v918
      %943 = vst [vmem:[#allocation12 + $0x18] sm:$0xff] %v935
      %v944 = vld [vmem:[#allocation6] sm:$0xff]
      %v945 = vld [vmem:[#allocation6 + $0x8] sm:$0xff]
      %v946 = vld [vmem:[#allocation6 + $0x10] sm:$0xff]
      %v947 = vld [vmem:[#allocation6 + $0x18] sm:$0xff]
      %v948 = vld [vmem:[#allocation6 + $0x20] sm:$0xff]
      %v949 = vld [vmem:[#allocation6 + $0x28] sm:$0xff]
      %v950 = vld [vmem:[#allocation6 + $0x30] sm:$0xff]
      %v951 = vld [vmem:[#allocation6 + $0x38] sm:$0xff]
      %v952 = vld [vmem:[#allocation6 + $0x40] sm:$0xff]
      %v953 = vld [vmem:[#allocation6 + $0x48] sm:$0xff]
      %v954 = vld [vmem:[#allocation6 + $0x50] sm:$0xff]
      %v955 = vld [vmem:[#allocation6 + $0x58] sm:$0xff]
      %v956 = vld [vmem:[#allocation6 + $0x60] sm:$0xff]
      %v957 = vld [vmem:[#allocation6 + $0x68] sm:$0xff]
      %v958 = vld [vmem:[#allocation6 + $0x70] sm:$0xff]
      %v959 = vld [vmem:[#allocation6 + $0x78] sm:$0xff]
      %v960 = vld [vmem:[#allocation6 + $0x80] sm:$0xff]
      %v961 = vld [vmem:[#allocation6 + $0x88] sm:$0xff]
      %v962 = vld [vmem:[#allocation6 + $0x90] sm:$0xff]
      %v963 = vld [vmem:[#allocation6 + $0x98] sm:$0xff]
      %v964 = vld [vmem:[#allocation6 + $0xa0] sm:$0xff]
      %v965 = vld [vmem:[#allocation6 + $0xa8] sm:$0xff]
      %v966 = vld [vmem:[#allocation6 + $0xb0] sm:$0xff]
      %v967 = vld [vmem:[#allocation6 + $0xb8] sm:$0xff]
      %v968 = vld [vmem:[#allocation6 + $0xc0] sm:$0xff]
      %v969 = vld [vmem:[#allocation6 + $0xc8] sm:$0xff]
      %v970 = vld [vmem:[#allocation6 + $0xd0] sm:$0xff]
      %v971 = vld [vmem:[#allocation6 + $0xd8] sm:$0xff]
      %v972 = vld [vmem:[#allocation6 + $0xe0] sm:$0xff]
      %v973 = vld [vmem:[#allocation6 + $0xe8] sm:$0xff]
      %v974 = vld [vmem:[#allocation6 + $0xf0] sm:$0xff]
      %v975 = vld [vmem:[#allocation6 + $0xf8] sm:$0xff]
      %v976 = vld [vmem:[#allocation6 + $0x100] sm:$0xff]
      %v977 = vld [vmem:[#allocation6 + $0x108] sm:$0xff]
      %v978 = vld [vmem:[#allocation6 + $0x110] sm:$0xff]
      %v979 = vld [vmem:[#allocation6 + $0x118] sm:$0xff]
      %v980 = vld [vmem:[#allocation6 + $0x120] sm:$0xff]
      %v981 = vld [vmem:[#allocation6 + $0x128] sm:$0xff]
      %v982 = vld [vmem:[#allocation6 + $0x130] sm:$0xff]
      %v983 = vld [vmem:[#allocation6 + $0x138] sm:$0xff]
      %v984 = vld [vmem:[#allocation6 + $0x140] sm:$0xff]
      %v985 = vld [vmem:[#allocation6 + $0x148] sm:$0xff]
      %v986 = vld [vmem:[#allocation6 + $0x150] sm:$0xff]
      %v987 = vld [vmem:[#allocation6 + $0x158] sm:$0xff]
      %v988 = vld [vmem:[#allocation6 + $0x160] sm:$0xff]
      %v989 = vld [vmem:[#allocation6 + $0x168] sm:$0xff]
      %v990 = vld [vmem:[#allocation6 + $0x170] sm:$0xff]
      %v991 = vld [vmem:[#allocation6 + $0x178] sm:$0xff]
      %v992 = vld [vmem:[#allocation6 + $0x180] sm:$0xff]
      %v993 = vld [vmem:[#allocation6 + $0x188] sm:$0xff]
      %v994 = vld [vmem:[#allocation6 + $0x190] sm:$0xff]
      %v995 = vld [vmem:[#allocation6 + $0x198] sm:$0xff]
      %v996 = vld [vmem:[#allocation6 + $0x1a0] sm:$0xff]
      %v997 = vld [vmem:[#allocation6 + $0x1a8] sm:$0xff]
      %v998 = vld [vmem:[#allocation6 + $0x1b0] sm:$0xff]
      %v999 = vld [vmem:[#allocation6 + $0x1b8] sm:$0xff]
      %v1000 = vld [vmem:[#allocation6 + $0x1c0] sm:$0xff]
      %v1001 = vld [vmem:[#allocation6 + $0x1c8] sm:$0xff]
      %v1002 = vld [vmem:[#allocation6 + $0x1d0] sm:$0xff]
      %v1003 = vld [vmem:[#allocation6 + $0x1d8] sm:$0xff]
      %v1004 = vld [vmem:[#allocation6 + $0x1e0] sm:$0xff]
      %v1005 = vld [vmem:[#allocation6 + $0x1e8] sm:$0xff]
      %v1006 = vld [vmem:[#allocation6 + $0x1f0] sm:$0xff]
      %v1007 = vld [vmem:[#allocation6 + $0x1f8] sm:$0xff]
      %v1008 = vld [vmem:[#allocation6 + $0x200] sm:$0xff]
      %v1009 = vld [vmem:[#allocation6 + $0x208] sm:$0xff]
      %v1010 = vld [vmem:[#allocation6 + $0x210] sm:$0xff]
      %v1011 = vld [vmem:[#allocation6 + $0x218] sm:$0xff]
      %v1012 = vld [vmem:[#allocation6 + $0x220] sm:$0xff]
      %v1013 = vld [vmem:[#allocation6 + $0x228] sm:$0xff]
      %v1014 = vld [vmem:[#allocation6 + $0x230] sm:$0xff]
      %v1015 = vld [vmem:[#allocation6 + $0x238] sm:$0xff]
      %v1016 = vld [vmem:[#allocation6 + $0x240] sm:$0xff]
      %v1017 = vld [vmem:[#allocation6 + $0x248] sm:$0xff]
      %v1018 = vld [vmem:[#allocation6 + $0x250] sm:$0xff]
      %v1019 = vld [vmem:[#allocation6 + $0x258] sm:$0xff]
      %v1020 = vld [vmem:[#allocation6 + $0x260] sm:$0xff]
      %v1021 = vld [vmem:[#allocation6 + $0x268] sm:$0xff]
      %v1022 = vld [vmem:[#allocation6 + $0x270] sm:$0xff]
      %v1023 = vld [vmem:[#allocation6 + $0x278] sm:$0xff]
      %v1024 = vld [vmem:[#allocation6 + $0x280] sm:$0xff]
      %v1025 = vld [vmem:[#allocation6 + $0x288] sm:$0xff]
      %v1026 = vld [vmem:[#allocation6 + $0x290] sm:$0xff]
      %v1027 = vld [vmem:[#allocation6 + $0x298] sm:$0xff]
      %v1028 = vld [vmem:[#allocation6 + $0x2a0] sm:$0xff]
      %v1029 = vld [vmem:[#allocation6 + $0x2a8] sm:$0xff]
      %v1030 = vld [vmem:[#allocation6 + $0x2b0] sm:$0xff]
      %v1031 = vld [vmem:[#allocation6 + $0x2b8] sm:$0xff]
      %v1032 = vld [vmem:[#allocation6 + $0x2c0] sm:$0xff]
      %v1033 = vld [vmem:[#allocation6 + $0x2c8] sm:$0xff]
      %v1034 = vld [vmem:[#allocation6 + $0x2d0] sm:$0xff]
      %v1035 = vld [vmem:[#allocation6 + $0x2d8] sm:$0xff]
      %v1036 = vld [vmem:[#allocation6 + $0x2e0] sm:$0xff]
      %v1037 = vld [vmem:[#allocation6 + $0x2e8] sm:$0xff]
      %v1038 = vld [vmem:[#allocation6 + $0x2f0] sm:$0xff]
      %v1039 = vld [vmem:[#allocation6 + $0x2f8] sm:$0xff]
      %v1040 = vld [vmem:[#allocation6 + $0x300] sm:$0xff]
      %v1041 = vld [vmem:[#allocation6 + $0x308] sm:$0xff]
      %v1042 = vld [vmem:[#allocation6 + $0x310] sm:$0xff]
      %v1043 = vld [vmem:[#allocation6 + $0x318] sm:$0xff]
      %v1044 = vld [vmem:[#allocation6 + $0x320] sm:$0xff]
      %v1045 = vld [vmem:[#allocation6 + $0x328] sm:$0xff]
      %v1046 = vld [vmem:[#allocation6 + $0x330] sm:$0xff]
      %v1047 = vld [vmem:[#allocation6 + $0x338] sm:$0xff]
      %v1048 = vld [vmem:[#allocation6 + $0x340] sm:$0xff]
      %v1049 = vld [vmem:[#allocation6 + $0x348] sm:$0xff]
      %v1050 = vld [vmem:[#allocation6 + $0x350] sm:$0xff]
      %v1051 = vld [vmem:[#allocation6 + $0x358] sm:$0xff]
      %v1052 = vld [vmem:[#allocation6 + $0x360] sm:$0xff]
      %v1053 = vld [vmem:[#allocation6 + $0x368] sm:$0xff]
      %v1054 = vld [vmem:[#allocation6 + $0x370] sm:$0xff]
      %v1055 = vld [vmem:[#allocation6 + $0x378] sm:$0xff]
      %v1056 = vld [vmem:[#allocation6 + $0x380] sm:$0xff]
      %v1057 = vld [vmem:[#allocation6 + $0x388] sm:$0xff]
      %v1058 = vld [vmem:[#allocation6 + $0x390] sm:$0xff]
      %v1059 = vld [vmem:[#allocation6 + $0x398] sm:$0xff]
      %v1060 = vld [vmem:[#allocation6 + $0x3a0] sm:$0xff]
      %v1061 = vld [vmem:[#allocation6 + $0x3a8] sm:$0xff]
      %v1062 = vld [vmem:[#allocation6 + $0x3b0] sm:$0xff]
      %v1063 = vld [vmem:[#allocation6 + $0x3b8] sm:$0xff]
      %v1064 = vld [vmem:[#allocation6 + $0x3c0] sm:$0xff]
      %v1065 = vld [vmem:[#allocation6 + $0x3c8] sm:$0xff]
      %v1066 = vld [vmem:[#allocation6 + $0x3d0] sm:$0xff]
      %v1067 = vld [vmem:[#allocation6 + $0x3d8] sm:$0xff]
      %v1068 = vld [vmem:[#allocation6 + $0x3e0] sm:$0xff]
      %v1069 = vld [vmem:[#allocation6 + $0x3e8] sm:$0xff]
      %v1070 = vld [vmem:[#allocation6 + $0x3f0] sm:$0xff]
      %v1071 = vld [vmem:[#allocation6 + $0x3f8] sm:$0xff]
      %v1072 = vld [vmem:[#allocation6 + $0x400] sm:$0xff]
      %v1073 = vld [vmem:[#allocation6 + $0x408] sm:$0xff]
      %v1074 = vld [vmem:[#allocation6 + $0x410] sm:$0xff]
      %v1075 = vld [vmem:[#allocation6 + $0x418] sm:$0xff]
      %v1076 = vld [vmem:[#allocation6 + $0x420] sm:$0xff]
      %v1077 = vld [vmem:[#allocation6 + $0x428] sm:$0xff]
      %v1078 = vld [vmem:[#allocation6 + $0x430] sm:$0xff]
      %v1079 = vld [vmem:[#allocation6 + $0x438] sm:$0xff]
      %v1080 = vld [vmem:[#allocation6 + $0x440] sm:$0xff]
      %v1081 = vld [vmem:[#allocation6 + $0x448] sm:$0xff]
      %v1082 = vld [vmem:[#allocation6 + $0x450] sm:$0xff]
      %v1083 = vld [vmem:[#allocation6 + $0x458] sm:$0xff]
      %v1084 = vld [vmem:[#allocation6 + $0x460] sm:$0xff]
      %v1085 = vld [vmem:[#allocation6 + $0x468] sm:$0xff]
      %v1086 = vld [vmem:[#allocation6 + $0x470] sm:$0xff]
      %v1087 = vld [vmem:[#allocation6 + $0x478] sm:$0xff]
      %v1088 = vld [vmem:[#allocation6 + $0x480] sm:$0xff]
      %v1089 = vld [vmem:[#allocation6 + $0x488] sm:$0xff]
      %v1090 = vld [vmem:[#allocation6 + $0x490] sm:$0xff]
      %v1091 = vld [vmem:[#allocation6 + $0x498] sm:$0xff]
      %v1092 = vld [vmem:[#allocation6 + $0x4a0] sm:$0xff]
      %v1093 = vld [vmem:[#allocation6 + $0x4a8] sm:$0xff]
      %v1094 = vld [vmem:[#allocation6 + $0x4b0] sm:$0xff]
      %v1095 = vld [vmem:[#allocation6 + $0x4b8] sm:$0xff]
      %v1096 = vld [vmem:[#allocation6 + $0x4c0] sm:$0xff]
      %v1097 = vld [vmem:[#allocation6 + $0x4c8] sm:$0xff]
      %v1098 = vld [vmem:[#allocation6 + $0x4d0] sm:$0xff]
      %v1099 = vld [vmem:[#allocation6 + $0x4d8] sm:$0xff]
      %v1100 = vld [vmem:[#allocation6 + $0x4e0] sm:$0xff]
      %v1101 = vld [vmem:[#allocation6 + $0x4e8] sm:$0xff]
      %v1102 = vld [vmem:[#allocation6 + $0x4f0] sm:$0xff]
      %v1103 = vld [vmem:[#allocation6 + $0x4f8] sm:$0xff]
      %v1104 = vld [vmem:[#allocation6 + $0x500] sm:$0xff]
      %v1105 = vld [vmem:[#allocation6 + $0x508] sm:$0xff]
      %v1106 = vld [vmem:[#allocation6 + $0x510] sm:$0xff]
      %v1107 = vld [vmem:[#allocation6 + $0x518] sm:$0xff]
      %v1108 = vld [vmem:[#allocation6 + $0x520] sm:$0xff]
      %v1109 = vld [vmem:[#allocation6 + $0x528] sm:$0xff]
      %v1110 = vld [vmem:[#allocation6 + $0x530] sm:$0xff]
      %v1111 = vld [vmem:[#allocation6 + $0x538] sm:$0xff]
      %v1112 = vld [vmem:[#allocation6 + $0x540] sm:$0xff]
      %v1113 = vld [vmem:[#allocation6 + $0x548] sm:$0xff]
      %v1114 = vld [vmem:[#allocation6 + $0x550] sm:$0xff]
      %v1115 = vld [vmem:[#allocation6 + $0x558] sm:$0xff]
      %v1116 = vld [vmem:[#allocation6 + $0x560] sm:$0xff]
      %v1117 = vld [vmem:[#allocation6 + $0x568] sm:$0xff]
      %v1118 = vld [vmem:[#allocation6 + $0x570] sm:$0xff]
      %v1119 = vld [vmem:[#allocation6 + $0x578] sm:$0xff]
      %v1120 = vld [vmem:[#allocation6 + $0x580] sm:$0xff]
      %v1121 = vld [vmem:[#allocation6 + $0x588] sm:$0xff]
      %v1122 = vld [vmem:[#allocation6 + $0x590] sm:$0xff]
      %v1123 = vld [vmem:[#allocation6 + $0x598] sm:$0xff]
      %v1124 = vld [vmem:[#allocation6 + $0x5a0] sm:$0xff]
      %v1125 = vld [vmem:[#allocation6 + $0x5a8] sm:$0xff]
      %v1126 = vld [vmem:[#allocation6 + $0x5b0] sm:$0xff]
      %v1127 = vld [vmem:[#allocation6 + $0x5b8] sm:$0xff]
      %v1128 = vld [vmem:[#allocation6 + $0x5c0] sm:$0xff]
      %v1129 = vld [vmem:[#allocation6 + $0x5c8] sm:$0xff]
      %v1130 = vld [vmem:[#allocation6 + $0x5d0] sm:$0xff]
      %v1131 = vld [vmem:[#allocation6 + $0x5d8] sm:$0xff]
      %v1132 = vld [vmem:[#allocation6 + $0x5e0] sm:$0xff]
      %v1133 = vld [vmem:[#allocation6 + $0x5e8] sm:$0xff]
      %v1134 = vld [vmem:[#allocation6 + $0x5f0] sm:$0xff]
      %v1135 = vld [vmem:[#allocation6 + $0x5f8] sm:$0xff]
      %v1136 = vld [vmem:[#allocation6 + $0x600] sm:$0xff]
      %v1137 = vld [vmem:[#allocation6 + $0x608] sm:$0xff]
      %v1138 = vld [vmem:[#allocation6 + $0x610] sm:$0xff]
      %v1139 = vld [vmem:[#allocation6 + $0x618] sm:$0xff]
      %v1140 = vld [vmem:[#allocation6 + $0x620] sm:$0xff]
      %v1141 = vld [vmem:[#allocation6 + $0x628] sm:$0xff]
      %v1142 = vld [vmem:[#allocation6 + $0x630] sm:$0xff]
      %v1143 = vld [vmem:[#allocation6 + $0x638] sm:$0xff]
      %v1144 = vld [vmem:[#allocation6 + $0x640] sm:$0xff]
      %v1145 = vld [vmem:[#allocation6 + $0x648] sm:$0xff]
      %v1146 = vld [vmem:[#allocation6 + $0x650] sm:$0xff]
      %v1147 = vld [vmem:[#allocation6 + $0x658] sm:$0xff]
      %v1148 = vld [vmem:[#allocation6 + $0x660] sm:$0xff]
      %v1149 = vld [vmem:[#allocation6 + $0x668] sm:$0xff]
      %v1150 = vld [vmem:[#allocation6 + $0x670] sm:$0xff]
      %v1151 = vld [vmem:[#allocation6 + $0x678] sm:$0xff]
      %v1152 = vld [vmem:[#allocation6 + $0x680] sm:$0xff]
      %v1153 = vld [vmem:[#allocation6 + $0x688] sm:$0xff]
      %v1154 = vld [vmem:[#allocation6 + $0x690] sm:$0xff]
      %v1155 = vld [vmem:[#allocation6 + $0x698] sm:$0xff]
      %v1156 = vld [vmem:[#allocation6 + $0x6a0] sm:$0xff]
      %v1157 = vld [vmem:[#allocation6 + $0x6a8] sm:$0xff]
      %v1158 = vld [vmem:[#allocation6 + $0x6b0] sm:$0xff]
      %v1159 = vld [vmem:[#allocation6 + $0x6b8] sm:$0xff]
      %v1160 = vld [vmem:[#allocation6 + $0x6c0] sm:$0xff]
      %v1161 = vld [vmem:[#allocation6 + $0x6c8] sm:$0xff]
      %v1162 = vld [vmem:[#allocation6 + $0x6d0] sm:$0xff]
      %v1163 = vld [vmem:[#allocation6 + $0x6d8] sm:$0xff]
      %v1164 = vld [vmem:[#allocation6 + $0x6e0] sm:$0xff]
      %v1165 = vld [vmem:[#allocation6 + $0x6e8] sm:$0xff]
      %v1166 = vld [vmem:[#allocation6 + $0x6f0] sm:$0xff]
      %v1167 = vld [vmem:[#allocation6 + $0x6f8] sm:$0xff]
      %v1168 = vld [vmem:[#allocation6 + $0x700] sm:$0xff]
      %v1169 = vld [vmem:[#allocation6 + $0x708] sm:$0xff]
      %v1170 = vld [vmem:[#allocation6 + $0x710] sm:$0xff]
      %v1171 = vld [vmem:[#allocation6 + $0x718] sm:$0xff]
      %v1172 = vld [vmem:[#allocation6 + $0x720] sm:$0xff]
      %v1173 = vld [vmem:[#allocation6 + $0x728] sm:$0xff]
      %v1174 = vld [vmem:[#allocation6 + $0x730] sm:$0xff]
      %v1175 = vld [vmem:[#allocation6 + $0x738] sm:$0xff]
      %v1176 = vld [vmem:[#allocation6 + $0x740] sm:$0xff]
      %v1177 = vld [vmem:[#allocation6 + $0x748] sm:$0xff]
      %v1178 = vld [vmem:[#allocation6 + $0x750] sm:$0xff]
      %v1179 = vld [vmem:[#allocation6 + $0x758] sm:$0xff]
      %v1180 = vld [vmem:[#allocation6 + $0x760] sm:$0xff]
      %v1181 = vld [vmem:[#allocation6 + $0x768] sm:$0xff]
      %v1182 = vld [vmem:[#allocation6 + $0x770] sm:$0xff]
      %v1183 = vld [vmem:[#allocation6 + $0x778] sm:$0xff]
      %v1184 = vld [vmem:[#allocation6 + $0x780] sm:$0xff]
      %v1185 = vld [vmem:[#allocation6 + $0x788] sm:$0xff]
      %v1186 = vld [vmem:[#allocation6 + $0x790] sm:$0xff]
      %v1187 = vld [vmem:[#allocation6 + $0x798] sm:$0xff]
      %v1188 = vld [vmem:[#allocation6 + $0x7a0] sm:$0xff]
      %v1189 = vld [vmem:[#allocation6 + $0x7a8] sm:$0xff]
      %v1190 = vld [vmem:[#allocation6 + $0x7b0] sm:$0xff]
      %v1191 = vld [vmem:[#allocation6 + $0x7b8] sm:$0xff]
      %v1192 = vld [vmem:[#allocation6 + $0x7c0] sm:$0xff]
      %v1193 = vld [vmem:[#allocation6 + $0x7c8] sm:$0xff]
      %v1194 = vld [vmem:[#allocation6 + $0x7d0] sm:$0xff]
      %v1195 = vld [vmem:[#allocation6 + $0x7d8] sm:$0xff]
      %v1196 = vld [vmem:[#allocation6 + $0x7e0] sm:$0xff]
      %v1197 = vld [vmem:[#allocation6 + $0x7e8] sm:$0xff]
      %v1198 = vld [vmem:[#allocation6 + $0x7f0] sm:$0xff]
      %v1199 = vld [vmem:[#allocation6 + $0x7f8] sm:$0xff]
      %v1200 = vld [vmem:[#allocation6 + $0x800] sm:$0xff]
      %v1201 = vld [vmem:[#allocation6 + $0x808] sm:$0xff]
      %v1202 = vld [vmem:[#allocation6 + $0x810] sm:$0xff]
      %v1203 = vld [vmem:[#allocation6 + $0x818] sm:$0xff]
      %v1204 = vld [vmem:[#allocation6 + $0x820] sm:$0xff]
      %v1205 = vld [vmem:[#allocation6 + $0x828] sm:$0xff]
      %v1206 = vld [vmem:[#allocation6 + $0x830] sm:$0xff]
      %v1207 = vld [vmem:[#allocation6 + $0x838] sm:$0xff]
      %v1208 = vld [vmem:[#allocation6 + $0x840] sm:$0xff]
      %v1209 = vld [vmem:[#allocation6 + $0x848] sm:$0xff]
      %v1210 = vld [vmem:[#allocation6 + $0x850] sm:$0xff]
      %v1211 = vld [vmem:[#allocation6 + $0x858] sm:$0xff]
      %v1212 = vld [vmem:[#allocation6 + $0x860] sm:$0xff]
      %v1213 = vld [vmem:[#allocation6 + $0x868] sm:$0xff]
      %v1214 = vld [vmem:[#allocation6 + $0x870] sm:$0xff]
      %v1215 = vld [vmem:[#allocation6 + $0x878] sm:$0xff]
      %v1216 = vld [vmem:[#allocation6 + $0x880] sm:$0xff]
      %v1217 = vld [vmem:[#allocation6 + $0x888] sm:$0xff]
      %v1218 = vld [vmem:[#allocation6 + $0x890] sm:$0xff]
      %v1219 = vld [vmem:[#allocation6 + $0x898] sm:$0xff]
      %v1220 = vld [vmem:[#allocation6 + $0x8a0] sm:$0xff]
      %v1221 = vld [vmem:[#allocation6 + $0x8a8] sm:$0xff]
      %v1222 = vld [vmem:[#allocation6 + $0x8b0] sm:$0xff]
      %v1223 = vld [vmem:[#allocation6 + $0x8b8] sm:$0xff]
      %v1224 = vld [vmem:[#allocation6 + $0x8c0] sm:$0xff]
      %v1225 = vld [vmem:[#allocation6 + $0x8c8] sm:$0xff]
      %v1226 = vld [vmem:[#allocation6 + $0x8d0] sm:$0xff]
      %v1227 = vld [vmem:[#allocation6 + $0x8d8] sm:$0xff]
      %v1228 = vld [vmem:[#allocation6 + $0x8e0] sm:$0xff]
      %v1229 = vld [vmem:[#allocation6 + $0x8e8] sm:$0xff]
      %v1230 = vld [vmem:[#allocation6 + $0x8f0] sm:$0xff]
      %v1231 = vld [vmem:[#allocation6 + $0x8f8] sm:$0xff]
      %v1232 = vld [vmem:[#allocation6 + $0x900] sm:$0xff]
      %v1233 = vld [vmem:[#allocation6 + $0x908] sm:$0xff]
      %v1234 = vld [vmem:[#allocation6 + $0x910] sm:$0xff]
      %v1235 = vld [vmem:[#allocation6 + $0x918] sm:$0xff]
      %v1236 = vld [vmem:[#allocation6 + $0x920] sm:$0xff]
      %v1237 = vld [vmem:[#allocation6 + $0x928] sm:$0xff]
      %v1238 = vld [vmem:[#allocation6 + $0x930] sm:$0xff]
      %v1239 = vld [vmem:[#allocation6 + $0x938] sm:$0xff]
      %v1240 = vld [vmem:[#allocation6 + $0x940] sm:$0xff]
      %v1241 = vld [vmem:[#allocation6 + $0x948] sm:$0xff]
      %v1242 = vld [vmem:[#allocation6 + $0x950] sm:$0xff]
      %v1243 = vld [vmem:[#allocation6 + $0x958] sm:$0xff]
      %v1244 = vld [vmem:[#allocation6 + $0x960] sm:$0xff]
      %v1245 = vld [vmem:[#allocation6 + $0x968] sm:$0xff]
      %v1246 = vld [vmem:[#allocation6 + $0x970] sm:$0xff]
      %v1247 = vld [vmem:[#allocation6 + $0x978] sm:$0xff]
      %v1248 = vld [vmem:[#allocation6 + $0x980] sm:$0xff]
      %v1249 = vld [vmem:[#allocation6 + $0x988] sm:$0xff]
      %v1250 = vld [vmem:[#allocation6 + $0x990] sm:$0xff]
      %v1251 = vld [vmem:[#allocation6 + $0x998] sm:$0xff]
      %v1252 = vld [vmem:[#allocation6 + $0x9a0] sm:$0xff]
      %v1253 = vld [vmem:[#allocation6 + $0x9a8] sm:$0xff]
      %v1254 = vld [vmem:[#allocation6 + $0x9b0] sm:$0xff]
      %v1255 = vld [vmem:[#allocation6 + $0x9b8] sm:$0xff]
      %v1256 = vld [vmem:[#allocation6 + $0x9c0] sm:$0xff]
      %v1257 = vld [vmem:[#allocation6 + $0x9c8] sm:$0xff]
      %v1258 = vld [vmem:[#allocation6 + $0x9d0] sm:$0xff]
      %v1259 = vld [vmem:[#allocation6 + $0x9d8] sm:$0xff]
      %v1260 = vld [vmem:[#allocation6 + $0x9e0] sm:$0xff]
      %v1261 = vld [vmem:[#allocation6 + $0x9e8] sm:$0xff]
      %v1262 = vld [vmem:[#allocation6 + $0x9f0] sm:$0xff]
      %v1263 = vld [vmem:[#allocation6 + $0x9f8] sm:$0xff]
      %v1264 = vld [vmem:[#allocation6 + $0xa00] sm:$0xff]
      %v1265 = vld [vmem:[#allocation6 + $0xa08] sm:$0xff]
      %v1266 = vld [vmem:[#allocation6 + $0xa10] sm:$0xff]
      %v1267 = vld [vmem:[#allocation6 + $0xa18] sm:$0xff]
      %v1268 = vld [vmem:[#allocation6 + $0xa20] sm:$0xff]
      %v1269 = vld [vmem:[#allocation6 + $0xa28] sm:$0xff]
      %v1270 = vld [vmem:[#allocation6 + $0xa30] sm:$0xff]
      %v1271 = vld [vmem:[#allocation6 + $0xa38] sm:$0xff]
      %v1272 = vld [vmem:[#allocation6 + $0xa40] sm:$0xff]
      %v1273 = vld [vmem:[#allocation6 + $0xa48] sm:$0xff]
      %v1274 = vld [vmem:[#allocation6 + $0xa50] sm:$0xff]
      %v1275 = vld [vmem:[#allocation6 + $0xa58] sm:$0xff]
      %v1276 = vld [vmem:[#allocation6 + $0xa60] sm:$0xff]
      %v1277 = vld [vmem:[#allocation6 + $0xa68] sm:$0xff]
      %v1278 = vld [vmem:[#allocation6 + $0xa70] sm:$0xff]
      %v1279 = vld [vmem:[#allocation6 + $0xa78] sm:$0xff]
      %v1280 = vld [vmem:[#allocation6 + $0xa80] sm:$0xff]
      %v1281 = vld [vmem:[#allocation6 + $0xa88] sm:$0xff]
      %v1282 = vld [vmem:[#allocation6 + $0xa90] sm:$0xff]
      %v1283 = vld [vmem:[#allocation6 + $0xa98] sm:$0xff]
      %v1284 = vld [vmem:[#allocation6 + $0xaa0] sm:$0xff]
      %v1285 = vld [vmem:[#allocation6 + $0xaa8] sm:$0xff]
      %v1286 = vld [vmem:[#allocation6 + $0xab0] sm:$0xff]
      %v1287 = vld [vmem:[#allocation6 + $0xab8] sm:$0xff]
      %v1288 = vld [vmem:[#allocation6 + $0xac0] sm:$0xff]
      %v1289 = vld [vmem:[#allocation6 + $0xac8] sm:$0xff]
      %v1290 = vld [vmem:[#allocation6 + $0xad0] sm:$0xff]
      %v1291 = vld [vmem:[#allocation6 + $0xad8] sm:$0xff]
      %v1292 = vld [vmem:[#allocation6 + $0xae0] sm:$0xff]
      %v1293 = vld [vmem:[#allocation6 + $0xae8] sm:$0xff]
      %v1294 = vld [vmem:[#allocation6 + $0xaf0] sm:$0xff]
      %v1295 = vld [vmem:[#allocation6 + $0xaf8] sm:$0xff]
      %v1296 = vld [vmem:[#allocation6 + $0xb00] sm:$0xff]
      %v1297 = vld [vmem:[#allocation6 + $0xb08] sm:$0xff]
      %v1298 = vld [vmem:[#allocation6 + $0xb10] sm:$0xff]
      %v1299 = vld [vmem:[#allocation6 + $0xb18] sm:$0xff]
      %v1300 = vld [vmem:[#allocation6 + $0xb20] sm:$0xff]
      %v1301 = vld [vmem:[#allocation6 + $0xb28] sm:$0xff]
      %v1302 = vld [vmem:[#allocation6 + $0xb30] sm:$0xff]
      %v1303 = vld [vmem:[#allocation6 + $0xb38] sm:$0xff]
      %v1304 = vld [vmem:[#allocation6 + $0xb40] sm:$0xff]
      %v1305 = vld [vmem:[#allocation6 + $0xb48] sm:$0xff]
      %v1306 = vld [vmem:[#allocation6 + $0xb50] sm:$0xff]
      %v1307 = vld [vmem:[#allocation6 + $0xb58] sm:$0xff]
      %v1308 = vld [vmem:[#allocation6 + $0xb60] sm:$0xff]
      %v1309 = vld [vmem:[#allocation6 + $0xb68] sm:$0xff]
      %v1310 = vld [vmem:[#allocation6 + $0xb70] sm:$0xff]
      %v1311 = vld [vmem:[#allocation6 + $0xb78] sm:$0xff]
      %v1312 = vld [vmem:[#allocation6 + $0xb80] sm:$0xff]
      %v1313 = vld [vmem:[#allocation6 + $0xb88] sm:$0xff]
      %v1314 = vld [vmem:[#allocation6 + $0xb90] sm:$0xff]
      %v1315 = vld [vmem:[#allocation6 + $0xb98] sm:$0xff]
      %v1316 = vld [vmem:[#allocation6 + $0xba0] sm:$0xff]
      %v1317 = vld [vmem:[#allocation6 + $0xba8] sm:$0xff]
      %v1318 = vld [vmem:[#allocation6 + $0xbb0] sm:$0xff]
      %v1319 = vld [vmem:[#allocation6 + $0xbb8] sm:$0xff]
      %v1320 = vld [vmem:[#allocation6 + $0xbc0] sm:$0xff]
      %v1321 = vld [vmem:[#allocation6 + $0xbc8] sm:$0xff]
      %v1322 = vld [vmem:[#allocation6 + $0xbd0] sm:$0xff]
      %v1323 = vld [vmem:[#allocation6 + $0xbd8] sm:$0xff]
      %v1324 = vld [vmem:[#allocation6 + $0xbe0] sm:$0xff]
      %v1325 = vld [vmem:[#allocation6 + $0xbe8] sm:$0xff]
      %v1326 = vld [vmem:[#allocation6 + $0xbf0] sm:$0xff]
      %v1327 = vld [vmem:[#allocation6 + $0xbf8] sm:$0xff]
      %v1328 = vld [vmem:[#allocation6 + $0xc00] sm:$0xff]
      %v1329 = vld [vmem:[#allocation6 + $0xc08] sm:$0xff]
      %v1330 = vld [vmem:[#allocation6 + $0xc10] sm:$0xff]
      %v1331 = vld [vmem:[#allocation6 + $0xc18] sm:$0xff]
      %v1332 = vld [vmem:[#allocation6 + $0xc20] sm:$0xff]
      %v1333 = vld [vmem:[#allocation6 + $0xc28] sm:$0xff]
      %v1334 = vld [vmem:[#allocation6 + $0xc30] sm:$0xff]
      %v1335 = vld [vmem:[#allocation6 + $0xc38] sm:$0xff]
      %v1336 = vld [vmem:[#allocation6 + $0xc40] sm:$0xff]
      %v1337 = vld [vmem:[#allocation6 + $0xc48] sm:$0xff]
      %v1338 = vld [vmem:[#allocation6 + $0xc50] sm:$0xff]
      %v1339 = vld [vmem:[#allocation6 + $0xc58] sm:$0xff]
      %v1340 = vld [vmem:[#allocation6 + $0xc60] sm:$0xff]
      %v1341 = vld [vmem:[#allocation6 + $0xc68] sm:$0xff]
      %v1342 = vld [vmem:[#allocation6 + $0xc70] sm:$0xff]
      %v1343 = vld [vmem:[#allocation6 + $0xc78] sm:$0xff]
      %v1344 = vld [vmem:[#allocation6 + $0xc80] sm:$0xff]
      %v1345 = vld [vmem:[#allocation6 + $0xc88] sm:$0xff]
      %v1346 = vld [vmem:[#allocation6 + $0xc90] sm:$0xff]
      %v1347 = vld [vmem:[#allocation6 + $0xc98] sm:$0xff]
      %v1348 = vld [vmem:[#allocation6 + $0xca0] sm:$0xff]
      %v1349 = vld [vmem:[#allocation6 + $0xca8] sm:$0xff]
      %v1350 = vld [vmem:[#allocation6 + $0xcb0] sm:$0xff]
      %v1351 = vld [vmem:[#allocation6 + $0xcb8] sm:$0xff]
      %v1352 = vld [vmem:[#allocation6 + $0xcc0] sm:$0xff]
      %v1353 = vld [vmem:[#allocation6 + $0xcc8] sm:$0xff]
      %v1354 = vld [vmem:[#allocation6 + $0xcd0] sm:$0xff]
      %v1355 = vld [vmem:[#allocation6 + $0xcd8] sm:$0xff]
      %v1356 = vld [vmem:[#allocation6 + $0xce0] sm:$0xff]
      %v1357 = vld [vmem:[#allocation6 + $0xce8] sm:$0xff]
      %v1358 = vld [vmem:[#allocation6 + $0xcf0] sm:$0xff]
      %v1359 = vld [vmem:[#allocation6 + $0xcf8] sm:$0xff]
      %v1360 = vld [vmem:[#allocation6 + $0xd00] sm:$0xff]
      %v1361 = vld [vmem:[#allocation6 + $0xd08] sm:$0xff]
      %v1362 = vld [vmem:[#allocation6 + $0xd10] sm:$0xff]
      %v1363 = vld [vmem:[#allocation6 + $0xd18] sm:$0xff]
      %v1364 = vld [vmem:[#allocation6 + $0xd20] sm:$0xff]
      %v1365 = vld [vmem:[#allocation6 + $0xd28] sm:$0xff]
      %v1366 = vld [vmem:[#allocation6 + $0xd30] sm:$0xff]
      %v1367 = vld [vmem:[#allocation6 + $0xd38] sm:$0xff]
      %v1368 = vld [vmem:[#allocation6 + $0xd40] sm:$0xff]
      %v1369 = vld [vmem:[#allocation6 + $0xd48] sm:$0xff]
      %v1370 = vld [vmem:[#allocation6 + $0xd50] sm:$0xff]
      %v1371 = vld [vmem:[#allocation6 + $0xd58] sm:$0xff]
      %v1372 = vld [vmem:[#allocation6 + $0xd60] sm:$0xff]
      %v1373 = vld [vmem:[#allocation6 + $0xd68] sm:$0xff]
      %v1374 = vld [vmem:[#allocation6 + $0xd70] sm:$0xff]
      %v1375 = vld [vmem:[#allocation6 + $0xd78] sm:$0xff]
      %v1376 = vld [vmem:[#allocation6 + $0xd80] sm:$0xff]
      %v1377 = vld [vmem:[#allocation6 + $0xd88] sm:$0xff]
      %v1378 = vld [vmem:[#allocation6 + $0xd90] sm:$0xff]
      %v1379 = vld [vmem:[#allocation6 + $0xd98] sm:$0xff]
      %v1380 = vld [vmem:[#allocation6 + $0xda0] sm:$0xff]
      %v1381 = vld [vmem:[#allocation6 + $0xda8] sm:$0xff]
      %v1382 = vld [vmem:[#allocation6 + $0xdb0] sm:$0xff]
      %v1383 = vld [vmem:[#allocation6 + $0xdb8] sm:$0xff]
      %v1384 = vld [vmem:[#allocation6 + $0xdc0] sm:$0xff]
      %v1385 = vld [vmem:[#allocation6 + $0xdc8] sm:$0xff]
      %v1386 = vld [vmem:[#allocation6 + $0xdd0] sm:$0xff]
      %v1387 = vld [vmem:[#allocation6 + $0xdd8] sm:$0xff]
      %v1388 = vld [vmem:[#allocation6 + $0xde0] sm:$0xff]
      %v1389 = vld [vmem:[#allocation6 + $0xde8] sm:$0xff]
      %v1390 = vld [vmem:[#allocation6 + $0xdf0] sm:$0xff]
      %v1391 = vld [vmem:[#allocation6 + $0xdf8] sm:$0xff]
      %v1392 = vld [vmem:[#allocation6 + $0xe00] sm:$0xff]
      %v1393 = vld [vmem:[#allocation6 + $0xe08] sm:$0xff]
      %v1394 = vld [vmem:[#allocation6 + $0xe10] sm:$0xff]
      %v1395 = vld [vmem:[#allocation6 + $0xe18] sm:$0xff]
      %v1396 = vld [vmem:[#allocation6 + $0xe20] sm:$0xff]
      %v1397 = vld [vmem:[#allocation6 + $0xe28] sm:$0xff]
      %v1398 = vld [vmem:[#allocation6 + $0xe30] sm:$0xff]
      %v1399 = vld [vmem:[#allocation6 + $0xe38] sm:$0xff]
      %v1400 = vld [vmem:[#allocation6 + $0xe40] sm:$0xff]
      %v1401 = vld [vmem:[#allocation6 + $0xe48] sm:$0xff]
      %v1402 = vld [vmem:[#allocation6 + $0xe50] sm:$0xff]
      %v1403 = vld [vmem:[#allocation6 + $0xe58] sm:$0xff]
      %v1404 = vld [vmem:[#allocation6 + $0xe60] sm:$0xff]
      %v1405 = vld [vmem:[#allocation6 + $0xe68] sm:$0xff]
      %v1406 = vld [vmem:[#allocation6 + $0xe70] sm:$0xff]
      %v1407 = vld [vmem:[#allocation6 + $0xe78] sm:$0xff]
      %v1408 = vld [vmem:[#allocation6 + $0xe80] sm:$0xff]
      %v1409 = vld [vmem:[#allocation6 + $0xe88] sm:$0xff]
      %v1410 = vld [vmem:[#allocation6 + $0xe90] sm:$0xff]
      %v1411 = vld [vmem:[#allocation6 + $0xe98] sm:$0xff]
      %v1412 = vld [vmem:[#allocation6 + $0xea0] sm:$0xff]
      %v1413 = vld [vmem:[#allocation6 + $0xea8] sm:$0xff]
      %v1414 = vld [vmem:[#allocation6 + $0xeb0] sm:$0xff]
      %v1415 = vld [vmem:[#allocation6 + $0xeb8] sm:$0xff]
      %v1416 = vld [vmem:[#allocation6 + $0xec0] sm:$0xff]
      %v1417 = vld [vmem:[#allocation6 + $0xec8] sm:$0xff]
      %v1418 = vld [vmem:[#allocation6 + $0xed0] sm:$0xff]
      %v1419 = vld [vmem:[#allocation6 + $0xed8] sm:$0xff]
      %v1420 = vld [vmem:[#allocation6 + $0xee0] sm:$0xff]
      %v1421 = vld [vmem:[#allocation6 + $0xee8] sm:$0xff]
      %v1422 = vld [vmem:[#allocation6 + $0xef0] sm:$0xff]
      %v1423 = vld [vmem:[#allocation6 + $0xef8] sm:$0xff]
      %v1424 = vld [vmem:[#allocation6 + $0xf00] sm:$0xff]
      %v1425 = vld [vmem:[#allocation6 + $0xf08] sm:$0xff]
      %v1426 = vld [vmem:[#allocation6 + $0xf10] sm:$0xff]
      %v1427 = vld [vmem:[#allocation6 + $0xf18] sm:$0xff]
      %v1428 = vld [vmem:[#allocation6 + $0xf20] sm:$0xff]
      %v1429 = vld [vmem:[#allocation6 + $0xf28] sm:$0xff]
      %v1430 = vld [vmem:[#allocation6 + $0xf30] sm:$0xff]
      %v1431 = vld [vmem:[#allocation6 + $0xf38] sm:$0xff]
      %v1432 = vld [vmem:[#allocation6 + $0xf40] sm:$0xff]
      %v1433 = vld [vmem:[#allocation6 + $0xf48] sm:$0xff]
      %v1434 = vld [vmem:[#allocation6 + $0xf50] sm:$0xff]
      %v1435 = vld [vmem:[#allocation6 + $0xf58] sm:$0xff]
      %v1436 = vld [vmem:[#allocation6 + $0xf60] sm:$0xff]
      %v1437 = vld [vmem:[#allocation6 + $0xf68] sm:$0xff]
      %v1438 = vld [vmem:[#allocation6 + $0xf70] sm:$0xff]
      %v1439 = vld [vmem:[#allocation6 + $0xf78] sm:$0xff]
      %v1440 = vld [vmem:[#allocation6 + $0xf80] sm:$0xff]
      %v1441 = vld [vmem:[#allocation6 + $0xf88] sm:$0xff]
      %v1442 = vld [vmem:[#allocation6 + $0xf90] sm:$0xff]
      %v1443 = vld [vmem:[#allocation6 + $0xf98] sm:$0xff]
      %v1444 = vld [vmem:[#allocation6 + $0xfa0] sm:$0xff]
      %v1445 = vld [vmem:[#allocation6 + $0xfa8] sm:$0xff]
      %v1446 = vld [vmem:[#allocation6 + $0xfb0] sm:$0xff]
      %v1447 = vld [vmem:[#allocation6 + $0xfb8] sm:$0xff]
      %v1448 = vld [vmem:[#allocation6 + $0xfc0] sm:$0xff]
      %v1449 = vld [vmem:[#allocation6 + $0xfc8] sm:$0xff]
      %v1450 = vld [vmem:[#allocation6 + $0xfd0] sm:$0xff]
      %v1451 = vld [vmem:[#allocation6 + $0xfd8] sm:$0xff]
      %v1452 = vld [vmem:[#allocation6 + $0xfe0] sm:$0xff]
      %v1453 = vld [vmem:[#allocation6 + $0xfe8] sm:$0xff]
      %v1454 = vld [vmem:[#allocation6 + $0xff0] sm:$0xff]
      %v1455 = vld [vmem:[#allocation6 + $0xff8] sm:$0xff]
      %v1456 = vld [vmem:[#allocation6 + $0x1000] sm:$0xff]
      %v1457 = vld [vmem:[#allocation6 + $0x1008] sm:$0xff]
      %v1458 = vld [vmem:[#allocation6 + $0x1010] sm:$0xff]
      %v1459 = vld [vmem:[#allocation6 + $0x1018] sm:$0xff]
      %v1460 = vld [vmem:[#allocation6 + $0x1020] sm:$0xff]
      %v1461 = vld [vmem:[#allocation6 + $0x1028] sm:$0xff]
      %v1462 = vld [vmem:[#allocation6 + $0x1030] sm:$0xff]
      %v1463 = vld [vmem:[#allocation6 + $0x1038] sm:$0xff]
      %v1464 = vld [vmem:[#allocation6 + $0x1040] sm:$0xff]
      %v1465 = vld [vmem:[#allocation6 + $0x1048] sm:$0xff]
      %v1466 = vld [vmem:[#allocation6 + $0x1050] sm:$0xff]
      %v1467 = vld [vmem:[#allocation6 + $0x1058] sm:$0xff]
      %v1468 = vld [vmem:[#allocation6 + $0x1060] sm:$0xff]
      %v1469 = vld [vmem:[#allocation6 + $0x1068] sm:$0xff]
      %v1470 = vld [vmem:[#allocation6 + $0x1070] sm:$0xff]
      %v1471 = vld [vmem:[#allocation6 + $0x1078] sm:$0xff]
      %v1472 = vld [vmem:[#allocation6 + $0x1080] sm:$0xff]
      %v1473 = vld [vmem:[#allocation6 + $0x1088] sm:$0xff]
      %v1474 = vld [vmem:[#allocation6 + $0x1090] sm:$0xff]
      %v1475 = vld [vmem:[#allocation6 + $0x1098] sm:$0xff]
      %v1476 = vld [vmem:[#allocation6 + $0x10a0] sm:$0xff]
      %v1477 = vld [vmem:[#allocation6 + $0x10a8] sm:$0xff]
      %v1478 = vld [vmem:[#allocation6 + $0x10b0] sm:$0xff]
      %v1479 = vld [vmem:[#allocation6 + $0x10b8] sm:$0xff]
      %v1480 = vld [vmem:[#allocation6 + $0x10c0] sm:$0xff]
      %v1481 = vld [vmem:[#allocation6 + $0x10c8] sm:$0xff]
      %v1482 = vld [vmem:[#allocation6 + $0x10d0] sm:$0xff]
      %v1483 = vld [vmem:[#allocation6 + $0x10d8] sm:$0xff]
      %v1484 = vld [vmem:[#allocation6 + $0x10e0] sm:$0xff]
      %v1485 = vld [vmem:[#allocation6 + $0x10e8] sm:$0xff]
      %v1486 = vld [vmem:[#allocation6 + $0x10f0] sm:$0xff]
      %v1487 = vld [vmem:[#allocation6 + $0x10f8] sm:$0xff]
      %v1488 = vld [vmem:[#allocation6 + $0x1100] sm:$0xff]
      %v1489 = vld [vmem:[#allocation6 + $0x1108] sm:$0xff]
      %v1490 = vld [vmem:[#allocation6 + $0x1110] sm:$0xff]
      %v1491 = vld [vmem:[#allocation6 + $0x1118] sm:$0xff]
      %v1492 = vld [vmem:[#allocation6 + $0x1120] sm:$0xff]
      %v1493 = vld [vmem:[#allocation6 + $0x1128] sm:$0xff]
      %v1494 = vld [vmem:[#allocation6 + $0x1130] sm:$0xff]
      %v1495 = vld [vmem:[#allocation6 + $0x1138] sm:$0xff]
      %v1496 = vld [vmem:[#allocation6 + $0x1140] sm:$0xff]
      %v1497 = vld [vmem:[#allocation6 + $0x1148] sm:$0xff]
      %v1498 = vld [vmem:[#allocation6 + $0x1150] sm:$0xff]
      %v1499 = vld [vmem:[#allocation6 + $0x1158] sm:$0xff]
      %v1500 = vld [vmem:[#allocation6 + $0x1160] sm:$0xff]
      %v1501 = vld [vmem:[#allocation6 + $0x1168] sm:$0xff]
      %v1502 = vld [vmem:[#allocation6 + $0x1170] sm:$0xff]
      %v1503 = vld [vmem:[#allocation6 + $0x1178] sm:$0xff]
      %v1504 = vld [vmem:[#allocation6 + $0x1180] sm:$0xff]
      %v1505 = vld [vmem:[#allocation6 + $0x1188] sm:$0xff]
      %v1506 = vld [vmem:[#allocation6 + $0x1190] sm:$0xff]
      %v1507 = vld [vmem:[#allocation6 + $0x1198] sm:$0xff]
      %v1508 = vld [vmem:[#allocation6 + $0x11a0] sm:$0xff]
      %v1509 = vld [vmem:[#allocation6 + $0x11a8] sm:$0xff]
      %v1510 = vld [vmem:[#allocation6 + $0x11b0] sm:$0xff]
      %v1511 = vld [vmem:[#allocation6 + $0x11b8] sm:$0xff]
      %v1512 = vld [vmem:[#allocation6 + $0x11c0] sm:$0xff]
      %v1513 = vld [vmem:[#allocation6 + $0x11c8] sm:$0xff]
      %v1514 = vld [vmem:[#allocation6 + $0x11d0] sm:$0xff]
      %v1515 = vld [vmem:[#allocation6 + $0x11d8] sm:$0xff]
      %v1516 = vld [vmem:[#allocation6 + $0x11e0] sm:$0xff]
      %v1517 = vld [vmem:[#allocation6 + $0x11e8] sm:$0xff]
      %v1518 = vld [vmem:[#allocation6 + $0x11f0] sm:$0xff]
      %v1519 = vld [vmem:[#allocation6 + $0x11f8] sm:$0xff]
      %v1520 = vld [vmem:[#allocation6 + $0x1200] sm:$0xff]
      %v1521 = vld [vmem:[#allocation6 + $0x1208] sm:$0xff]
      %v1522 = vld [vmem:[#allocation6 + $0x1210] sm:$0xff]
      %v1523 = vld [vmem:[#allocation6 + $0x1218] sm:$0xff]
      %v1524 = vld [vmem:[#allocation6 + $0x1220] sm:$0xff]
      %v1525 = vld [vmem:[#allocation6 + $0x1228] sm:$0xff]
      %v1526 = vld [vmem:[#allocation6 + $0x1230] sm:$0xff]
      %v1527 = vld [vmem:[#allocation6 + $0x1238] sm:$0xff]
      %v1528 = vld [vmem:[#allocation6 + $0x1240] sm:$0xff]
      %v1529 = vld [vmem:[#allocation6 + $0x1248] sm:$0xff]
      %v1530 = vld [vmem:[#allocation6 + $0x1250] sm:$0xff]
      %v1531 = vld [vmem:[#allocation6 + $0x1258] sm:$0xff]
      %v1532 = vld [vmem:[#allocation6 + $0x1260] sm:$0xff]
      %v1533 = vld [vmem:[#allocation6 + $0x1268] sm:$0xff]
      %v1534 = vld [vmem:[#allocation6 + $0x1270] sm:$0xff]
      %v1535 = vld [vmem:[#allocation6 + $0x1278] sm:$0xff]
      %v1536 = vld [vmem:[#allocation6 + $0x1280] sm:$0xff]
      %v1537 = vld [vmem:[#allocation6 + $0x1288] sm:$0xff]
      %v1538 = vld [vmem:[#allocation6 + $0x1290] sm:$0xff]
      %v1539 = vld [vmem:[#allocation6 + $0x1298] sm:$0xff]
      %v1540 = vld [vmem:[#allocation6 + $0x12a0] sm:$0xff]
      %v1541 = vld [vmem:[#allocation6 + $0x12a8] sm:$0xff]
      %v1542 = vld [vmem:[#allocation6 + $0x12b0] sm:$0xff]
      %v1543 = vld [vmem:[#allocation6 + $0x12b8] sm:$0xff]
      %v1544 = vld [vmem:[#allocation6 + $0x12c0] sm:$0xff]
      %v1545 = vld [vmem:[#allocation6 + $0x12c8] sm:$0xff]
      %v1546 = vld [vmem:[#allocation6 + $0x12d0] sm:$0xff]
      %v1547 = vld [vmem:[#allocation6 + $0x12d8] sm:$0xff]
      %v1548 = vld [vmem:[#allocation6 + $0x12e0] sm:$0xff]
      %v1549 = vld [vmem:[#allocation6 + $0x12e8] sm:$0xff]
      %v1550 = vld [vmem:[#allocation6 + $0x12f0] sm:$0xff]
      %v1551 = vld [vmem:[#allocation6 + $0x12f8] sm:$0xff]
      %v1552 = vld [vmem:[#allocation6 + $0x1300] sm:$0xff]
      %v1553 = vld [vmem:[#allocation6 + $0x1308] sm:$0xff]
      %v1554 = vld [vmem:[#allocation6 + $0x1310] sm:$0xff]
      %v1555 = vld [vmem:[#allocation6 + $0x1318] sm:$0xff]
      %v1556 = vld [vmem:[#allocation6 + $0x1320] sm:$0xff]
      %v1557 = vld [vmem:[#allocation6 + $0x1328] sm:$0xff]
      %v1558 = vld [vmem:[#allocation6 + $0x1330] sm:$0xff]
      %v1559 = vld [vmem:[#allocation6 + $0x1338] sm:$0xff]
      %v1560 = vld [vmem:[#allocation6 + $0x1340] sm:$0xff]
      %v1561 = vld [vmem:[#allocation6 + $0x1348] sm:$0xff]
      %v1562 = vld [vmem:[#allocation6 + $0x1350] sm:$0xff]
      %v1563 = vld [vmem:[#allocation6 + $0x1358] sm:$0xff]
      %v1564 = vld [vmem:[#allocation6 + $0x1360] sm:$0xff]
      %v1565 = vld [vmem:[#allocation6 + $0x1368] sm:$0xff]
      %v1566 = vld [vmem:[#allocation6 + $0x1370] sm:$0xff]
      %v1567 = vld [vmem:[#allocation6 + $0x1378] sm:$0xff]
      %v1568 = vld [vmem:[#allocation6 + $0x1380] sm:$0xff]
      %v1569 = vld [vmem:[#allocation6 + $0x1388] sm:$0xff]
      %v1570 = vld [vmem:[#allocation6 + $0x1390] sm:$0xff]
      %v1571 = vld [vmem:[#allocation6 + $0x1398] sm:$0xff]
      %v1572 = vld [vmem:[#allocation6 + $0x13a0] sm:$0xff]
      %v1573 = vld [vmem:[#allocation6 + $0x13a8] sm:$0xff]
      %v1574 = vld [vmem:[#allocation6 + $0x13b0] sm:$0xff]
      %v1575 = vld [vmem:[#allocation6 + $0x13b8] sm:$0xff]
      %v1576 = vld [vmem:[#allocation6 + $0x13c0] sm:$0xff]
      %v1577 = vld [vmem:[#allocation6 + $0x13c8] sm:$0xff]
      %v1578 = vld [vmem:[#allocation6 + $0x13d0] sm:$0xff]
      %v1579 = vld [vmem:[#allocation6 + $0x13d8] sm:$0xff]
      %v1580 = vld [vmem:[#allocation6 + $0x13e0] sm:$0xff]
      %v1581 = vld [vmem:[#allocation6 + $0x13e8] sm:$0xff]
      %v1582 = vld [vmem:[#allocation6 + $0x13f0] sm:$0xff]
      %v1583 = vld [vmem:[#allocation6 + $0x13f8] sm:$0xff]
      %v1584 = vld [vmem:[#allocation6 + $0x1400] sm:$0xff]
      %v1585 = vld [vmem:[#allocation6 + $0x1408] sm:$0xff]
      %v1586 = vld [vmem:[#allocation6 + $0x1410] sm:$0xff]
      %v1587 = vld [vmem:[#allocation6 + $0x1418] sm:$0xff]
      %v1588 = vld [vmem:[#allocation6 + $0x1420] sm:$0xff]
      %v1589 = vld [vmem:[#allocation6 + $0x1428] sm:$0xff]
      %v1590 = vld [vmem:[#allocation6 + $0x1430] sm:$0xff]
      %v1591 = vld [vmem:[#allocation6 + $0x1438] sm:$0xff]
      %v1592 = vld [vmem:[#allocation6 + $0x1440] sm:$0xff]
      %v1593 = vld [vmem:[#allocation6 + $0x1448] sm:$0xff]
      %v1594 = vld [vmem:[#allocation6 + $0x1450] sm:$0xff]
      %v1595 = vld [vmem:[#allocation6 + $0x1458] sm:$0xff]
      %v1596 = vld [vmem:[#allocation6 + $0x1460] sm:$0xff]
      %v1597 = vld [vmem:[#allocation6 + $0x1468] sm:$0xff]
      %v1598 = vld [vmem:[#allocation6 + $0x1470] sm:$0xff]
      %v1599 = vld [vmem:[#allocation6 + $0x1478] sm:$0xff]
      %v1600 = vld [vmem:[#allocation6 + $0x1480] sm:$0xff]
      %v1601 = vld [vmem:[#allocation6 + $0x1488] sm:$0xff]
      %v1602 = vld [vmem:[#allocation6 + $0x1490] sm:$0xff]
      %v1603 = vld [vmem:[#allocation6 + $0x1498] sm:$0xff]
      %v1604 = vld [vmem:[#allocation6 + $0x14a0] sm:$0xff]
      %v1605 = vld [vmem:[#allocation6 + $0x14a8] sm:$0xff]
      %v1606 = vld [vmem:[#allocation6 + $0x14b0] sm:$0xff]
      %v1607 = vld [vmem:[#allocation6 + $0x14b8] sm:$0xff]
      %v1608 = vld [vmem:[#allocation6 + $0x14c0] sm:$0xff]
      %v1609 = vld [vmem:[#allocation6 + $0x14c8] sm:$0xff]
      %v1610 = vld [vmem:[#allocation6 + $0x14d0] sm:$0xff]
      %v1611 = vld [vmem:[#allocation6 + $0x14d8] sm:$0xff]
      %v1612 = vld [vmem:[#allocation6 + $0x14e0] sm:$0xff]
      %v1613 = vld [vmem:[#allocation6 + $0x14e8] sm:$0xff]
      %v1614 = vld [vmem:[#allocation6 + $0x14f0] sm:$0xff]
      %v1615 = vld [vmem:[#allocation6 + $0x14f8] sm:$0xff]
      %v1616 = vld [vmem:[#allocation6 + $0x1500] sm:$0xff]
      %v1617 = vld [vmem:[#allocation6 + $0x1508] sm:$0xff]
      %v1618 = vld [vmem:[#allocation6 + $0x1510] sm:$0xff]
      %v1619 = vld [vmem:[#allocation6 + $0x1518] sm:$0xff]
      %v1620 = vld [vmem:[#allocation6 + $0x1520] sm:$0xff]
      %v1621 = vld [vmem:[#allocation6 + $0x1528] sm:$0xff]
      %v1622 = vld [vmem:[#allocation6 + $0x1530] sm:$0xff]
      %v1623 = vld [vmem:[#allocation6 + $0x1538] sm:$0xff]
      %v1624 = vld [vmem:[#allocation6 + $0x1540] sm:$0xff]
      %v1625 = vld [vmem:[#allocation6 + $0x1548] sm:$0xff]
      %v1626 = vld [vmem:[#allocation6 + $0x1550] sm:$0xff]
      %v1627 = vld [vmem:[#allocation6 + $0x1558] sm:$0xff]
      %v1628 = vld [vmem:[#allocation6 + $0x1560] sm:$0xff]
      %v1629 = vld [vmem:[#allocation6 + $0x1568] sm:$0xff]
      %v1630 = vld [vmem:[#allocation6 + $0x1570] sm:$0xff]
      %v1631 = vld [vmem:[#allocation6 + $0x1578] sm:$0xff]
      %v1632 = vld [vmem:[#allocation6 + $0x1580] sm:$0xff]
      %v1633 = vld [vmem:[#allocation6 + $0x1588] sm:$0xff]
      %v1634 = vld [vmem:[#allocation6 + $0x1590] sm:$0xff]
      %v1635 = vld [vmem:[#allocation6 + $0x1598] sm:$0xff]
      %v1636 = vld [vmem:[#allocation6 + $0x15a0] sm:$0xff]
      %v1637 = vld [vmem:[#allocation6 + $0x15a8] sm:$0xff]
      %v1638 = vld [vmem:[#allocation6 + $0x15b0] sm:$0xff]
      %v1639 = vld [vmem:[#allocation6 + $0x15b8] sm:$0xff]
      %v1640 = vld [vmem:[#allocation6 + $0x15c0] sm:$0xff]
      %v1641 = vld [vmem:[#allocation6 + $0x15c8] sm:$0xff]
      %v1642 = vld [vmem:[#allocation6 + $0x15d0] sm:$0xff]
      %v1643 = vld [vmem:[#allocation6 + $0x15d8] sm:$0xff]
      %v1644 = vld [vmem:[#allocation6 + $0x15e0] sm:$0xff]
      %v1645 = vld [vmem:[#allocation6 + $0x15e8] sm:$0xff]
      %v1646 = vld [vmem:[#allocation6 + $0x15f0] sm:$0xff]
      %v1647 = vld [vmem:[#allocation6 + $0x15f8] sm:$0xff]
      %v1648 = vld [vmem:[#allocation6 + $0x1600] sm:$0xff]
      %v1649 = vld [vmem:[#allocation6 + $0x1608] sm:$0xff]
      %v1650 = vld [vmem:[#allocation6 + $0x1610] sm:$0xff]
      %v1651 = vld [vmem:[#allocation6 + $0x1618] sm:$0xff]
      %v1652 = vld [vmem:[#allocation6 + $0x1620] sm:$0xff]
      %v1653 = vld [vmem:[#allocation6 + $0x1628] sm:$0xff]
      %v1654 = vld [vmem:[#allocation6 + $0x1630] sm:$0xff]
      %v1655 = vld [vmem:[#allocation6 + $0x1638] sm:$0xff]
      %v1656 = vld [vmem:[#allocation6 + $0x1640] sm:$0xff]
      %v1657 = vld [vmem:[#allocation6 + $0x1648] sm:$0xff]
      %v1658 = vld [vmem:[#allocation6 + $0x1650] sm:$0xff]
      %v1659 = vld [vmem:[#allocation6 + $0x1658] sm:$0xff]
      %v1660 = vld [vmem:[#allocation6 + $0x1660] sm:$0xff]
      %v1661 = vld [vmem:[#allocation6 + $0x1668] sm:$0xff]
      %v1662 = vld [vmem:[#allocation6 + $0x1670] sm:$0xff]
      %v1663 = vld [vmem:[#allocation6 + $0x1678] sm:$0xff]
      %v1664 = vld [vmem:[#allocation6 + $0x1680] sm:$0xff]
      %v1665 = vld [vmem:[#allocation6 + $0x1688] sm:$0xff]
      %v1666 = vld [vmem:[#allocation6 + $0x1690] sm:$0xff]
      %v1667 = vld [vmem:[#allocation6 + $0x1698] sm:$0xff]
      %v1668 = vld [vmem:[#allocation6 + $0x16a0] sm:$0xff]
      %v1669 = vld [vmem:[#allocation6 + $0x16a8] sm:$0xff]
      %v1670 = vld [vmem:[#allocation6 + $0x16b0] sm:$0xff]
      %v1671 = vld [vmem:[#allocation6 + $0x16b8] sm:$0xff]
      %v1672 = vld [vmem:[#allocation6 + $0x16c0] sm:$0xff]
      %v1673 = vld [vmem:[#allocation6 + $0x16c8] sm:$0xff]
      %v1674 = vld [vmem:[#allocation6 + $0x16d0] sm:$0xff]
      %v1675 = vld [vmem:[#allocation6 + $0x16d8] sm:$0xff]
      %v1676 = vld [vmem:[#allocation6 + $0x16e0] sm:$0xff]
      %v1677 = vld [vmem:[#allocation6 + $0x16e8] sm:$0xff]
      %v1678 = vld [vmem:[#allocation6 + $0x16f0] sm:$0xff]
      %v1679 = vld [vmem:[#allocation6 + $0x16f8] sm:$0xff]
      %v1680 = vld [vmem:[#allocation6 + $0x1700] sm:$0xff]
      %v1681 = vld [vmem:[#allocation6 + $0x1708] sm:$0xff]
      %v1682 = vld [vmem:[#allocation6 + $0x1710] sm:$0xff]
      %v1683 = vld [vmem:[#allocation6 + $0x1718] sm:$0xff]
      %v1684 = vld [vmem:[#allocation6 + $0x1720] sm:$0xff]
      %v1685 = vld [vmem:[#allocation6 + $0x1728] sm:$0xff]
      %v1686 = vld [vmem:[#allocation6 + $0x1730] sm:$0xff]
      %v1687 = vld [vmem:[#allocation6 + $0x1738] sm:$0xff]
      %v1688 = vld [vmem:[#allocation6 + $0x1740] sm:$0xff]
      %v1689 = vld [vmem:[#allocation6 + $0x1748] sm:$0xff]
      %v1690 = vld [vmem:[#allocation6 + $0x1750] sm:$0xff]
      %v1691 = vld [vmem:[#allocation6 + $0x1758] sm:$0xff]
      %v1692 = vld [vmem:[#allocation6 + $0x1760] sm:$0xff]
      %v1693 = vld [vmem:[#allocation6 + $0x1768] sm:$0xff]
      %v1694 = vld [vmem:[#allocation6 + $0x1770] sm:$0xff]
      %v1695 = vld [vmem:[#allocation6 + $0x1778] sm:$0xff]
      %v1696 = vld [vmem:[#allocation6 + $0x1780] sm:$0xff]
      %v1697 = vld [vmem:[#allocation6 + $0x1788] sm:$0xff]
      %v1698 = vld [vmem:[#allocation6 + $0x1790] sm:$0xff]
      %v1699 = vld [vmem:[#allocation6 + $0x1798] sm:$0xff]
      %v1700 = vld [vmem:[#allocation6 + $0x17a0] sm:$0xff]
      %v1701 = vld [vmem:[#allocation6 + $0x17a8] sm:$0xff]
      %v1702 = vld [vmem:[#allocation6 + $0x17b0] sm:$0xff]
      %v1703 = vld [vmem:[#allocation6 + $0x17b8] sm:$0xff]
      %v1704 = vld [vmem:[#allocation6 + $0x17c0] sm:$0xff]
      %v1705 = vld [vmem:[#allocation6 + $0x17c8] sm:$0xff]
      %v1706 = vld [vmem:[#allocation6 + $0x17d0] sm:$0xff]
      %v1707 = vld [vmem:[#allocation6 + $0x17d8] sm:$0xff]
      %v1708 = vld [vmem:[#allocation6 + $0x17e0] sm:$0xff]
      %v1709 = vld [vmem:[#allocation6 + $0x17e8] sm:$0xff]
      %v1710 = vld [vmem:[#allocation6 + $0x17f0] sm:$0xff]
      %v1711 = vld [vmem:[#allocation6 + $0x17f8] sm:$0xff]
      %v1712 = vld [vmem:[#allocation6 + $0x1800] sm:$0xff]
      %v1713 = vld [vmem:[#allocation6 + $0x1808] sm:$0xff]
      %v1714 = vld [vmem:[#allocation6 + $0x1810] sm:$0xff]
      %v1715 = vld [vmem:[#allocation6 + $0x1818] sm:$0xff]
      %v1716 = vld [vmem:[#allocation6 + $0x1820] sm:$0xff]
      %v1717 = vld [vmem:[#allocation6 + $0x1828] sm:$0xff]
      %v1718 = vld [vmem:[#allocation6 + $0x1830] sm:$0xff]
      %v1719 = vld [vmem:[#allocation6 + $0x1838] sm:$0xff]
      %v1720 = vld [vmem:[#allocation6 + $0x1840] sm:$0xff]
      %v1721 = vld [vmem:[#allocation6 + $0x1848] sm:$0xff]
      %v1722 = vld [vmem:[#allocation6 + $0x1850] sm:$0xff]
      %v1723 = vld [vmem:[#allocation6 + $0x1858] sm:$0xff]
      %v1724 = vld [vmem:[#allocation6 + $0x1860] sm:$0xff]
      %v1725 = vld [vmem:[#allocation6 + $0x1868] sm:$0xff]
      %v1726 = vld [vmem:[#allocation6 + $0x1870] sm:$0xff]
      %v1727 = vld [vmem:[#allocation6 + $0x1878] sm:$0xff]
      %v1728 = vld [vmem:[#allocation6 + $0x1880] sm:$0xff]
      %v1729 = vld [vmem:[#allocation6 + $0x1888] sm:$0xff]
      %v1730 = vld [vmem:[#allocation6 + $0x1890] sm:$0xff]
      %v1731 = vld [vmem:[#allocation6 + $0x1898] sm:$0xff]
      %v1732 = vld [vmem:[#allocation6 + $0x18a0] sm:$0xff]
      %v1733 = vld [vmem:[#allocation6 + $0x18a8] sm:$0xff]
      %v1734 = vld [vmem:[#allocation6 + $0x18b0] sm:$0xff]
      %v1735 = vld [vmem:[#allocation6 + $0x18b8] sm:$0xff]
      %v1736 = vld [vmem:[#allocation6 + $0x18c0] sm:$0xff]
      %v1737 = vld [vmem:[#allocation6 + $0x18c8] sm:$0xff]
      %v1738 = vld [vmem:[#allocation6 + $0x18d0] sm:$0xff]
      %v1739 = vld [vmem:[#allocation6 + $0x18d8] sm:$0xff]
      %v1740 = vld [vmem:[#allocation6 + $0x18e0] sm:$0xff]
      %v1741 = vld [vmem:[#allocation6 + $0x18e8] sm:$0xff]
      %v1742 = vld [vmem:[#allocation6 + $0x18f0] sm:$0xff]
      %v1743 = vld [vmem:[#allocation6 + $0x18f8] sm:$0xff]
      %v1744 = vld [vmem:[#allocation6 + $0x1900] sm:$0xff]
      %v1745 = vld [vmem:[#allocation6 + $0x1908] sm:$0xff]
      %v1746 = vld [vmem:[#allocation6 + $0x1910] sm:$0xff]
      %v1747 = vld [vmem:[#allocation6 + $0x1918] sm:$0xff]
      %v1748 = vld [vmem:[#allocation6 + $0x1920] sm:$0xff]
      %v1749 = vld [vmem:[#allocation6 + $0x1928] sm:$0xff]
      %v1750 = vld [vmem:[#allocation6 + $0x1930] sm:$0xff]
      %v1751 = vld [vmem:[#allocation6 + $0x1938] sm:$0xff]
      %v1752 = vld [vmem:[#allocation6 + $0x1940] sm:$0xff]
      %v1753 = vld [vmem:[#allocation6 + $0x1948] sm:$0xff]
      %v1754 = vld [vmem:[#allocation6 + $0x1950] sm:$0xff]
      %v1755 = vld [vmem:[#allocation6 + $0x1958] sm:$0xff]
      %v1756 = vld [vmem:[#allocation6 + $0x1960] sm:$0xff]
      %v1757 = vld [vmem:[#allocation6 + $0x1968] sm:$0xff]
      %v1758 = vld [vmem:[#allocation6 + $0x1970] sm:$0xff]
      %v1759 = vld [vmem:[#allocation6 + $0x1978] sm:$0xff]
      %v1760 = vld [vmem:[#allocation6 + $0x1980] sm:$0xff]
      %v1761 = vld [vmem:[#allocation6 + $0x1988] sm:$0xff]
      %v1762 = vld [vmem:[#allocation6 + $0x1990] sm:$0xff]
      %v1763 = vld [vmem:[#allocation6 + $0x1998] sm:$0xff]
      %v1764 = vld [vmem:[#allocation6 + $0x19a0] sm:$0xff]
      %v1765 = vld [vmem:[#allocation6 + $0x19a8] sm:$0xff]
      %v1766 = vld [vmem:[#allocation6 + $0x19b0] sm:$0xff]
      %v1767 = vld [vmem:[#allocation6 + $0x19b8] sm:$0xff]
      %v1768 = vld [vmem:[#allocation6 + $0x19c0] sm:$0xff]
      %v1769 = vld [vmem:[#allocation6 + $0x19c8] sm:$0xff]
      %v1770 = vld [vmem:[#allocation6 + $0x19d0] sm:$0xff]
      %v1771 = vld [vmem:[#allocation6 + $0x19d8] sm:$0xff]
      %v1772 = vld [vmem:[#allocation6 + $0x19e0] sm:$0xff]
      %v1773 = vld [vmem:[#allocation6 + $0x19e8] sm:$0xff]
      %v1774 = vld [vmem:[#allocation6 + $0x19f0] sm:$0xff]
      %v1775 = vld [vmem:[#allocation6 + $0x19f8] sm:$0xff]
      %v1776 = vld [vmem:[#allocation6 + $0x1a00] sm:$0xff]
      %v1777 = vld [vmem:[#allocation6 + $0x1a08] sm:$0xff]
      %v1778 = vld [vmem:[#allocation6 + $0x1a10] sm:$0xff]
      %v1779 = vld [vmem:[#allocation6 + $0x1a18] sm:$0xff]
      %v1780 = vld [vmem:[#allocation6 + $0x1a20] sm:$0xff]
      %v1781 = vld [vmem:[#allocation6 + $0x1a28] sm:$0xff]
      %v1782 = vld [vmem:[#allocation6 + $0x1a30] sm:$0xff]
      %v1783 = vld [vmem:[#allocation6 + $0x1a38] sm:$0xff]
      %v1784 = vld [vmem:[#allocation6 + $0x1a40] sm:$0xff]
      %v1785 = vld [vmem:[#allocation6 + $0x1a48] sm:$0xff]
      %v1786 = vld [vmem:[#allocation6 + $0x1a50] sm:$0xff]
      %v1787 = vld [vmem:[#allocation6 + $0x1a58] sm:$0xff]
      %v1788 = vld [vmem:[#allocation6 + $0x1a60] sm:$0xff]
      %v1789 = vld [vmem:[#allocation6 + $0x1a68] sm:$0xff]
      %v1790 = vld [vmem:[#allocation6 + $0x1a70] sm:$0xff]
      %v1791 = vld [vmem:[#allocation6 + $0x1a78] sm:$0xff]
      %v1792 = vld [vmem:[#allocation6 + $0x1a80] sm:$0xff]
      %v1793 = vld [vmem:[#allocation6 + $0x1a88] sm:$0xff]
      %v1794 = vld [vmem:[#allocation6 + $0x1a90] sm:$0xff]
      %v1795 = vld [vmem:[#allocation6 + $0x1a98] sm:$0xff]
      %v1796 = vld [vmem:[#allocation6 + $0x1aa0] sm:$0xff]
      %v1797 = vld [vmem:[#allocation6 + $0x1aa8] sm:$0xff]
      %v1798 = vld [vmem:[#allocation6 + $0x1ab0] sm:$0xff]
      %v1799 = vld [vmem:[#allocation6 + $0x1ab8] sm:$0xff]
      %v1800 = vld [vmem:[#allocation6 + $0x1ac0] sm:$0xff]
      %v1801 = vld [vmem:[#allocation6 + $0x1ac8] sm:$0xff]
      %v1802 = vld [vmem:[#allocation6 + $0x1ad0] sm:$0xff]
      %v1803 = vld [vmem:[#allocation6 + $0x1ad8] sm:$0xff]
      %v1804 = vld [vmem:[#allocation6 + $0x1ae0] sm:$0xff]
      %v1805 = vld [vmem:[#allocation6 + $0x1ae8] sm:$0xff]
      %v1806 = vld [vmem:[#allocation6 + $0x1af0] sm:$0xff]
      %v1807 = vld [vmem:[#allocation6 + $0x1af8] sm:$0xff]
      %v1808 = vld [vmem:[#allocation6 + $0x1b00] sm:$0xff]
      %v1809 = vld [vmem:[#allocation6 + $0x1b08] sm:$0xff]
      %v1810 = vld [vmem:[#allocation6 + $0x1b10] sm:$0xff]
      %v1811 = vld [vmem:[#allocation6 + $0x1b18] sm:$0xff]
      %v1812 = vld [vmem:[#allocation6 + $0x1b20] sm:$0xff]
      %v1813 = vld [vmem:[#allocation6 + $0x1b28] sm:$0xff]
      %v1814 = vld [vmem:[#allocation6 + $0x1b30] sm:$0xff]
      %v1815 = vld [vmem:[#allocation6 + $0x1b38] sm:$0xff]
      %v1816 = vld [vmem:[#allocation6 + $0x1b40] sm:$0xff]
      %v1817 = vld [vmem:[#allocation6 + $0x1b48] sm:$0xff]
      %v1818 = vld [vmem:[#allocation6 + $0x1b50] sm:$0xff]
      %v1819 = vld [vmem:[#allocation6 + $0x1b58] sm:$0xff]
      %v1820 = vld [vmem:[#allocation6 + $0x1b60] sm:$0xff]
      %v1821 = vld [vmem:[#allocation6 + $0x1b68] sm:$0xff]
      %v1822 = vld [vmem:[#allocation6 + $0x1b70] sm:$0xff]
      %v1823 = vld [vmem:[#allocation6 + $0x1b78] sm:$0xff]
      %v1824 = vld [vmem:[#allocation6 + $0x1b80] sm:$0xff]
      %v1825 = vld [vmem:[#allocation6 + $0x1b88] sm:$0xff]
      %v1826 = vld [vmem:[#allocation6 + $0x1b90] sm:$0xff]
      %v1827 = vld [vmem:[#allocation6 + $0x1b98] sm:$0xff]
      %v1828 = vld [vmem:[#allocation6 + $0x1ba0] sm:$0xff]
      %v1829 = vld [vmem:[#allocation6 + $0x1ba8] sm:$0xff]
      %v1830 = vld [vmem:[#allocation6 + $0x1bb0] sm:$0xff]
      %v1831 = vld [vmem:[#allocation6 + $0x1bb8] sm:$0xff]
      %v1832 = vld [vmem:[#allocation6 + $0x1bc0] sm:$0xff]
      %v1833 = vld [vmem:[#allocation6 + $0x1bc8] sm:$0xff]
      %v1834 = vld [vmem:[#allocation6 + $0x1bd0] sm:$0xff]
      %v1835 = vld [vmem:[#allocation6 + $0x1bd8] sm:$0xff]
      %v1836 = vld [vmem:[#allocation6 + $0x1be0] sm:$0xff]
      %v1837 = vld [vmem:[#allocation6 + $0x1be8] sm:$0xff]
      %v1838 = vld [vmem:[#allocation6 + $0x1bf0] sm:$0xff]
      %v1839 = vld [vmem:[#allocation6 + $0x1bf8] sm:$0xff]
      %v1840 = vld [vmem:[#allocation6 + $0x1c00] sm:$0xff]
      %v1841 = vld [vmem:[#allocation6 + $0x1c08] sm:$0xff]
      %v1842 = vld [vmem:[#allocation6 + $0x1c10] sm:$0xff]
      %v1843 = vld [vmem:[#allocation6 + $0x1c18] sm:$0xff]
      %v1844 = vld [vmem:[#allocation6 + $0x1c20] sm:$0xff]
      %v1845 = vld [vmem:[#allocation6 + $0x1c28] sm:$0xff]
      %v1846 = vld [vmem:[#allocation6 + $0x1c30] sm:$0xff]
      %v1847 = vld [vmem:[#allocation6 + $0x1c38] sm:$0xff]
      %v1848 = vld [vmem:[#allocation6 + $0x1c40] sm:$0xff]
      %v1849 = vld [vmem:[#allocation6 + $0x1c48] sm:$0xff]
      %v1850 = vld [vmem:[#allocation6 + $0x1c50] sm:$0xff]
      %v1851 = vld [vmem:[#allocation6 + $0x1c58] sm:$0xff]
      %v1852 = vld [vmem:[#allocation6 + $0x1c60] sm:$0xff]
      %v1853 = vld [vmem:[#allocation6 + $0x1c68] sm:$0xff]
      %v1854 = vld [vmem:[#allocation6 + $0x1c70] sm:$0xff]
      %v1855 = vld [vmem:[#allocation6 + $0x1c78] sm:$0xff]
      %v1856 = vld [vmem:[#allocation6 + $0x1c80] sm:$0xff]
      %v1857 = vld [vmem:[#allocation6 + $0x1c88] sm:$0xff]
      %v1858 = vld [vmem:[#allocation6 + $0x1c90] sm:$0xff]
      %v1859 = vld [vmem:[#allocation6 + $0x1c98] sm:$0xff]
      %v1860 = vld [vmem:[#allocation6 + $0x1ca0] sm:$0xff]
      %v1861 = vld [vmem:[#allocation6 + $0x1ca8] sm:$0xff]
      %v1862 = vld [vmem:[#allocation6 + $0x1cb0] sm:$0xff]
      %v1863 = vld [vmem:[#allocation6 + $0x1cb8] sm:$0xff]
      %v1864 = vld [vmem:[#allocation6 + $0x1cc0] sm:$0xff]
      %v1865 = vld [vmem:[#allocation6 + $0x1cc8] sm:$0xff]
      %v1866 = vld [vmem:[#allocation6 + $0x1cd0] sm:$0xff]
      %v1867 = vld [vmem:[#allocation6 + $0x1cd8] sm:$0xff]
      %v1868 = vld [vmem:[#allocation6 + $0x1ce0] sm:$0xff]
      %v1869 = vld [vmem:[#allocation6 + $0x1ce8] sm:$0xff]
      %v1870 = vld [vmem:[#allocation6 + $0x1cf0] sm:$0xff]
      %v1871 = vld [vmem:[#allocation6 + $0x1cf8] sm:$0xff]
      %v1872 = vld [vmem:[#allocation6 + $0x1d00] sm:$0xff]
      %v1873 = vld [vmem:[#allocation6 + $0x1d08] sm:$0xff]
      %v1874 = vld [vmem:[#allocation6 + $0x1d10] sm:$0xff]
      %v1875 = vld [vmem:[#allocation6 + $0x1d18] sm:$0xff]
      %v1876 = vld [vmem:[#allocation6 + $0x1d20] sm:$0xff]
      %v1877 = vld [vmem:[#allocation6 + $0x1d28] sm:$0xff]
      %v1878 = vld [vmem:[#allocation6 + $0x1d30] sm:$0xff]
      %v1879 = vld [vmem:[#allocation6 + $0x1d38] sm:$0xff]
      %v1880 = vld [vmem:[#allocation6 + $0x1d40] sm:$0xff]
      %v1881 = vld [vmem:[#allocation6 + $0x1d48] sm:$0xff]
      %v1882 = vld [vmem:[#allocation6 + $0x1d50] sm:$0xff]
      %v1883 = vld [vmem:[#allocation6 + $0x1d58] sm:$0xff]
      %v1884 = vld [vmem:[#allocation6 + $0x1d60] sm:$0xff]
      %v1885 = vld [vmem:[#allocation6 + $0x1d68] sm:$0xff]
      %v1886 = vld [vmem:[#allocation6 + $0x1d70] sm:$0xff]
      %v1887 = vld [vmem:[#allocation6 + $0x1d78] sm:$0xff]
      %v1888 = vld [vmem:[#allocation6 + $0x1d80] sm:$0xff]
      %v1889 = vld [vmem:[#allocation6 + $0x1d88] sm:$0xff]
      %v1890 = vld [vmem:[#allocation6 + $0x1d90] sm:$0xff]
      %v1891 = vld [vmem:[#allocation6 + $0x1d98] sm:$0xff]
      %v1892 = vld [vmem:[#allocation6 + $0x1da0] sm:$0xff]
      %v1893 = vld [vmem:[#allocation6 + $0x1da8] sm:$0xff]
      %v1894 = vld [vmem:[#allocation6 + $0x1db0] sm:$0xff]
      %v1895 = vld [vmem:[#allocation6 + $0x1db8] sm:$0xff]
      %v1896 = vld [vmem:[#allocation6 + $0x1dc0] sm:$0xff]
      %v1897 = vld [vmem:[#allocation6 + $0x1dc8] sm:$0xff]
      %v1898 = vld [vmem:[#allocation6 + $0x1dd0] sm:$0xff]
      %v1899 = vld [vmem:[#allocation6 + $0x1dd8] sm:$0xff]
      %v1900 = vld [vmem:[#allocation6 + $0x1de0] sm:$0xff]
      %v1901 = vld [vmem:[#allocation6 + $0x1de8] sm:$0xff]
      %v1902 = vld [vmem:[#allocation6 + $0x1df0] sm:$0xff]
      %v1903 = vld [vmem:[#allocation6 + $0x1df8] sm:$0xff]
      %v1904 = vld [vmem:[#allocation6 + $0x1e00] sm:$0xff]
      %v1905 = vld [vmem:[#allocation6 + $0x1e08] sm:$0xff]
      %v1906 = vld [vmem:[#allocation6 + $0x1e10] sm:$0xff]
      %v1907 = vld [vmem:[#allocation6 + $0x1e18] sm:$0xff]
      %v1908 = vld [vmem:[#allocation6 + $0x1e20] sm:$0xff]
      %v1909 = vld [vmem:[#allocation6 + $0x1e28] sm:$0xff]
      %v1910 = vld [vmem:[#allocation6 + $0x1e30] sm:$0xff]
      %v1911 = vld [vmem:[#allocation6 + $0x1e38] sm:$0xff]
      %v1912 = vld [vmem:[#allocation6 + $0x1e40] sm:$0xff]
      %v1913 = vld [vmem:[#allocation6 + $0x1e48] sm:$0xff]
      %v1914 = vld [vmem:[#allocation6 + $0x1e50] sm:$0xff]
      %v1915 = vld [vmem:[#allocation6 + $0x1e58] sm:$0xff]
      %v1916 = vld [vmem:[#allocation6 + $0x1e60] sm:$0xff]
      %v1917 = vld [vmem:[#allocation6 + $0x1e68] sm:$0xff]
      %v1918 = vld [vmem:[#allocation6 + $0x1e70] sm:$0xff]
      %v1919 = vld [vmem:[#allocation6 + $0x1e78] sm:$0xff]
      %v1920 = vld [vmem:[#allocation6 + $0x1e80] sm:$0xff]
      %v1921 = vld [vmem:[#allocation6 + $0x1e88] sm:$0xff]
      %v1922 = vld [vmem:[#allocation6 + $0x1e90] sm:$0xff]
      %v1923 = vld [vmem:[#allocation6 + $0x1e98] sm:$0xff]
      %v1924 = vld [vmem:[#allocation6 + $0x1ea0] sm:$0xff]
      %v1925 = vld [vmem:[#allocation6 + $0x1ea8] sm:$0xff]
      %v1926 = vld [vmem:[#allocation6 + $0x1eb0] sm:$0xff]
      %v1927 = vld [vmem:[#allocation6 + $0x1eb8] sm:$0xff]
      %v1928 = vld [vmem:[#allocation6 + $0x1ec0] sm:$0xff]
      %v1929 = vld [vmem:[#allocation6 + $0x1ec8] sm:$0xff]
      %v1930 = vld [vmem:[#allocation6 + $0x1ed0] sm:$0xff]
      %v1931 = vld [vmem:[#allocation6 + $0x1ed8] sm:$0xff]
      %v1932 = vld [vmem:[#allocation6 + $0x1ee0] sm:$0xff]
      %v1933 = vld [vmem:[#allocation6 + $0x1ee8] sm:$0xff]
      %v1934 = vld [vmem:[#allocation6 + $0x1ef0] sm:$0xff]
      %v1935 = vld [vmem:[#allocation6 + $0x1ef8] sm:$0xff]
      %v1936 = vld [vmem:[#allocation6 + $0x1f00] sm:$0xff]
      %v1937 = vld [vmem:[#allocation6 + $0x1f08] sm:$0xff]
      %v1938 = vld [vmem:[#allocation6 + $0x1f10] sm:$0xff]
      %v1939 = vld [vmem:[#allocation6 + $0x1f18] sm:$0xff]
      %v1940 = vld [vmem:[#allocation6 + $0x1f20] sm:$0xff]
      %v1941 = vld [vmem:[#allocation6 + $0x1f28] sm:$0xff]
      %v1942 = vld [vmem:[#allocation6 + $0x1f30] sm:$0xff]
      %v1943 = vld [vmem:[#allocation6 + $0x1f38] sm:$0xff]
      %v1944 = vld [vmem:[#allocation6 + $0x1f40] sm:$0xff]
      %v1945 = vld [vmem:[#allocation6 + $0x1f48] sm:$0xff]
      %v1946 = vld [vmem:[#allocation6 + $0x1f50] sm:$0xff]
      %v1947 = vld [vmem:[#allocation6 + $0x1f58] sm:$0xff]
      %v1948 = vld [vmem:[#allocation6 + $0x1f60] sm:$0xff]
      %v1949 = vld [vmem:[#allocation6 + $0x1f68] sm:$0xff]
      %v1950 = vld [vmem:[#allocation6 + $0x1f70] sm:$0xff]
      %v1951 = vld [vmem:[#allocation6 + $0x1f78] sm:$0xff]
      %v1952 = vld [vmem:[#allocation6 + $0x1f80] sm:$0xff]
      %v1953 = vld [vmem:[#allocation6 + $0x1f88] sm:$0xff]
      %v1954 = vld [vmem:[#allocation6 + $0x1f90] sm:$0xff]
      %v1955 = vld [vmem:[#allocation6 + $0x1f98] sm:$0xff]
      %v1956 = vld [vmem:[#allocation6 + $0x1fa0] sm:$0xff]
      %v1957 = vld [vmem:[#allocation6 + $0x1fa8] sm:$0xff]
      %v1958 = vld [vmem:[#allocation6 + $0x1fb0] sm:$0xff]
      %v1959 = vld [vmem:[#allocation6 + $0x1fb8] sm:$0xff]
      %v1960 = vld [vmem:[#allocation6 + $0x1fc0] sm:$0xff]
      %v1961 = vld [vmem:[#allocation6 + $0x1fc8] sm:$0xff]
      %v1962 = vld [vmem:[#allocation6 + $0x1fd0] sm:$0xff]
      %v1963 = vld [vmem:[#allocation6 + $0x1fd8] sm:$0xff]
      %v1964 = vld [vmem:[#allocation6 + $0x1fe0] sm:$0xff]
      %v1965 = vld [vmem:[#allocation6 + $0x1fe8] sm:$0xff]
      %v1966 = vld [vmem:[#allocation6 + $0x1ff0] sm:$0xff]
      %v1967 = vld [vmem:[#allocation6 + $0x1ff8] sm:$0xff]
      %v1968 = vld [vmem:[#allocation8] sm:$0xf]
      %v1970 = vlaneseq
      %v1971 = vshrl.u32 %v1970, 7
      %v1972 = vsub.s32 0, %v1971
      %v1973 = vrot.slane %v1968, %v1972
      %v1974 = vlaneseq
      %v1975 = vshrl.u32 %v1974, 7
      %v1976 = vsub.s32 1, %v1975
      %v1977 = vrot.slane %v1968, %v1976
      %v1978 = vlaneseq
      %v1979 = vshrl.u32 %v1978, 7
      %v1980 = vsub.s32 2, %v1979
      %v1981 = vrot.slane %v1968, %v1980
      %v1982 = vlaneseq
      %v1983 = vshrl.u32 %v1982, 7
      %v1984 = vsub.s32 3, %v1983
      %v1985 = vrot.slane %v1968, %v1984
      %1990 = vmatprep.subr.mxu0 %v945
      %1991 = vmatpush1.msra.mxu0 %v944
      %1992 = vmatprep.subr.mxu0 %v949
      %1993 = vmatpush1.msra.mxu0 %v948
      %1994 = vmatprep.subr.mxu0 %v953
      %1995 = vmatpush1.msra.mxu0 %v952
      %1996 = vmatprep.subr.mxu0 %v957
      %1997 = vmatpush1.msra.mxu0 %v956
      %1998 = vmatprep.subr.mxu0 %v961
      %1999 = vmatpush1.msra.mxu0 %v960
      %2000 = vmatprep.subr.mxu0 %v965
      %2001 = vmatpush1.msra.mxu0 %v964
      %2002 = vmatprep.subr.mxu0 %v969
      %2003 = vmatpush1.msra.mxu0 %v968
      %2004 = vmatprep.subr.mxu0 %v973
      %2005 = vmatpush1.msra.mxu0 %v972
      %2006 = vmatprep.subr.mxu0 %v977
      %2007 = vmatpush1.msra.mxu0 %v976
      %2008 = vmatprep.subr.mxu0 %v981
      %2009 = vmatpush1.msra.mxu0 %v980
      %2010 = vmatprep.subr.mxu0 %v985
      %2011 = vmatpush1.msra.mxu0 %v984
      %2012 = vmatprep.subr.mxu0 %v989
      %2013 = vmatpush1.msra.mxu0 %v988
      %2014 = vmatprep.subr.mxu0 %v993
      %2015 = vmatpush1.msra.mxu0 %v992
      %2016 = vmatprep.subr.mxu0 %v997
      %2017 = vmatpush1.msra.mxu0 %v996
      %2018 = vmatprep.subr.mxu0 %v1001
      %2019 = vmatpush1.msra.mxu0 %v1000
      %2020 = vmatprep.subr.mxu0 %v1005
      %2021 = vmatpush1.msra.mxu0 %v1004
      %2022 = vmatprep.subr.mxu0 %v1009
      %2023 = vmatpush1.msra.mxu0 %v1008
      %2024 = vmatprep.subr.mxu0 %v1013
      %2025 = vmatpush1.msra.mxu0 %v1012
      %2026 = vmatprep.subr.mxu0 %v1017
      %2027 = vmatpush1.msra.mxu0 %v1016
      %2028 = vmatprep.subr.mxu0 %v1021
      %2029 = vmatpush1.msra.mxu0 %v1020
      %2030 = vmatprep.subr.mxu0 %v1025
      %2031 = vmatpush1.msra.mxu0 %v1024
      %2032 = vmatprep.subr.mxu0 %v1029
      %2033 = vmatpush1.msra.mxu0 %v1028
      %2034 = vmatprep.subr.mxu0 %v1033
      %2035 = vmatpush1.msra.mxu0 %v1032
      %2036 = vmatprep.subr.mxu0 %v1037
      %2037 = vmatpush1.msra.mxu0 %v1036
      %2038 = vmatprep.subr.mxu0 %v1041
      %2039 = vmatpush1.msra.mxu0 %v1040
      %2040 = vmatprep.subr.mxu0 %v1045
      %2041 = vmatpush1.msra.mxu0 %v1044
      %2042 = vmatprep.subr.mxu0 %v1049
      %2043 = vmatpush1.msra.mxu0 %v1048
      %2044 = vmatprep.subr.mxu0 %v1053
      %2045 = vmatpush1.msra.mxu0 %v1052
      %2046 = vmatprep.subr.mxu0 %v1057
      %2047 = vmatpush1.msra.mxu0 %v1056
      %2048 = vmatprep.subr.mxu0 %v1061
      %2049 = vmatpush1.msra.mxu0 %v1060
      %2050 = vmatprep.subr.mxu0 %v1065
      %2051 = vmatpush1.msra.mxu0 %v1064
      %2052 = vmatprep.subr.mxu0 %v1069
      %2053 = vmatpush1.msra.mxu0 %v1068
      %2054 = vmatprep.mubr.f32.mxu0 %v353
      %2055 = vmatmul.mubr.f32.gmra.mrb[0].mxu0 %v351
      %v2056 = vpop.f32.mrb[0].mxu0
      %v2057 = vadd.f32 %v1973, %v2056
      %v2058 = vpop.f32.mrb[0].mxu0
      %v2059 = vadd.f32 %v1977, %v2058
      %2060 = vdwg.mxu0
      %2061 = vmatprep.subr.mxu0 %v1073
      %2062 = vmatpush1.msra.mxu0 %v1072
      %2063 = vmatprep.subr.mxu0 %v1077
      %2064 = vmatpush1.msra.mxu0 %v1076
      %2065 = vmatprep.subr.mxu0 %v1081
      %2066 = vmatpush1.msra.mxu0 %v1080
      %2067 = vmatprep.subr.mxu0 %v1085
      %2068 = vmatpush1.msra.mxu0 %v1084
      %2069 = vmatprep.subr.mxu0 %v1089
      %2070 = vmatpush1.msra.mxu0 %v1088
      %2071 = vmatprep.subr.mxu0 %v1093
      %2072 = vmatpush1.msra.mxu0 %v1092
      %2073 = vmatprep.subr.mxu0 %v1097
      %2074 = vmatpush1.msra.mxu0 %v1096
      %2075 = vmatprep.subr.mxu0 %v1101
      %2076 = vmatpush1.msra.mxu0 %v1100
      %2077 = vmatprep.subr.mxu0 %v1105
      %2078 = vmatpush1.msra.mxu0 %v1104
      %2079 = vmatprep.subr.mxu0 %v1109
      %2080 = vmatpush1.msra.mxu0 %v1108
      %2081 = vmatprep.subr.mxu0 %v1113
      %2082 = vmatpush1.msra.mxu0 %v1112
      %2083 = vmatprep.subr.mxu0 %v1117
      %2084 = vmatpush1.msra.mxu0 %v1116
      %2085 = vmatprep.subr.mxu0 %v1121
      %2086 = vmatpush1.msra.mxu0 %v1120
      %2087 = vmatprep.subr.mxu0 %v1125
      %2088 = vmatpush1.msra.mxu0 %v1124
      %2089 = vmatprep.subr.mxu0 %v1129
      %2090 = vmatpush1.msra.mxu0 %v1128
      %2091 = vmatprep.subr.mxu0 %v1133
      %2092 = vmatpush1.msra.mxu0 %v1132
      %2093 = vmatprep.subr.mxu0 %v1137
      %2094 = vmatpush1.msra.mxu0 %v1136
      %2095 = vmatprep.subr.mxu0 %v1141
      %2096 = vmatpush1.msra.mxu0 %v1140
      %2097 = vmatprep.subr.mxu0 %v1145
      %2098 = vmatpush1.msra.mxu0 %v1144
      %2099 = vmatprep.subr.mxu0 %v1149
      %2100 = vmatpush1.msra.mxu0 %v1148
      %2101 = vmatprep.subr.mxu0 %v1153
      %2102 = vmatpush1.msra.mxu0 %v1152
      %2103 = vmatprep.subr.mxu0 %v1157
      %2104 = vmatpush1.msra.mxu0 %v1156
      %2105 = vmatprep.subr.mxu0 %v1161
      %2106 = vmatpush1.msra.mxu0 %v1160
      %2107 = vmatprep.subr.mxu0 %v1165
      %2108 = vmatpush1.msra.mxu0 %v1164
      %2109 = vmatprep.subr.mxu0 %v1169
      %2110 = vmatpush1.msra.mxu0 %v1168
      %2111 = vmatprep.subr.mxu0 %v1173
      %2112 = vmatpush1.msra.mxu0 %v1172
      %2113 = vmatprep.subr.mxu0 %v1177
      %2114 = vmatpush1.msra.mxu0 %v1176
      %2115 = vmatprep.subr.mxu0 %v1181
      %2116 = vmatpush1.msra.mxu0 %v1180
      %2117 = vmatprep.subr.mxu0 %v1185
      %2118 = vmatpush1.msra.mxu0 %v1184
      %2119 = vmatprep.subr.mxu0 %v1189
      %2120 = vmatpush1.msra.mxu0 %v1188
      %2121 = vmatprep.subr.mxu0 %v1193
      %2122 = vmatpush1.msra.mxu0 %v1192
      %2123 = vmatprep.subr.mxu0 %v1197
      %2124 = vmatpush1.msra.mxu0 %v1196
      %2125 = vmatprep.mubr.f32.mxu0 %v424
      %2126 = vmatmul.mubr.f32.gmra.mrb[0].mxu0 %v422
      %v2127 = vpop.f32.mrb[0].mxu0
      %v2128 = vadd.f32 %v2057, %v2127
      %v2129 = vpop.f32.mrb[0].mxu0
      %v2130 = vadd.f32 %v2059, %v2129
      %2131 = vdwg.mxu0
      %2132 = vmatprep.subr.mxu0 %v1201
      %2133 = vmatpush1.msra.mxu0 %v1200
      %2134 = vmatprep.subr.mxu0 %v1205
      %2135 = vmatpush1.msra.mxu0 %v1204
      %2136 = vmatprep.subr.mxu0 %v1209
      %2137 = vmatpush1.msra.mxu0 %v1208
      %2138 = vmatprep.subr.mxu0 %v1213
      %2139 = vmatpush1.msra.mxu0 %v1212
      %2140 = vmatprep.subr.mxu0 %v1217
      %2141 = vmatpush1.msra.mxu0 %v1216
      %2142 = vmatprep.subr.mxu0 %v1221
      %2143 = vmatpush1.msra.mxu0 %v1220
      %2144 = vmatprep.subr.mxu0 %v1225
      %2145 = vmatpush1.msra.mxu0 %v1224
      %2146 = vmatprep.subr.mxu0 %v1229
      %2147 = vmatpush1.msra.mxu0 %v1228
      %2148 = vmatprep.subr.mxu0 %v1233
      %2149 = vmatpush1.msra.mxu0 %v1232
      %2150 = vmatprep.subr.mxu0 %v1237
      %2151 = vmatpush1.msra.mxu0 %v1236
      %2152 = vmatprep.subr.mxu0 %v1241
      %2153 = vmatpush1.msra.mxu0 %v1240
      %2154 = vmatprep.subr.mxu0 %v1245
      %2155 = vmatpush1.msra.mxu0 %v1244
      %2156 = vmatprep.subr.mxu0 %v1249
      %2157 = vmatpush1.msra.mxu0 %v1248
      %2158 = vmatprep.subr.mxu0 %v1253
      %2159 = vmatpush1.msra.mxu0 %v1252
      %2160 = vmatprep.subr.mxu0 %v1257
      %2161 = vmatpush1.msra.mxu0 %v1256
      %2162 = vmatprep.subr.mxu0 %v1261
      %2163 = vmatpush1.msra.mxu0 %v1260
      %2164 = vmatprep.subr.mxu0 %v1265
      %2165 = vmatpush1.msra.mxu0 %v1264
      %2166 = vmatprep.subr.mxu0 %v1269
      %2167 = vmatpush1.msra.mxu0 %v1268
      %2168 = vmatprep.subr.mxu0 %v1273
      %2169 = vmatpush1.msra.mxu0 %v1272
      %2170 = vmatprep.subr.mxu0 %v1277
      %2171 = vmatpush1.msra.mxu0 %v1276
      %2172 = vmatprep.subr.mxu0 %v1281
      %2173 = vmatpush1.msra.mxu0 %v1280
      %2174 = vmatprep.subr.mxu0 %v1285
      %2175 = vmatpush1.msra.mxu0 %v1284
      %2176 = vmatprep.subr.mxu0 %v1289
      %2177 = vmatpush1.msra.mxu0 %v1288
      %2178 = vmatprep.subr.mxu0 %v1293
      %2179 = vmatpush1.msra.mxu0 %v1292
      %2180 = vmatprep.subr.mxu0 %v1297
      %2181 = vmatpush1.msra.mxu0 %v1296
      %2182 = vmatprep.subr.mxu0 %v1301
      %2183 = vmatpush1.msra.mxu0 %v1300
      %2184 = vmatprep.subr.mxu0 %v1305
      %2185 = vmatpush1.msra.mxu0 %v1304
      %2186 = vmatprep.subr.mxu0 %v1309
      %2187 = vmatpush1.msra.mxu0 %v1308
      %2188 = vmatprep.subr.mxu0 %v1313
      %2189 = vmatpush1.msra.mxu0 %v1312
      %2190 = vmatprep.subr.mxu0 %v1317
      %2191 = vmatpush1.msra.mxu0 %v1316
      %2192 = vmatprep.subr.mxu0 %v1321
      %2193 = vmatpush1.msra.mxu0 %v1320
      %2194 = vmatprep.subr.mxu0 %v1325
      %2195 = vmatpush1.msra.mxu0 %v1324
      %2196 = vmatprep.mubr.f32.mxu0 %v495
      %2197 = vmatmul.mubr.f32.gmra.mrb[0].mxu0 %v493
      %v2198 = vpop.f32.mrb[0].mxu0
      %v2199 = vadd.f32 %v2128, %v2198
      %v2200 = vpop.f32.mrb[0].mxu0
      %v2201 = vadd.f32 %v2130, %v2200
      %2202 = vdwg.mxu0
      %2203 = vmatprep.subr.mxu0 %v1329
      %2204 = vmatpush1.msra.mxu0 %v1328
      %2205 = vmatprep.subr.mxu0 %v1333
      %2206 = vmatpush1.msra.mxu0 %v1332
      %2207 = vmatprep.subr.mxu0 %v1337
      %2208 = vmatpush1.msra.mxu0 %v1336
      %2209 = vmatprep.subr.mxu0 %v1341
      %2210 = vmatpush1.msra.mxu0 %v1340
      %2211 = vmatprep.subr.mxu0 %v1345
      %2212 = vmatpush1.msra.mxu0 %v1344
      %2213 = vmatprep.subr.mxu0 %v1349
      %2214 = vmatpush1.msra.mxu0 %v1348
      %2215 = vmatprep.subr.mxu0 %v1353
      %2216 = vmatpush1.msra.mxu0 %v1352
      %2217 = vmatprep.subr.mxu0 %v1357
      %2218 = vmatpush1.msra.mxu0 %v1356
      %2219 = vmatprep.subr.mxu0 %v1361
      %2220 = vmatpush1.msra.mxu0 %v1360
      %2221 = vmatprep.subr.mxu0 %v1365
      %2222 = vmatpush1.msra.mxu0 %v1364
      %2223 = vmatprep.subr.mxu0 %v1369
      %2224 = vmatpush1.msra.mxu0 %v1368
      %2225 = vmatprep.subr.mxu0 %v1373
      %2226 = vmatpush1.msra.mxu0 %v1372
      %2227 = vmatprep.subr.mxu0 %v1377
      %2228 = vmatpush1.msra.mxu0 %v1376
      %2229 = vmatprep.subr.mxu0 %v1381
      %2230 = vmatpush1.msra.mxu0 %v1380
      %2231 = vmatprep.subr.mxu0 %v1385
      %2232 = vmatpush1.msra.mxu0 %v1384
      %2233 = vmatprep.subr.mxu0 %v1389
      %2234 = vmatpush1.msra.mxu0 %v1388
      %2235 = vmatprep.subr.mxu0 %v1393
      %2236 = vmatpush1.msra.mxu0 %v1392
      %2237 = vmatprep.subr.mxu0 %v1397
      %2238 = vmatpush1.msra.mxu0 %v1396
      %2239 = vmatprep.subr.mxu0 %v1401
      %2240 = vmatpush1.msra.mxu0 %v1400
      %2241 = vmatprep.subr.mxu0 %v1405
      %2242 = vmatpush1.msra.mxu0 %v1404
      %2243 = vmatprep.subr.mxu0 %v1409
      %2244 = vmatpush1.msra.mxu0 %v1408
      %2245 = vmatprep.subr.mxu0 %v1413
      %2246 = vmatpush1.msra.mxu0 %v1412
      %2247 = vmatprep.subr.mxu0 %v1417
      %2248 = vmatpush1.msra.mxu0 %v1416
      %2249 = vmatprep.subr.mxu0 %v1421
      %2250 = vmatpush1.msra.mxu0 %v1420
      %2251 = vmatprep.subr.mxu0 %v1425
      %2252 = vmatpush1.msra.mxu0 %v1424
      %2253 = vmatprep.subr.mxu0 %v1429
      %2254 = vmatpush1.msra.mxu0 %v1428
      %2255 = vmatprep.subr.mxu0 %v1433
      %2256 = vmatpush1.msra.mxu0 %v1432
      %2257 = vmatprep.subr.mxu0 %v1437
      %2258 = vmatpush1.msra.mxu0 %v1436
      %2259 = vmatprep.subr.mxu0 %v1441
      %2260 = vmatpush1.msra.mxu0 %v1440
      %2261 = vmatprep.subr.mxu0 %v1445
      %2262 = vmatpush1.msra.mxu0 %v1444
      %2263 = vmatprep.subr.mxu0 %v1449
      %2264 = vmatpush1.msra.mxu0 %v1448
      %2265 = vmatprep.subr.mxu0 %v1453
      %2266 = vmatpush1.msra.mxu0 %v1452
      %2267 = vmatprep.mubr.f32.mxu0 %v566
      %2268 = vmatmul.mubr.f32.gmra.mrb[0].mxu0 %v564
      %v2269 = vpop.f32.mrb[0].mxu0
      %v2270 = vadd.f32 %v2199, %v2269
      %v2271 = vpop.f32.mrb[0].mxu0
      %v2272 = vadd.f32 %v2201, %v2271
      %2273 = vdwg.mxu0
      %2274 = vmatprep.subr.mxu0 %v1457
      %2275 = vmatpush1.msra.mxu0 %v1456
      %2276 = vmatprep.subr.mxu0 %v1461
      %2277 = vmatpush1.msra.mxu0 %v1460
      %2278 = vmatprep.subr.mxu0 %v1465
      %2279 = vmatpush1.msra.mxu0 %v1464
      %2280 = vmatprep.subr.mxu0 %v1469
      %2281 = vmatpush1.msra.mxu0 %v1468
      %2282 = vmatprep.subr.mxu0 %v1473
      %2283 = vmatpush1.msra.mxu0 %v1472
      %2284 = vmatprep.subr.mxu0 %v1477
      %2285 = vmatpush1.msra.mxu0 %v1476
      %2286 = vmatprep.subr.mxu0 %v1481
      %2287 = vmatpush1.msra.mxu0 %v1480
      %2288 = vmatprep.subr.mxu0 %v1485
      %2289 = vmatpush1.msra.mxu0 %v1484
      %2290 = vmatprep.subr.mxu0 %v1489
      %2291 = vmatpush1.msra.mxu0 %v1488
      %2292 = vmatprep.subr.mxu0 %v1493
      %2293 = vmatpush1.msra.mxu0 %v1492
      %2294 = vmatprep.subr.mxu0 %v1497
      %2295 = vmatpush1.msra.mxu0 %v1496
      %2296 = vmatprep.subr.mxu0 %v1501
      %2297 = vmatpush1.msra.mxu0 %v1500
      %2298 = vmatprep.subr.mxu0 %v1505
      %2299 = vmatpush1.msra.mxu0 %v1504
      %2300 = vmatprep.subr.mxu0 %v1509
      %2301 = vmatpush1.msra.mxu0 %v1508
      %2302 = vmatprep.subr.mxu0 %v1513
      %2303 = vmatpush1.msra.mxu0 %v1512
      %2304 = vmatprep.subr.mxu0 %v1517
      %2305 = vmatpush1.msra.mxu0 %v1516
      %2306 = vmatprep.subr.mxu0 %v1521
      %2307 = vmatpush1.msra.mxu0 %v1520
      %2308 = vmatprep.subr.mxu0 %v1525
      %2309 = vmatpush1.msra.mxu0 %v1524
      %2310 = vmatprep.subr.mxu0 %v1529
      %2311 = vmatpush1.msra.mxu0 %v1528
      %2312 = vmatprep.subr.mxu0 %v1533
      %2313 = vmatpush1.msra.mxu0 %v1532
      %2314 = vmatprep.subr.mxu0 %v1537
      %2315 = vmatpush1.msra.mxu0 %v1536
      %2316 = vmatprep.subr.mxu0 %v1541
      %2317 = vmatpush1.msra.mxu0 %v1540
      %2318 = vmatprep.subr.mxu0 %v1545
      %2319 = vmatpush1.msra.mxu0 %v1544
      %2320 = vmatprep.subr.mxu0 %v1549
      %2321 = vmatpush1.msra.mxu0 %v1548
      %2322 = vmatprep.subr.mxu0 %v1553
      %2323 = vmatpush1.msra.mxu0 %v1552
      %2324 = vmatprep.subr.mxu0 %v1557
      %2325 = vmatpush1.msra.mxu0 %v1556
      %2326 = vmatprep.subr.mxu0 %v1561
      %2327 = vmatpush1.msra.mxu0 %v1560
      %2328 = vmatprep.subr.mxu0 %v1565
      %2329 = vmatpush1.msra.mxu0 %v1564
      %2330 = vmatprep.subr.mxu0 %v1569
      %2331 = vmatpush1.msra.mxu0 %v1568
      %2332 = vmatprep.subr.mxu0 %v1573
      %2333 = vmatpush1.msra.mxu0 %v1572
      %2334 = vmatprep.subr.mxu0 %v1577
      %2335 = vmatpush1.msra.mxu0 %v1576
      %2336 = vmatprep.subr.mxu0 %v1581
      %2337 = vmatpush1.msra.mxu0 %v1580
      %2338 = vmatprep.mubr.f32.mxu0 %v637
      %2339 = vmatmul.mubr.f32.gmra.mrb[0].mxu0 %v635
      %v2340 = vpop.f32.mrb[0].mxu0
      %v2341 = vadd.f32 %v2270, %v2340
      %v2342 = vpop.f32.mrb[0].mxu0
      %v2343 = vadd.f32 %v2272, %v2342
      %2344 = vdwg.mxu0
      %2345 = vmatprep.subr.mxu0 %v1585
      %2346 = vmatpush1.msra.mxu0 %v1584
      %2347 = vmatprep.subr.mxu0 %v1589
      %2348 = vmatpush1.msra.mxu0 %v1588
      %2349 = vmatprep.subr.mxu0 %v1593
      %2350 = vmatpush1.msra.mxu0 %v1592
      %2351 = vmatprep.subr.mxu0 %v1597
      %2352 = vmatpush1.msra.mxu0 %v1596
      %2353 = vmatprep.subr.mxu0 %v1601
      %2354 = vmatpush1.msra.mxu0 %v1600
      %2355 = vmatprep.subr.mxu0 %v1605
      %2356 = vmatpush1.msra.mxu0 %v1604
      %2357 = vmatprep.subr.mxu0 %v1609
      %2358 = vmatpush1.msra.mxu0 %v1608
      %2359 = vmatprep.subr.mxu0 %v1613
      %2360 = vmatpush1.msra.mxu0 %v1612
      %2361 = vmatprep.subr.mxu0 %v1617
      %2362 = vmatpush1.msra.mxu0 %v1616
      %2363 = vmatprep.subr.mxu0 %v1621
      %2364 = vmatpush1.msra.mxu0 %v1620
      %2365 = vmatprep.subr.mxu0 %v1625
      %2366 = vmatpush1.msra.mxu0 %v1624
      %2367 = vmatprep.subr.mxu0 %v1629
      %2368 = vmatpush1.msra.mxu0 %v1628
      %2369 = vmatprep.subr.mxu0 %v1633
      %2370 = vmatpush1.msra.mxu0 %v1632
      %2371 = vmatprep.subr.mxu0 %v1637
      %2372 = vmatpush1.msra.mxu0 %v1636
      %2373 = vmatprep.subr.mxu0 %v1641
      %2374 = vmatpush1.msra.mxu0 %v1640
      %2375 = vmatprep.subr.mxu0 %v1645
      %2376 = vmatpush1.msra.mxu0 %v1644
      %2377 = vmatprep.subr.mxu0 %v1649
      %2378 = vmatpush1.msra.mxu0 %v1648
      %2379 = vmatprep.subr.mxu0 %v1653
      %2380 = vmatpush1.msra.mxu0 %v1652
      %2381 = vmatprep.subr.mxu0 %v1657
      %2382 = vmatpush1.msra.mxu0 %v1656
      %2383 = vmatprep.subr.mxu0 %v1661
      %2384 = vmatpush1.msra.mxu0 %v1660
      %2385 = vmatprep.subr.mxu0 %v1665
      %2386 = vmatpush1.msra.mxu0 %v1664
      %2387 = vmatprep.subr.mxu0 %v1669
      %2388 = vmatpush1.msra.mxu0 %v1668
      %2389 = vmatprep.subr.mxu0 %v1673
      %2390 = vmatpush1.msra.mxu0 %v1672
      %2391 = vmatprep.subr.mxu0 %v1677
      %2392 = vmatpush1.msra.mxu0 %v1676
      %2393 = vmatprep.subr.mxu0 %v1681
      %2394 = vmatpush1.msra.mxu0 %v1680
      %2395 = vmatprep.subr.mxu0 %v1685
      %2396 = vmatpush1.msra.mxu0 %v1684
      %2397 = vmatprep.subr.mxu0 %v1689
      %2398 = vmatpush1.msra.mxu0 %v1688
      %2399 = vmatprep.subr.mxu0 %v1693
      %2400 = vmatpush1.msra.mxu0 %v1692
      %2401 = vmatprep.subr.mxu0 %v1697
      %2402 = vmatpush1.msra.mxu0 %v1696
      %2403 = vmatprep.subr.mxu0 %v1701
      %2404 = vmatpush1.msra.mxu0 %v1700
      %2405 = vmatprep.subr.mxu0 %v1705
      %2406 = vmatpush1.msra.mxu0 %v1704
      %2407 = vmatprep.subr.mxu0 %v1709
      %2408 = vmatpush1.msra.mxu0 %v1708
      %2409 = vmatprep.mubr.f32.mxu0 %v708
      %2410 = vmatmul.mubr.f32.gmra.mrb[0].mxu0 %v706
      %v2411 = vpop.f32.mrb[0].mxu0
      %v2412 = vadd.f32 %v2341, %v2411
      %v2413 = vpop.f32.mrb[0].mxu0
      %v2414 = vadd.f32 %v2343, %v2413
      %2415 = vdwg.mxu0
      %2416 = vmatprep.subr.mxu0 %v1713
      %2417 = vmatpush1.msra.mxu0 %v1712
      %2418 = vmatprep.subr.mxu0 %v1717
      %2419 = vmatpush1.msra.mxu0 %v1716
      %2420 = vmatprep.subr.mxu0 %v1721
      %2421 = vmatpush1.msra.mxu0 %v1720
      %2422 = vmatprep.subr.mxu0 %v1725
      %2423 = vmatpush1.msra.mxu0 %v1724
      %2424 = vmatprep.subr.mxu0 %v1729
      %2425 = vmatpush1.msra.mxu0 %v1728
      %2426 = vmatprep.subr.mxu0 %v1733
      %2427 = vmatpush1.msra.mxu0 %v1732
      %2428 = vmatprep.subr.mxu0 %v1737
      %2429 = vmatpush1.msra.mxu0 %v1736
      %2430 = vmatprep.subr.mxu0 %v1741
      %2431 = vmatpush1.msra.mxu0 %v1740
      %2432 = vmatprep.subr.mxu0 %v1745
      %2433 = vmatpush1.msra.mxu0 %v1744
      %2434 = vmatprep.subr.mxu0 %v1749
      %2435 = vmatpush1.msra.mxu0 %v1748
      %2436 = vmatprep.subr.mxu0 %v1753
      %2437 = vmatpush1.msra.mxu0 %v1752
      %2438 = vmatprep.subr.mxu0 %v1757
      %2439 = vmatpush1.msra.mxu0 %v1756
      %2440 = vmatprep.subr.mxu0 %v1761
      %2441 = vmatpush1.msra.mxu0 %v1760
      %2442 = vmatprep.subr.mxu0 %v1765
      %2443 = vmatpush1.msra.mxu0 %v1764
      %2444 = vmatprep.subr.mxu0 %v1769
      %2445 = vmatpush1.msra.mxu0 %v1768
      %2446 = vmatprep.subr.mxu0 %v1773
      %2447 = vmatpush1.msra.mxu0 %v1772
      %2448 = vmatprep.subr.mxu0 %v1777
      %2449 = vmatpush1.msra.mxu0 %v1776
      %2450 = vmatprep.subr.mxu0 %v1781
      %2451 = vmatpush1.msra.mxu0 %v1780
      %2452 = vmatprep.subr.mxu0 %v1785
      %2453 = vmatpush1.msra.mxu0 %v1784
      %2454 = vmatprep.subr.mxu0 %v1789
      %2455 = vmatpush1.msra.mxu0 %v1788
      %2456 = vmatprep.subr.mxu0 %v1793
      %2457 = vmatpush1.msra.mxu0 %v1792
      %2458 = vmatprep.subr.mxu0 %v1797
      %2459 = vmatpush1.msra.mxu0 %v1796
      %2460 = vmatprep.subr.mxu0 %v1801
      %2461 = vmatpush1.msra.mxu0 %v1800
      %2462 = vmatprep.subr.mxu0 %v1805
      %2463 = vmatpush1.msra.mxu0 %v1804
      %2464 = vmatprep.subr.mxu0 %v1809
      %2465 = vmatpush1.msra.mxu0 %v1808
      %2466 = vmatprep.subr.mxu0 %v1813
      %2467 = vmatpush1.msra.mxu0 %v1812
      %2468 = vmatprep.subr.mxu0 %v1817
      %2469 = vmatpush1.msra.mxu0 %v1816
      %2470 = vmatprep.subr.mxu0 %v1821
      %2471 = vmatpush1.msra.mxu0 %v1820
      %2472 = vmatprep.subr.mxu0 %v1825
      %2473 = vmatpush1.msra.mxu0 %v1824
      %2474 = vmatprep.subr.mxu0 %v1829
      %2475 = vmatpush1.msra.mxu0 %v1828
      %2476 = vmatprep.subr.mxu0 %v1833
      %2477 = vmatpush1.msra.mxu0 %v1832
      %2478 = vmatprep.subr.mxu0 %v1837
      %2479 = vmatpush1.msra.mxu0 %v1836
      %2480 = vmatprep.mubr.f32.mxu0 %v779
      %2481 = vmatmul.mubr.f32.gmra.mrb[0].mxu0 %v777
      %v2482 = vpop.f32.mrb[0].mxu0
      %v2483 = vadd.f32 %v2412, %v2482
      %v2484 = vpop.f32.mrb[0].mxu0
      %v2485 = vadd.f32 %v2414, %v2484
      %2486 = vdwg.mxu0
      %2487 = vmatprep.subr.mxu0 %v1841
      %2488 = vmatpush1.msra.mxu0 %v1840
      %2489 = vmatprep.subr.mxu0 %v1845
      %2490 = vmatpush1.msra.mxu0 %v1844
      %2491 = vmatprep.subr.mxu0 %v1849
      %2492 = vmatpush1.msra.mxu0 %v1848
      %2493 = vmatprep.subr.mxu0 %v1853
      %2494 = vmatpush1.msra.mxu0 %v1852
      %2495 = vmatprep.subr.mxu0 %v1857
      %2496 = vmatpush1.msra.mxu0 %v1856
      %2497 = vmatprep.subr.mxu0 %v1861
      %2498 = vmatpush1.msra.mxu0 %v1860
      %2499 = vmatprep.subr.mxu0 %v1865
      %2500 = vmatpush1.msra.mxu0 %v1864
      %2501 = vmatprep.subr.mxu0 %v1869
      %2502 = vmatpush1.msra.mxu0 %v1868
      %2503 = vmatprep.subr.mxu0 %v1873
      %2504 = vmatpush1.msra.mxu0 %v1872
      %2505 = vmatprep.subr.mxu0 %v1877
      %2506 = vmatpush1.msra.mxu0 %v1876
      %2507 = vmatprep.subr.mxu0 %v1881
      %2508 = vmatpush1.msra.mxu0 %v1880
      %2509 = vmatprep.subr.mxu0 %v1885
      %2510 = vmatpush1.msra.mxu0 %v1884
      %2511 = vmatprep.subr.mxu0 %v1889
      %2512 = vmatpush1.msra.mxu0 %v1888
      %2513 = vmatprep.subr.mxu0 %v1893
      %2514 = vmatpush1.msra.mxu0 %v1892
      %2515 = vmatprep.subr.mxu0 %v1897
      %2516 = vmatpush1.msra.mxu0 %v1896
      %2517 = vmatprep.subr.mxu0 %v1901
      %2518 = vmatpush1.msra.mxu0 %v1900
      %2519 = vmatprep.subr.mxu0 %v1905
      %2520 = vmatpush1.msra.mxu0 %v1904
      %2521 = vmatprep.subr.mxu0 %v1909
      %2522 = vmatpush1.msra.mxu0 %v1908
      %2523 = vmatprep.subr.mxu0 %v1913
      %2524 = vmatpush1.msra.mxu0 %v1912
      %2525 = vmatprep.subr.mxu0 %v1917
      %2526 = vmatpush1.msra.mxu0 %v1916
      %2527 = vmatprep.subr.mxu0 %v1921
      %2528 = vmatpush1.msra.mxu0 %v1920
      %2529 = vmatprep.subr.mxu0 %v1925
      %2530 = vmatpush1.msra.mxu0 %v1924
      %2531 = vmatprep.subr.mxu0 %v1929
      %2532 = vmatpush1.msra.mxu0 %v1928
      %2533 = vmatprep.subr.mxu0 %v1933
      %2534 = vmatpush1.msra.mxu0 %v1932
      %2535 = vmatprep.subr.mxu0 %v1937
      %2536 = vmatpush1.msra.mxu0 %v1936
      %2537 = vmatprep.subr.mxu0 %v1941
      %2538 = vmatpush1.msra.mxu0 %v1940
      %2539 = vmatprep.subr.mxu0 %v1945
      %2540 = vmatpush1.msra.mxu0 %v1944
      %2541 = vmatprep.subr.mxu0 %v1949
      %2542 = vmatpush1.msra.mxu0 %v1948
      %2543 = vmatprep.subr.mxu0 %v1953
      %2544 = vmatpush1.msra.mxu0 %v1952
      %2545 = vmatprep.subr.mxu0 %v1957
      %2546 = vmatpush1.msra.mxu0 %v1956
      %2547 = vmatprep.subr.mxu0 %v1961
      %2548 = vmatpush1.msra.mxu0 %v1960
      %2549 = vmatprep.subr.mxu0 %v1965
      %2550 = vmatpush1.msra.mxu0 %v1964
      %2551 = vmatprep.mubr.f32.mxu0 %v850
      %2552 = vmatmul.mubr.f32.gmra.mrb[0].mxu0 %v848
      %v2553 = vpop.f32.mrb[0].mxu0
      %v2554 = vadd.f32 %v2483, %v2553
      %v2555 = vpop.f32.mrb[0].mxu0
      %v2556 = vadd.f32 %v2485, %v2555
      %2557 = vdwg.mxu0
      %2558 = vmatprep.subr.mxu0 %v947
      %2559 = vmatpush1.msra.mxu0 %v946
      %2560 = vmatprep.subr.mxu0 %v951
      %2561 = vmatpush1.msra.mxu0 %v950
      %2562 = vmatprep.subr.mxu0 %v955
      %2563 = vmatpush1.msra.mxu0 %v954
      %2564 = vmatprep.subr.mxu0 %v959
      %2565 = vmatpush1.msra.mxu0 %v958
      %2566 = vmatprep.subr.mxu0 %v963
      %2567 = vmatpush1.msra.mxu0 %v962
      %2568 = vmatprep.subr.mxu0 %v967
      %2569 = vmatpush1.msra.mxu0 %v966
      %2570 = vmatprep.subr.mxu0 %v971
      %2571 = vmatpush1.msra.mxu0 %v970
      %2572 = vmatprep.subr.mxu0 %v975
      %2573 = vmatpush1.msra.mxu0 %v974
      %2574 = vmatprep.subr.mxu0 %v979
      %2575 = vmatpush1.msra.mxu0 %v978
      %2576 = vmatprep.subr.mxu0 %v983
      %2577 = vmatpush1.msra.mxu0 %v982
      %2578 = vmatprep.subr.mxu0 %v987
      %2579 = vmatpush1.msra.mxu0 %v986
      %2580 = vmatprep.subr.mxu0 %v991
      %2581 = vmatpush1.msra.mxu0 %v990
      %2582 = vmatprep.subr.mxu0 %v995
      %2583 = vmatpush1.msra.mxu0 %v994
      %2584 = vmatprep.subr.mxu0 %v999
      %2585 = vmatpush1.msra.mxu0 %v998
      %2586 = vmatprep.subr.mxu0 %v1003
      %2587 = vmatpush1.msra.mxu0 %v1002
      %2588 = vmatprep.subr.mxu0 %v1007
      %2589 = vmatpush1.msra.mxu0 %v1006
      %2590 = vmatprep.subr.mxu0 %v1011
      %2591 = vmatpush1.msra.mxu0 %v1010
      %2592 = vmatprep.subr.mxu0 %v1015
      %2593 = vmatpush1.msra.mxu0 %v1014
      %2594 = vmatprep.subr.mxu0 %v1019
      %2595 = vmatpush1.msra.mxu0 %v1018
      %2596 = vmatprep.subr.mxu0 %v1023
      %2597 = vmatpush1.msra.mxu0 %v1022
      %2598 = vmatprep.subr.mxu0 %v1027
      %2599 = vmatpush1.msra.mxu0 %v1026
      %2600 = vmatprep.subr.mxu0 %v1031
      %2601 = vmatpush1.msra.mxu0 %v1030
      %2602 = vmatprep.subr.mxu0 %v1035
      %2603 = vmatpush1.msra.mxu0 %v1034
      %2604 = vmatprep.subr.mxu0 %v1039
      %2605 = vmatpush1.msra.mxu0 %v1038
      %2606 = vmatprep.subr.mxu0 %v1043
      %2607 = vmatpush1.msra.mxu0 %v1042
      %2608 = vmatprep.subr.mxu0 %v1047
      %2609 = vmatpush1.msra.mxu0 %v1046
      %2610 = vmatprep.subr.mxu0 %v1051
      %2611 = vmatpush1.msra.mxu0 %v1050
      %2612 = vmatprep.subr.mxu0 %v1055
      %2613 = vmatpush1.msra.mxu0 %v1054
      %2614 = vmatprep.subr.mxu0 %v1059
      %2615 = vmatpush1.msra.mxu0 %v1058
      %2616 = vmatprep.subr.mxu0 %v1063
      %2617 = vmatpush1.msra.mxu0 %v1062
      %2618 = vmatprep.subr.mxu0 %v1067
      %2619 = vmatpush1.msra.mxu0 %v1066
      %2620 = vmatprep.subr.mxu0 %v1071
      %2621 = vmatpush1.msra.mxu0 %v1070
      %2622 = vmatprep.mubr.f32.mxu0 %v353
      %2623 = vmatmul.mubr.f32.gmra.mrb[0].mxu0 %v351
      %v2624 = vpop.f32.mrb[0].mxu0
      %v2625 = vadd.f32 %v1981, %v2624
      %v2626 = vpop.f32.mrb[0].mxu0
      %v2627 = vadd.f32 %v1985, %v2626
      %2628 = vdwg.mxu0
      %2629 = vmatprep.subr.mxu0 %v1075
      %2630 = vmatpush1.msra.mxu0 %v1074
      %2631 = vmatprep.subr.mxu0 %v1079
      %2632 = vmatpush1.msra.mxu0 %v1078
      %2633 = vmatprep.subr.mxu0 %v1083
      %2634 = vmatpush1.msra.mxu0 %v1082
      %2635 = vmatprep.subr.mxu0 %v1087
      %2636 = vmatpush1.msra.mxu0 %v1086
      %2637 = vmatprep.subr.mxu0 %v1091
      %2638 = vmatpush1.msra.mxu0 %v1090
      %2639 = vmatprep.subr.mxu0 %v1095
      %2640 = vmatpush1.msra.mxu0 %v1094
      %2641 = vmatprep.subr.mxu0 %v1099
      %2642 = vmatpush1.msra.mxu0 %v1098
      %2643 = vmatprep.subr.mxu0 %v1103
      %2644 = vmatpush1.msra.mxu0 %v1102
      %2645 = vmatprep.subr.mxu0 %v1107
      %2646 = vmatpush1.msra.mxu0 %v1106
      %2647 = vmatprep.subr.mxu0 %v1111
      %2648 = vmatpush1.msra.mxu0 %v1110
      %2649 = vmatprep.subr.mxu0 %v1115
      %2650 = vmatpush1.msra.mxu0 %v1114
      %2651 = vmatprep.subr.mxu0 %v1119
      %2652 = vmatpush1.msra.mxu0 %v1118
      %2653 = vmatprep.subr.mxu0 %v1123
      %2654 = vmatpush1.msra.mxu0 %v1122
      %2655 = vmatprep.subr.mxu0 %v1127
      %2656 = vmatpush1.msra.mxu0 %v1126
      %2657 = vmatprep.subr.mxu0 %v1131
      %2658 = vmatpush1.msra.mxu0 %v1130
      %2659 = vmatprep.subr.mxu0 %v1135
      %2660 = vmatpush1.msra.mxu0 %v1134
      %2661 = vmatprep.subr.mxu0 %v1139
      %2662 = vmatpush1.msra.mxu0 %v1138
      %2663 = vmatprep.subr.mxu0 %v1143
      %2664 = vmatpush1.msra.mxu0 %v1142
      %2665 = vmatprep.subr.mxu0 %v1147
      %2666 = vmatpush1.msra.mxu0 %v1146
      %2667 = vmatprep.subr.mxu0 %v1151
      %2668 = vmatpush1.msra.mxu0 %v1150
      %2669 = vmatprep.subr.mxu0 %v1155
      %2670 = vmatpush1.msra.mxu0 %v1154
      %2671 = vmatprep.subr.mxu0 %v1159
      %2672 = vmatpush1.msra.mxu0 %v1158
      %2673 = vmatprep.subr.mxu0 %v1163
      %2674 = vmatpush1.msra.mxu0 %v1162
      %2675 = vmatprep.subr.mxu0 %v1167
      %2676 = vmatpush1.msra.mxu0 %v1166
      %2677 = vmatprep.subr.mxu0 %v1171
      %2678 = vmatpush1.msra.mxu0 %v1170
      %2679 = vmatprep.subr.mxu0 %v1175
      %2680 = vmatpush1.msra.mxu0 %v1174
      %2681 = vmatprep.subr.mxu0 %v1179
      %2682 = vmatpush1.msra.mxu0 %v1178
      %2683 = vmatprep.subr.mxu0 %v1183
      %2684 = vmatpush1.msra.mxu0 %v1182
      %2685 = vmatprep.subr.mxu0 %v1187
      %2686 = vmatpush1.msra.mxu0 %v1186
      %2687 = vmatprep.subr.mxu0 %v1191
      %2688 = vmatpush1.msra.mxu0 %v1190
      %2689 = vmatprep.subr.mxu0 %v1195
      %2690 = vmatpush1.msra.mxu0 %v1194
      %2691 = vmatprep.subr.mxu0 %v1199
      %2692 = vmatpush1.msra.mxu0 %v1198
      %2693 = vmatprep.mubr.f32.mxu0 %v424
      %2694 = vmatmul.mubr.f32.gmra.mrb[0].mxu0 %v422
      %v2695 = vpop.f32.mrb[0].mxu0
      %v2696 = vadd.f32 %v2625, %v2695
      %v2697 = vpop.f32.mrb[0].mxu0
      %v2698 = vadd.f32 %v2627, %v2697
      %2699 = vdwg.mxu0
      %2700 = vmatprep.subr.mxu0 %v1203
      %2701 = vmatpush1.msra.mxu0 %v1202
      %2702 = vmatprep.subr.mxu0 %v1207
      %2703 = vmatpush1.msra.mxu0 %v1206
      %2704 = vmatprep.subr.mxu0 %v1211
      %2705 = vmatpush1.msra.mxu0 %v1210
      %2706 = vmatprep.subr.mxu0 %v1215
      %2707 = vmatpush1.msra.mxu0 %v1214
      %2708 = vmatprep.subr.mxu0 %v1219
      %2709 = vmatpush1.msra.mxu0 %v1218
      %2710 = vmatprep.subr.mxu0 %v1223
      %2711 = vmatpush1.msra.mxu0 %v1222
      %2712 = vmatprep.subr.mxu0 %v1227
      %2713 = vmatpush1.msra.mxu0 %v1226
      %2714 = vmatprep.subr.mxu0 %v1231
      %2715 = vmatpush1.msra.mxu0 %v1230
      %2716 = vmatprep.subr.mxu0 %v1235
      %2717 = vmatpush1.msra.mxu0 %v1234
      %2718 = vmatprep.subr.mxu0 %v1239
      %2719 = vmatpush1.msra.mxu0 %v1238
      %2720 = vmatprep.subr.mxu0 %v1243
      %2721 = vmatpush1.msra.mxu0 %v1242
      %2722 = vmatprep.subr.mxu0 %v1247
      %2723 = vmatpush1.msra.mxu0 %v1246
      %2724 = vmatprep.subr.mxu0 %v1251
      %2725 = vmatpush1.msra.mxu0 %v1250
      %2726 = vmatprep.subr.mxu0 %v1255
      %2727 = vmatpush1.msra.mxu0 %v1254
      %2728 = vmatprep.subr.mxu0 %v1259
      %2729 = vmatpush1.msra.mxu0 %v1258
      %2730 = vmatprep.subr.mxu0 %v1263
      %2731 = vmatpush1.msra.mxu0 %v1262
      %2732 = vmatprep.subr.mxu0 %v1267
      %2733 = vmatpush1.msra.mxu0 %v1266
      %2734 = vmatprep.subr.mxu0 %v1271
      %2735 = vmatpush1.msra.mxu0 %v1270
      %2736 = vmatprep.subr.mxu0 %v1275
      %2737 = vmatpush1.msra.mxu0 %v1274
      %2738 = vmatprep.subr.mxu0 %v1279
      %2739 = vmatpush1.msra.mxu0 %v1278
      %2740 = vmatprep.subr.mxu0 %v1283
      %2741 = vmatpush1.msra.mxu0 %v1282
      %2742 = vmatprep.subr.mxu0 %v1287
      %2743 = vmatpush1.msra.mxu0 %v1286
      %2744 = vmatprep.subr.mxu0 %v1291
      %2745 = vmatpush1.msra.mxu0 %v1290
      %2746 = vmatprep.subr.mxu0 %v1295
      %2747 = vmatpush1.msra.mxu0 %v1294
      %2748 = vmatprep.subr.mxu0 %v1299
      %2749 = vmatpush1.msra.mxu0 %v1298
      %2750 = vmatprep.subr.mxu0 %v1303
      %2751 = vmatpush1.msra.mxu0 %v1302
      %2752 = vmatprep.subr.mxu0 %v1307
      %2753 = vmatpush1.msra.mxu0 %v1306
      %2754 = vmatprep.subr.mxu0 %v1311
      %2755 = vmatpush1.msra.mxu0 %v1310
      %2756 = vmatprep.subr.mxu0 %v1315
      %2757 = vmatpush1.msra.mxu0 %v1314
      %2758 = vmatprep.subr.mxu0 %v1319
      %2759 = vmatpush1.msra.mxu0 %v1318
      %2760 = vmatprep.subr.mxu0 %v1323
      %2761 = vmatpush1.msra.mxu0 %v1322
      %2762 = vmatprep.subr.mxu0 %v1327
      %2763 = vmatpush1.msra.mxu0 %v1326
      %2764 = vmatprep.mubr.f32.mxu0 %v495
      %2765 = vmatmul.mubr.f32.gmra.mrb[0].mxu0 %v493
      %v2766 = vpop.f32.mrb[0].mxu0
      %v2767 = vadd.f32 %v2696, %v2766
      %v2768 = vpop.f32.mrb[0].mxu0
      %v2769 = vadd.f32 %v2698, %v2768
      %2770 = vdwg.mxu0
      %2771 = vmatprep.subr.mxu0 %v1331
      %2772 = vmatpush1.msra.mxu0 %v1330
      %2773 = vmatprep.subr.mxu0 %v1335
      %2774 = vmatpush1.msra.mxu0 %v1334
      %2775 = vmatprep.subr.mxu0 %v1339
      %2776 = vmatpush1.msra.mxu0 %v1338
      %2777 = vmatprep.subr.mxu0 %v1343
      %2778 = vmatpush1.msra.mxu0 %v1342
      %2779 = vmatprep.subr.mxu0 %v1347
      %2780 = vmatpush1.msra.mxu0 %v1346
      %2781 = vmatprep.subr.mxu0 %v1351
      %2782 = vmatpush1.msra.mxu0 %v1350
      %2783 = vmatprep.subr.mxu0 %v1355
      %2784 = vmatpush1.msra.mxu0 %v1354
      %2785 = vmatprep.subr.mxu0 %v1359
      %2786 = vmatpush1.msra.mxu0 %v1358
      %2787 = vmatprep.subr.mxu0 %v1363
      %2788 = vmatpush1.msra.mxu0 %v1362
      %2789 = vmatprep.subr.mxu0 %v1367
      %2790 = vmatpush1.msra.mxu0 %v1366
      %2791 = vmatprep.subr.mxu0 %v1371
      %2792 = vmatpush1.msra.mxu0 %v1370
      %2793 = vmatprep.subr.mxu0 %v1375
      %2794 = vmatpush1.msra.mxu0 %v1374
      %2795 = vmatprep.subr.mxu0 %v1379
      %2796 = vmatpush1.msra.mxu0 %v1378
      %2797 = vmatprep.subr.mxu0 %v1383
      %2798 = vmatpush1.msra.mxu0 %v1382
      %2799 = vmatprep.subr.mxu0 %v1387
      %2800 = vmatpush1.msra.mxu0 %v1386
      %2801 = vmatprep.subr.mxu0 %v1391
      %2802 = vmatpush1.msra.mxu0 %v1390
      %2803 = vmatprep.subr.mxu0 %v1395
      %2804 = vmatpush1.msra.mxu0 %v1394
      %2805 = vmatprep.subr.mxu0 %v1399
      %2806 = vmatpush1.msra.mxu0 %v1398
      %2807 = vmatprep.subr.mxu0 %v1403
      %2808 = vmatpush1.msra.mxu0 %v1402
      %2809 = vmatprep.subr.mxu0 %v1407
      %2810 = vmatpush1.msra.mxu0 %v1406
      %2811 = vmatprep.subr.mxu0 %v1411
      %2812 = vmatpush1.msra.mxu0 %v1410
      %2813 = vmatprep.subr.mxu0 %v1415
      %2814 = vmatpush1.msra.mxu0 %v1414
      %2815 = vmatprep.subr.mxu0 %v1419
      %2816 = vmatpush1.msra.mxu0 %v1418
      %2817 = vmatprep.subr.mxu0 %v1423
      %2818 = vmatpush1.msra.mxu0 %v1422
      %2819 = vmatprep.subr.mxu0 %v1427
      %2820 = vmatpush1.msra.mxu0 %v1426
      %2821 = vmatprep.subr.mxu0 %v1431
      %2822 = vmatpush1.msra.mxu0 %v1430
      %2823 = vmatprep.subr.mxu0 %v1435
      %2824 = vmatpush1.msra.mxu0 %v1434
      %2825 = vmatprep.subr.mxu0 %v1439
      %2826 = vmatpush1.msra.mxu0 %v1438
      %2827 = vmatprep.subr.mxu0 %v1443
      %2828 = vmatpush1.msra.mxu0 %v1442
      %2829 = vmatprep.subr.mxu0 %v1447
      %2830 = vmatpush1.msra.mxu0 %v1446
      %2831 = vmatprep.subr.mxu0 %v1451
      %2832 = vmatpush1.msra.mxu0 %v1450
      %2833 = vmatprep.subr.mxu0 %v1455
      %2834 = vmatpush1.msra.mxu0 %v1454
      %2835 = vmatprep.mubr.f32.mxu0 %v566
      %2836 = vmatmul.mubr.f32.gmra.mrb[0].mxu0 %v564
      %v2837 = vpop.f32.mrb[0].mxu0
      %v2838 = vadd.f32 %v2767, %v2837
      %v2839 = vpop.f32.mrb[0].mxu0
      %v2840 = vadd.f32 %v2769, %v2839
      %2841 = vdwg.mxu0
      %2842 = vmatprep.subr.mxu0 %v1459
      %2843 = vmatpush1.msra.mxu0 %v1458
      %2844 = vmatprep.subr.mxu0 %v1463
      %2845 = vmatpush1.msra.mxu0 %v1462
      %2846 = vmatprep.subr.mxu0 %v1467
      %2847 = vmatpush1.msra.mxu0 %v1466
      %2848 = vmatprep.subr.mxu0 %v1471
      %2849 = vmatpush1.msra.mxu0 %v1470
      %2850 = vmatprep.subr.mxu0 %v1475
      %2851 = vmatpush1.msra.mxu0 %v1474
      %2852 = vmatprep.subr.mxu0 %v1479
      %2853 = vmatpush1.msra.mxu0 %v1478
      %2854 = vmatprep.subr.mxu0 %v1483
      %2855 = vmatpush1.msra.mxu0 %v1482
      %2856 = vmatprep.subr.mxu0 %v1487
      %2857 = vmatpush1.msra.mxu0 %v1486
      %2858 = vmatprep.subr.mxu0 %v1491
      %2859 = vmatpush1.msra.mxu0 %v1490
      %2860 = vmatprep.subr.mxu0 %v1495
      %2861 = vmatpush1.msra.mxu0 %v1494
      %2862 = vmatprep.subr.mxu0 %v1499
      %2863 = vmatpush1.msra.mxu0 %v1498
      %2864 = vmatprep.subr.mxu0 %v1503
      %2865 = vmatpush1.msra.mxu0 %v1502
      %2866 = vmatprep.subr.mxu0 %v1507
      %2867 = vmatpush1.msra.mxu0 %v1506
      %2868 = vmatprep.subr.mxu0 %v1511
      %2869 = vmatpush1.msra.mxu0 %v1510
      %2870 = vmatprep.subr.mxu0 %v1515
      %2871 = vmatpush1.msra.mxu0 %v1514
      %2872 = vmatprep.subr.mxu0 %v1519
      %2873 = vmatpush1.msra.mxu0 %v1518
      %2874 = vmatprep.subr.mxu0 %v1523
      %2875 = vmatpush1.msra.mxu0 %v1522
      %2876 = vmatprep.subr.mxu0 %v1527
      %2877 = vmatpush1.msra.mxu0 %v1526
      %2878 = vmatprep.subr.mxu0 %v1531
      %2879 = vmatpush1.msra.mxu0 %v1530
      %2880 = vmatprep.subr.mxu0 %v1535
      %2881 = vmatpush1.msra.mxu0 %v1534
      %2882 = vmatprep.subr.mxu0 %v1539
      %2883 = vmatpush1.msra.mxu0 %v1538
      %2884 = vmatprep.subr.mxu0 %v1543
      %2885 = vmatpush1.msra.mxu0 %v1542
      %2886 = vmatprep.subr.mxu0 %v1547
      %2887 = vmatpush1.msra.mxu0 %v1546
      %2888 = vmatprep.subr.mxu0 %v1551
      %2889 = vmatpush1.msra.mxu0 %v1550
      %2890 = vmatprep.subr.mxu0 %v1555
      %2891 = vmatpush1.msra.mxu0 %v1554
      %2892 = vmatprep.subr.mxu0 %v1559
      %2893 = vmatpush1.msra.mxu0 %v1558
      %2894 = vmatprep.subr.mxu0 %v1563
      %2895 = vmatpush1.msra.mxu0 %v1562
      %2896 = vmatprep.subr.mxu0 %v1567
      %2897 = vmatpush1.msra.mxu0 %v1566
      %2898 = vmatprep.subr.mxu0 %v1571
      %2899 = vmatpush1.msra.mxu0 %v1570
      %2900 = vmatprep.subr.mxu0 %v1575
      %2901 = vmatpush1.msra.mxu0 %v1574
      %2902 = vmatprep.subr.mxu0 %v1579
      %2903 = vmatpush1.msra.mxu0 %v1578
      %2904 = vmatprep.subr.mxu0 %v1583
      %2905 = vmatpush1.msra.mxu0 %v1582
      %2906 = vmatprep.mubr.f32.mxu0 %v637
      %2907 = vmatmul.mubr.f32.gmra.mrb[0].mxu0 %v635
      %v2908 = vpop.f32.mrb[0].mxu0
      %v2909 = vadd.f32 %v2838, %v2908
      %v2910 = vpop.f32.mrb[0].mxu0
      %v2911 = vadd.f32 %v2840, %v2910
      %2912 = vdwg.mxu0
      %2913 = vmatprep.subr.mxu0 %v1587
      %2914 = vmatpush1.msra.mxu0 %v1586
      %2915 = vmatprep.subr.mxu0 %v1591
      %2916 = vmatpush1.msra.mxu0 %v1590
      %2917 = vmatprep.subr.mxu0 %v1595
      %2918 = vmatpush1.msra.mxu0 %v1594
      %2919 = vmatprep.subr.mxu0 %v1599
      %2920 = vmatpush1.msra.mxu0 %v1598
      %2921 = vmatprep.subr.mxu0 %v1603
      %2922 = vmatpush1.msra.mxu0 %v1602
      %2923 = vmatprep.subr.mxu0 %v1607
      %2924 = vmatpush1.msra.mxu0 %v1606
      %2925 = vmatprep.subr.mxu0 %v1611
      %2926 = vmatpush1.msra.mxu0 %v1610
      %2927 = vmatprep.subr.mxu0 %v1615
      %2928 = vmatpush1.msra.mxu0 %v1614
      %2929 = vmatprep.subr.mxu0 %v1619
      %2930 = vmatpush1.msra.mxu0 %v1618
      %2931 = vmatprep.subr.mxu0 %v1623
      %2932 = vmatpush1.msra.mxu0 %v1622
      %2933 = vmatprep.subr.mxu0 %v1627
      %2934 = vmatpush1.msra.mxu0 %v1626
      %2935 = vmatprep.subr.mxu0 %v1631
      %2936 = vmatpush1.msra.mxu0 %v1630
      %2937 = vmatprep.subr.mxu0 %v1635
      %2938 = vmatpush1.msra.mxu0 %v1634
      %2939 = vmatprep.subr.mxu0 %v1639
      %2940 = vmatpush1.msra.mxu0 %v1638
      %2941 = vmatprep.subr.mxu0 %v1643
      %2942 = vmatpush1.msra.mxu0 %v1642
      %2943 = vmatprep.subr.mxu0 %v1647
      %2944 = vmatpush1.msra.mxu0 %v1646
      %2945 = vmatprep.subr.mxu0 %v1651
      %2946 = vmatpush1.msra.mxu0 %v1650
      %2947 = vmatprep.subr.mxu0 %v1655
      %2948 = vmatpush1.msra.mxu0 %v1654
      %2949 = vmatprep.subr.mxu0 %v1659
      %2950 = vmatpush1.msra.mxu0 %v1658
      %2951 = vmatprep.subr.mxu0 %v1663
      %2952 = vmatpush1.msra.mxu0 %v1662
      %2953 = vmatprep.subr.mxu0 %v1667
      %2954 = vmatpush1.msra.mxu0 %v1666
      %2955 = vmatprep.subr.mxu0 %v1671
      %2956 = vmatpush1.msra.mxu0 %v1670
      %2957 = vmatprep.subr.mxu0 %v1675
      %2958 = vmatpush1.msra.mxu0 %v1674
      %2959 = vmatprep.subr.mxu0 %v1679
      %2960 = vmatpush1.msra.mxu0 %v1678
      %2961 = vmatprep.subr.mxu0 %v1683
      %2962 = vmatpush1.msra.mxu0 %v1682
      %2963 = vmatprep.subr.mxu0 %v1687
      %2964 = vmatpush1.msra.mxu0 %v1686
      %2965 = vmatprep.subr.mxu0 %v1691
      %2966 = vmatpush1.msra.mxu0 %v1690
      %2967 = vmatprep.subr.mxu0 %v1695
      %2968 = vmatpush1.msra.mxu0 %v1694
      %2969 = vmatprep.subr.mxu0 %v1699
      %2970 = vmatpush1.msra.mxu0 %v1698
      %2971 = vmatprep.subr.mxu0 %v1703
      %2972 = vmatpush1.msra.mxu0 %v1702
      %2973 = vmatprep.subr.mxu0 %v1707
      %2974 = vmatpush1.msra.mxu0 %v1706
      %2975 = vmatprep.subr.mxu0 %v1711
      %2976 = vmatpush1.msra.mxu0 %v1710
      %2977 = vmatprep.mubr.f32.mxu0 %v708
      %2978 = vmatmul.mubr.f32.gmra.mrb[0].mxu0 %v706
      %v2979 = vpop.f32.mrb[0].mxu0
      %v2980 = vadd.f32 %v2909, %v2979
      %v2981 = vpop.f32.mrb[0].mxu0
      %v2982 = vadd.f32 %v2911, %v2981
      %2983 = vdwg.mxu0
      %2984 = vmatprep.subr.mxu0 %v1715
      %2985 = vmatpush1.msra.mxu0 %v1714
      %2986 = vmatprep.subr.mxu0 %v1719
      %2987 = vmatpush1.msra.mxu0 %v1718
      %2988 = vmatprep.subr.mxu0 %v1723
      %2989 = vmatpush1.msra.mxu0 %v1722
      %2990 = vmatprep.subr.mxu0 %v1727
      %2991 = vmatpush1.msra.mxu0 %v1726
      %2992 = vmatprep.subr.mxu0 %v1731
      %2993 = vmatpush1.msra.mxu0 %v1730
      %2994 = vmatprep.subr.mxu0 %v1735
      %2995 = vmatpush1.msra.mxu0 %v1734
      %2996 = vmatprep.subr.mxu0 %v1739
      %2997 = vmatpush1.msra.mxu0 %v1738
      %2998 = vmatprep.subr.mxu0 %v1743
      %2999 = vmatpush1.msra.mxu0 %v1742
      %3000 = vmatprep.subr.mxu0 %v1747
      %3001 = vmatpush1.msra.mxu0 %v1746
      %3002 = vmatprep.subr.mxu0 %v1751
      %3003 = vmatpush1.msra.mxu0 %v1750
      %3004 = vmatprep.subr.mxu0 %v1755
      %3005 = vmatpush1.msra.mxu0 %v1754
      %3006 = vmatprep.subr.mxu0 %v1759
      %3007 = vmatpush1.msra.mxu0 %v1758
      %3008 = vmatprep.subr.mxu0 %v1763
      %3009 = vmatpush1.msra.mxu0 %v1762
      %3010 = vmatprep.subr.mxu0 %v1767
      %3011 = vmatpush1.msra.mxu0 %v1766
      %3012 = vmatprep.subr.mxu0 %v1771
      %3013 = vmatpush1.msra.mxu0 %v1770
      %3014 = vmatprep.subr.mxu0 %v1775
      %3015 = vmatpush1.msra.mxu0 %v1774
      %3016 = vmatprep.subr.mxu0 %v1779
      %3017 = vmatpush1.msra.mxu0 %v1778
      %3018 = vmatprep.subr.mxu0 %v1783
      %3019 = vmatpush1.msra.mxu0 %v1782
      %3020 = vmatprep.subr.mxu0 %v1787
      %3021 = vmatpush1.msra.mxu0 %v1786
      %3022 = vmatprep.subr.mxu0 %v1791
      %3023 = vmatpush1.msra.mxu0 %v1790
      %3024 = vmatprep.subr.mxu0 %v1795
      %3025 = vmatpush1.msra.mxu0 %v1794
      %3026 = vmatprep.subr.mxu0 %v1799
      %3027 = vmatpush1.msra.mxu0 %v1798
      %3028 = vmatprep.subr.mxu0 %v1803
      %3029 = vmatpush1.msra.mxu0 %v1802
      %3030 = vmatprep.subr.mxu0 %v1807
      %3031 = vmatpush1.msra.mxu0 %v1806
      %3032 = vmatprep.subr.mxu0 %v1811
      %3033 = vmatpush1.msra.mxu0 %v1810
      %3034 = vmatprep.subr.mxu0 %v1815
      %3035 = vmatpush1.msra.mxu0 %v1814
      %3036 = vmatprep.subr.mxu0 %v1819
      %3037 = vmatpush1.msra.mxu0 %v1818
      %3038 = vmatprep.subr.mxu0 %v1823
      %3039 = vmatpush1.msra.mxu0 %v1822
      %3040 = vmatprep.subr.mxu0 %v1827
      %3041 = vmatpush1.msra.mxu0 %v1826
      %3042 = vmatprep.subr.mxu0 %v1831
      %3043 = vmatpush1.msra.mxu0 %v1830
      %3044 = vmatprep.subr.mxu0 %v1835
      %3045 = vmatpush1.msra.mxu0 %v1834
      %3046 = vmatprep.subr.mxu0 %v1839
      %3047 = vmatpush1.msra.mxu0 %v1838
      %3048 = vmatprep.mubr.f32.mxu0 %v779
      %3049 = vmatmul.mubr.f32.gmra.mrb[0].mxu0 %v777
      %v3050 = vpop.f32.mrb[0].mxu0
      %v3051 = vadd.f32 %v2980, %v3050
      %v3052 = vpop.f32.mrb[0].mxu0
      %v3053 = vadd.f32 %v2982, %v3052
      %3054 = vdwg.mxu0
      %3055 = vmatprep.subr.mxu0 %v1843
      %3056 = vmatpush1.msra.mxu0 %v1842
      %3057 = vmatprep.subr.mxu0 %v1847
      %3058 = vmatpush1.msra.mxu0 %v1846
      %3059 = vmatprep.subr.mxu0 %v1851
      %3060 = vmatpush1.msra.mxu0 %v1850
      %3061 = vmatprep.subr.mxu0 %v1855
      %3062 = vmatpush1.msra.mxu0 %v1854
      %3063 = vmatprep.subr.mxu0 %v1859
      %3064 = vmatpush1.msra.mxu0 %v1858
      %3065 = vmatprep.subr.mxu0 %v1863
      %3066 = vmatpush1.msra.mxu0 %v1862
      %3067 = vmatprep.subr.mxu0 %v1867
      %3068 = vmatpush1.msra.mxu0 %v1866
      %3069 = vmatprep.subr.mxu0 %v1871
      %3070 = vmatpush1.msra.mxu0 %v1870
      %3071 = vmatprep.subr.mxu0 %v1875
      %3072 = vmatpush1.msra.mxu0 %v1874
      %3073 = vmatprep.subr.mxu0 %v1879
      %3074 = vmatpush1.msra.mxu0 %v1878
      %3075 = vmatprep.subr.mxu0 %v1883
      %3076 = vmatpush1.msra.mxu0 %v1882
      %3077 = vmatprep.subr.mxu0 %v1887
      %3078 = vmatpush1.msra.mxu0 %v1886
      %3079 = vmatprep.subr.mxu0 %v1891
      %3080 = vmatpush1.msra.mxu0 %v1890
      %3081 = vmatprep.subr.mxu0 %v1895
      %3082 = vmatpush1.msra.mxu0 %v1894
      %3083 = vmatprep.subr.mxu0 %v1899
      %3084 = vmatpush1.msra.mxu0 %v1898
      %3085 = vmatprep.subr.mxu0 %v1903
      %3086 = vmatpush1.msra.mxu0 %v1902
      %3087 = vmatprep.subr.mxu0 %v1907
      %3088 = vmatpush1.msra.mxu0 %v1906
      %3089 = vmatprep.subr.mxu0 %v1911
      %3090 = vmatpush1.msra.mxu0 %v1910
      %3091 = vmatprep.subr.mxu0 %v1915
      %3092 = vmatpush1.msra.mxu0 %v1914
      %3093 = vmatprep.subr.mxu0 %v1919
      %3094 = vmatpush1.msra.mxu0 %v1918
      %3095 = vmatprep.subr.mxu0 %v1923
      %3096 = vmatpush1.msra.mxu0 %v1922
      %3097 = vmatprep.subr.mxu0 %v1927
      %3098 = vmatpush1.msra.mxu0 %v1926
      %3099 = vmatprep.subr.mxu0 %v1931
      %3100 = vmatpush1.msra.mxu0 %v1930
      %3101 = vmatprep.subr.mxu0 %v1935
      %3102 = vmatpush1.msra.mxu0 %v1934
      %3103 = vmatprep.subr.mxu0 %v1939
      %3104 = vmatpush1.msra.mxu0 %v1938
      %3105 = vmatprep.subr.mxu0 %v1943
      %3106 = vmatpush1.msra.mxu0 %v1942
      %3107 = vmatprep.subr.mxu0 %v1947
      %3108 = vmatpush1.msra.mxu0 %v1946
      %3109 = vmatprep.subr.mxu0 %v1951
      %3110 = vmatpush1.msra.mxu0 %v1950
      %3111 = vmatprep.subr.mxu0 %v1955
      %3112 = vmatpush1.msra.mxu0 %v1954
      %3113 = vmatprep.subr.mxu0 %v1959
      %3114 = vmatpush1.msra.mxu0 %v1958
      %3115 = vmatprep.subr.mxu0 %v1963
      %3116 = vmatpush1.msra.mxu0 %v1962
      %3117 = vmatprep.subr.mxu0 %v1967
      %3118 = vmatpush1.msra.mxu0 %v1966
      %3119 = vmatprep.mubr.f32.mxu0 %v850
      %3120 = vmatmul.mubr.f32.gmra.mrb[0].mxu0 %v848
      %v3121 = vpop.f32.mrb[0].mxu0
      %v3122 = vadd.f32 %v3051, %v3121
      %v3123 = vpop.f32.mrb[0].mxu0
      %v3124 = vadd.f32 %v3053, %v3123
      %3125 = vdwg.mxu0
      %v3126 = vmax.f32 %v2554, 0.0
      %v3127 = vmax.f32 %v2556, 0.0
      %v3128 = vmax.f32 %v3122, 0.0
      %v3129 = vmax.f32 %v3124, 0.0
      %v3130 = vld [vmem:[#allocation9] sm:$0xff]
      %v3131 = vld [vmem:[#allocation9 + $0x8] sm:$0xff]
      %v3132 = vld [vmem:[#allocation9 + $0x10] sm:$0xff]
      %v3133 = vld [vmem:[#allocation9 + $0x18] sm:$0xff]
      %v3134 = vld [vmem:[#allocation9 + $0x20] sm:$0xff]
      %v3135 = vld [vmem:[#allocation9 + $0x28] sm:$0xff]
      %v3136 = vld [vmem:[#allocation9 + $0x30] sm:$0xff]
      %v3137 = vld [vmem:[#allocation9 + $0x38] sm:$0xff]
      %v3138 = vld [vmem:[#allocation9 + $0x40] sm:$0xff]
      %v3139 = vld [vmem:[#allocation9 + $0x48] sm:$0xff]
      %v3140 = vld [vmem:[#allocation9 + $0x50] sm:$0xff]
      %v3141 = vld [vmem:[#allocation9 + $0x58] sm:$0xff]
      %v3142 = vld [vmem:[#allocation9 + $0x60] sm:$0xff]
      %v3143 = vld [vmem:[#allocation9 + $0x68] sm:$0xff]
      %v3144 = vld [vmem:[#allocation9 + $0x70] sm:$0xff]
      %v3145 = vld [vmem:[#allocation9 + $0x78] sm:$0xff]
      %v3146 = vld [vmem:[#allocation9 + $0x80] sm:$0xff]
      %v3147 = vld [vmem:[#allocation9 + $0x88] sm:$0xff]
      %v3148 = vld [vmem:[#allocation9 + $0x90] sm:$0xff]
      %v3149 = vld [vmem:[#allocation9 + $0x98] sm:$0xff]
      %v3150 = vld [vmem:[#allocation9 + $0xa0] sm:$0xff]
      %v3151 = vld [vmem:[#allocation9 + $0xa8] sm:$0xff]
      %v3152 = vld [vmem:[#allocation9 + $0xb0] sm:$0xff]
      %v3153 = vld [vmem:[#allocation9 + $0xb8] sm:$0xff]
      %v3154 = vld [vmem:[#allocation9 + $0xc0] sm:$0xff]
      %v3155 = vld [vmem:[#allocation9 + $0xc8] sm:$0xff]
      %v3156 = vld [vmem:[#allocation9 + $0xd0] sm:$0xff]
      %v3157 = vld [vmem:[#allocation9 + $0xd8] sm:$0xff]
      %v3158 = vld [vmem:[#allocation9 + $0xe0] sm:$0xff]
      %v3159 = vld [vmem:[#allocation9 + $0xe8] sm:$0xff]
      %v3160 = vld [vmem:[#allocation9 + $0xf0] sm:$0xff]
      %v3161 = vld [vmem:[#allocation9 + $0xf8] sm:$0xff]
      %v3162 = vld [vmem:[#allocation9 + $0x100] sm:$0xff]
      %v3163 = vld [vmem:[#allocation9 + $0x108] sm:$0xff]
      %v3164 = vld [vmem:[#allocation9 + $0x110] sm:$0xff]
      %v3165 = vld [vmem:[#allocation9 + $0x118] sm:$0xff]
      %v3166 = vld [vmem:[#allocation9 + $0x120] sm:$0xff]
      %v3167 = vld [vmem:[#allocation9 + $0x128] sm:$0xff]
      %v3168 = vld [vmem:[#allocation9 + $0x130] sm:$0xff]
      %v3169 = vld [vmem:[#allocation9 + $0x138] sm:$0xff]
      %v3170 = vld [vmem:[#allocation9 + $0x140] sm:$0xff]
      %v3171 = vld [vmem:[#allocation9 + $0x148] sm:$0xff]
      %v3172 = vld [vmem:[#allocation9 + $0x150] sm:$0xff]
      %v3173 = vld [vmem:[#allocation9 + $0x158] sm:$0xff]
      %v3174 = vld [vmem:[#allocation9 + $0x160] sm:$0xff]
      %v3175 = vld [vmem:[#allocation9 + $0x168] sm:$0xff]
      %v3176 = vld [vmem:[#allocation9 + $0x170] sm:$0xff]
      %v3177 = vld [vmem:[#allocation9 + $0x178] sm:$0xff]
      %v3178 = vld [vmem:[#allocation9 + $0x180] sm:$0xff]
      %v3179 = vld [vmem:[#allocation9 + $0x188] sm:$0xff]
      %v3180 = vld [vmem:[#allocation9 + $0x190] sm:$0xff]
      %v3181 = vld [vmem:[#allocation9 + $0x198] sm:$0xff]
      %v3182 = vld [vmem:[#allocation9 + $0x1a0] sm:$0xff]
      %v3183 = vld [vmem:[#allocation9 + $0x1a8] sm:$0xff]
      %v3184 = vld [vmem:[#allocation9 + $0x1b0] sm:$0xff]
      %v3185 = vld [vmem:[#allocation9 + $0x1b8] sm:$0xff]
      %v3186 = vld [vmem:[#allocation9 + $0x1c0] sm:$0xff]
      %v3187 = vld [vmem:[#allocation9 + $0x1c8] sm:$0xff]
      %v3188 = vld [vmem:[#allocation9 + $0x1d0] sm:$0xff]
      %v3189 = vld [vmem:[#allocation9 + $0x1d8] sm:$0xff]
      %v3190 = vld [vmem:[#allocation9 + $0x1e0] sm:$0xff]
      %v3191 = vld [vmem:[#allocation9 + $0x1e8] sm:$0xff]
      %v3192 = vld [vmem:[#allocation9 + $0x1f0] sm:$0xff]
      %v3193 = vld [vmem:[#allocation9 + $0x1f8] sm:$0xff]
      %v3194 = vld [vmem:[#allocation11] sm:$0x1]
      %v3196 = vlaneseq
      %v3197 = vshrl.u32 %v3196, 7
      %v3198 = vsub.s32 0, %v3197
      %v3199 = vrot.slane %v3194, %v3198
      %3201 = vmatprep.subr.mxu0 0.0
      %3202 = vmatpush1.msra.mxu0 %v3130
      %3203 = vmatprep.subr.mxu0 0.0
      %3204 = vmatpush1.msra.mxu0 %v3131
      %3205 = vmatprep.subr.mxu0 0.0
      %3206 = vmatpush1.msra.mxu0 %v3132
      %3207 = vmatprep.subr.mxu0 0.0
      %3208 = vmatpush1.msra.mxu0 %v3133
      %3209 = vmatprep.subr.mxu0 0.0
      %3210 = vmatpush1.msra.mxu0 %v3134
      %3211 = vmatprep.subr.mxu0 0.0
      %3212 = vmatpush1.msra.mxu0 %v3135
      %3213 = vmatprep.subr.mxu0 0.0
      %3214 = vmatpush1.msra.mxu0 %v3136
      %3215 = vmatprep.subr.mxu0 0.0
      %3216 = vmatpush1.msra.mxu0 %v3137
      %3217 = vmatprep.subr.mxu0 0.0
      %3218 = vmatpush1.msra.mxu0 %v3138
      %3219 = vmatprep.subr.mxu0 0.0
      %3220 = vmatpush1.msra.mxu0 %v3139
      %3221 = vmatprep.subr.mxu0 0.0
      %3222 = vmatpush1.msra.mxu0 %v3140
      %3223 = vmatprep.subr.mxu0 0.0
      %3224 = vmatpush1.msra.mxu0 %v3141
      %3225 = vmatprep.subr.mxu0 0.0
      %3226 = vmatpush1.msra.mxu0 %v3142
      %3227 = vmatprep.subr.mxu0 0.0
      %3228 = vmatpush1.msra.mxu0 %v3143
      %3229 = vmatprep.subr.mxu0 0.0
      %3230 = vmatpush1.msra.mxu0 %v3144
      %3231 = vmatprep.subr.mxu0 0.0
      %3232 = vmatpush1.msra.mxu0 %v3145
      %3233 = vmatprep.subr.mxu0 0.0
      %3234 = vmatpush1.msra.mxu0 %v3146
      %3235 = vmatprep.subr.mxu0 0.0
      %3236 = vmatpush1.msra.mxu0 %v3147
      %3237 = vmatprep.subr.mxu0 0.0
      %3238 = vmatpush1.msra.mxu0 %v3148
      %3239 = vmatprep.subr.mxu0 0.0
      %3240 = vmatpush1.msra.mxu0 %v3149
      %3241 = vmatprep.subr.mxu0 0.0
      %3242 = vmatpush1.msra.mxu0 %v3150
      %3243 = vmatprep.subr.mxu0 0.0
      %3244 = vmatpush1.msra.mxu0 %v3151
      %3245 = vmatprep.subr.mxu0 0.0
      %3246 = vmatpush1.msra.mxu0 %v3152
      %3247 = vmatprep.subr.mxu0 0.0
      %3248 = vmatpush1.msra.mxu0 %v3153
      %3249 = vmatprep.subr.mxu0 0.0
      %3250 = vmatpush1.msra.mxu0 %v3154
      %3251 = vmatprep.subr.mxu0 0.0
      %3252 = vmatpush1.msra.mxu0 %v3155
      %3253 = vmatprep.subr.mxu0 0.0
      %3254 = vmatpush1.msra.mxu0 %v3156
      %3255 = vmatprep.subr.mxu0 0.0
      %3256 = vmatpush1.msra.mxu0 %v3157
      %3257 = vmatprep.subr.mxu0 0.0
      %3258 = vmatpush1.msra.mxu0 %v3158
      %3259 = vmatprep.subr.mxu0 0.0
      %3260 = vmatpush1.msra.mxu0 %v3159
      %3261 = vmatprep.subr.mxu0 0.0
      %3262 = vmatpush1.msra.mxu0 %v3160
      %3263 = vmatprep.subr.mxu0 0.0
      %3264 = vmatpush1.msra.mxu0 %v3161
      %3265 = vmatprep.mubr.f32.mxu0 %v3127
      %3266 = vmatmul.mubr.f32.gmra.mrb[0].mxu0 %v3126
      %v3267 = vpop.f32.mrb[0].mxu0
      %v3268 = vadd.f32 %v3199, %v3267
      %v3269 = vpop.f32.mrb[0].mxu0
      %3270 = vdwg.mxu0
      %3271 = vmatprep.subr.mxu0 0.0
      %3272 = vmatpush1.msra.mxu0 %v3162
      %3273 = vmatprep.subr.mxu0 0.0
      %3274 = vmatpush1.msra.mxu0 %v3163
      %3275 = vmatprep.subr.mxu0 0.0
      %3276 = vmatpush1.msra.mxu0 %v3164
      %3277 = vmatprep.subr.mxu0 0.0
      %3278 = vmatpush1.msra.mxu0 %v3165
      %3279 = vmatprep.subr.mxu0 0.0
      %3280 = vmatpush1.msra.mxu0 %v3166
      %3281 = vmatprep.subr.mxu0 0.0
      %3282 = vmatpush1.msra.mxu0 %v3167
      %3283 = vmatprep.subr.mxu0 0.0
      %3284 = vmatpush1.msra.mxu0 %v3168
      %3285 = vmatprep.subr.mxu0 0.0
      %3286 = vmatpush1.msra.mxu0 %v3169
      %3287 = vmatprep.subr.mxu0 0.0
      %3288 = vmatpush1.msra.mxu0 %v3170
      %3289 = vmatprep.subr.mxu0 0.0
      %3290 = vmatpush1.msra.mxu0 %v3171
      %3291 = vmatprep.subr.mxu0 0.0
      %3292 = vmatpush1.msra.mxu0 %v3172
      %3293 = vmatprep.subr.mxu0 0.0
      %3294 = vmatpush1.msra.mxu0 %v3173
      %3295 = vmatprep.subr.mxu0 0.0
      %3296 = vmatpush1.msra.mxu0 %v3174
      %3297 = vmatprep.subr.mxu0 0.0
      %3298 = vmatpush1.msra.mxu0 %v3175
      %3299 = vmatprep.subr.mxu0 0.0
      %3300 = vmatpush1.msra.mxu0 %v3176
      %3301 = vmatprep.subr.mxu0 0.0
      %3302 = vmatpush1.msra.mxu0 %v3177
      %3303 = vmatprep.subr.mxu0 0.0
      %3304 = vmatpush1.msra.mxu0 %v3178
      %3305 = vmatprep.subr.mxu0 0.0
      %3306 = vmatpush1.msra.mxu0 %v3179
      %3307 = vmatprep.subr.mxu0 0.0
      %3308 = vmatpush1.msra.mxu0 %v3180
      %3309 = vmatprep.subr.mxu0 0.0
      %3310 = vmatpush1.msra.mxu0 %v3181
      %3311 = vmatprep.subr.mxu0 0.0
      %3312 = vmatpush1.msra.mxu0 %v3182
      %3313 = vmatprep.subr.mxu0 0.0
      %3314 = vmatpush1.msra.mxu0 %v3183
      %3315 = vmatprep.subr.mxu0 0.0
      %3316 = vmatpush1.msra.mxu0 %v3184
      %3317 = vmatprep.subr.mxu0 0.0
      %3318 = vmatpush1.msra.mxu0 %v3185
      %3319 = vmatprep.subr.mxu0 0.0
      %3320 = vmatpush1.msra.mxu0 %v3186
      %3321 = vmatprep.subr.mxu0 0.0
      %3322 = vmatpush1.msra.mxu0 %v3187
      %3323 = vmatprep.subr.mxu0 0.0
      %3324 = vmatpush1.msra.mxu0 %v3188
      %3325 = vmatprep.subr.mxu0 0.0
      %3326 = vmatpush1.msra.mxu0 %v3189
      %3327 = vmatprep.subr.mxu0 0.0
      %3328 = vmatpush1.msra.mxu0 %v3190
      %3329 = vmatprep.subr.mxu0 0.0
      %3330 = vmatpush1.msra.mxu0 %v3191
      %3331 = vmatprep.subr.mxu0 0.0
      %3332 = vmatpush1.msra.mxu0 %v3192
      %3333 = vmatprep.subr.mxu0 0.0
      %3334 = vmatpush1.msra.mxu0 %v3193
      %3335 = vmatprep.mubr.f32.mxu0 %v3129
      %3336 = vmatmul.mubr.f32.gmra.mrb[0].mxu0 %v3128
      %v3337 = vpop.f32.mrb[0].mxu0
      %v3338 = vadd.f32 %v3268, %v3337
      %v3339 = vpop.f32.mrb[0].mxu0
      %3340 = vdwg.mxu0
      %3341 = vst [vmem:[#allocation13] sm:$0x3] %v3338
    $region57: #{_forward_impl.1} parent=1 // pred_fallthru
      _
    // Predicated region
    $region58: #{_forward_impl.1} parent=1 // pred_check
      _
    $region59: #{_forward_impl.1} parent=1 // pred_check_branch
      %3343 = sbr.rel (0) target = $region61
    $region60: #{_forward_impl.1} parent=1 // pred_region
      %s3345 = ssub.s32 512, 512
      %3346 = vsyncadd [#allocation5], %s3345
      %s3348 = sshll.u32 [#allocation12], 4
      %s3349 = int_to_ptr.vmem [resolvable:$true] %s3348
      %3351 = dma.vmem_to_hbm [thread:$0]  %s3349, 512, %s7, [#allocation5]
    $region61: #{_forward_impl.1} parent=1 // pred_fallthru
      _
    // Predicated region
    $region62: #{_forward_impl.1} parent=1 // pred_check
      _
    $region63: #{_forward_impl.1} parent=1 // pred_check_branch
      %3353 = sbr.rel (0) target = $region65
    $region64: #{_forward_impl.1} parent=1 // pred_region
      %s3355 = ssub.s32 32, 32
      %3356 = vsyncadd [#allocation14], %s3355
      %s3358 = sshll.u32 [#allocation13], 4
      %s3359 = int_to_ptr.vmem [resolvable:$true] %s3358
      %3361 = dma.vmem_to_hbm [thread:$0]  %s3359, 32, %s8, [#allocation14]
    $region65: #{_forward_impl.1} parent=1 // pred_fallthru
      _
    // Predicated region
    $region66: #{_forward_impl.1} parent=1 // pred_check
      _
    $region67: #{_forward_impl.1} parent=1 // pred_check_branch
      %3363 = sbr.rel (0) target = $region69
    $region68: #{_forward_impl.1} parent=1 // pred_region
      %3364 = dma.done [#allocation5], 512
    $region69: #{_forward_impl.1} parent=1 // pred_fallthru
      _
    // Predicated region
    $region70: #{_forward_impl.1} parent=1 // pred_check
      _
    $region71: #{_forward_impl.1} parent=1 // pred_check_branch
      %3366 = sbr.rel (0) target = $region73
    $region72: #{_forward_impl.1} parent=1 // pred_region
      %3367 = dma.done [#allocation14], 32
    $region73: #{_forward_impl.1} parent=1 // pred_fallthru
      _
    %3368 = vsyncpa [#allocation4], 1
    %3369 = vsyncpa [#allocation7], 1
    %3370 = vsyncpa [#allocation10], 1
    %3371 = vsyncpa [#allocation5], 1
    %3372 = vsyncpa [#allocation14], 1

</llo_original>
